<compile_context>
chip_gen: v6e
topology: v6e:2x2x1
jax: 0.10.0
libtpu: 0.0.40
codegen_flags: <defaults>
</compile_context>

<pallas_src>
import math
from functools import partial

import numpy as np
import jax
import jax.numpy as jnp
from jax.experimental import pallas as pl
from jax.experimental.pallas import tpu as pltpu

# Small, forward-consistent shapes (in_dim must be divisible by nhead).
IN_DIM = 32
NHEAD = 4
DIM_FF = 64
NUM_LAYERS = 2
SEQ = 8
BATCH = 2
EPS = 1e-5  # PyTorch LayerNorm default

# ---- parameter slab layout (all row offsets multiples of 8, 128 lanes) ----
LANES = 128
OFF_WQKV = 0                      # (D, 3D)  pre-transposed in_proj
OFF_WO = OFF_WQKV + IN_DIM        # (D, D)   pre-transposed out_proj
OFF_W1 = OFF_WO + IN_DIM          # (D, F)   pre-transposed linear1
OFF_W2 = OFF_W1 + IN_DIM          # (F, D)   pre-transposed linear2
OFF_VEC = OFF_W2 + DIM_FF         # 8 rows: bqkv, bo, b1, b2, g1, be1, g2, be2
LAYER_ROWS = OFF_VEC + 8          # 168
HEAD_ROW = NUM_LAYERS * LAYER_ROWS            # fc weight row, then fc bias row
TOTAL_ROWS = ((HEAD_ROW + 2 + 7) // 8) * 8    # pad to multiple of 8


def _layernorm(x, gamma, beta):
    mu = jnp.mean(x, axis=-1, keepdims=True)
    var = jnp.mean((x - mu) ** 2, axis=-1, keepdims=True)
    return (x - mu) * jax.lax.rsqrt(var + EPS) * gamma + beta


def dsn_kernel(nhead, num_layers, batch, seq, dim_ff,
               x_ref, slab_ref, o_ref):
    """Full DSN forward for the whole (flattened) batch: x is (B*S, D)."""
    D = x_ref.shape[-1]
    hd = D // nhead
    scale = 1.0 / math.sqrt(hd)

    x = x_ref[...].astype(jnp.float32)                       # (B*S, D)

    for l in range(num_layers):                              # static unroll
        base = l * LAYER_ROWS

        # --- self-attention: fused QKV projection over the whole batch ---
        wqkv = slab_ref[base + OFF_WQKV: base + OFF_WQKV + D, 0:3 * D]   # (D,3D)
        bqkv = slab_ref[base + OFF_VEC + 0: base + OFF_VEC + 1, 0:3 * D]
        qkv = jnp.dot(x, wqkv, preferred_element_type=jnp.float32) + bqkv  # (N,3D)

        attn = None
        for h in range(nhead):                               # static unroll
            lo = h * hd
            # pre-transposed out_proj rows for this head: (hd, D)
            wo_h = slab_ref[base + OFF_WO + lo: base + OFF_WO + lo + hd, 0:D]
            pv_rows = []
            for b in range(batch):                           # static unroll
                r0 = b * seq
                q = qkv[r0:r0 + seq, lo:lo + hd] * scale     # (S, hd)
                k = qkv[r0:r0 + seq, D + lo:D + lo + hd]
                v = qkv[r0:r0 + seq, 2 * D + lo:2 * D + lo + hd]
                # scores = q @ k^T without an explicit transpose
                sc = jax.lax.dot_general(
                    q, k, (((1,), (1,)), ((), ())),
                    preferred_element_type=jnp.float32)      # (S, S)
                sc = sc - jnp.max(sc, axis=-1, keepdims=True)
                e = jnp.exp(sc)
                p = e * pl.reciprocal(jnp.sum(e, axis=-1, keepdims=True),
                                      approx=True)
                pv_rows.append(jnp.dot(p, v,
                                       preferred_element_type=jnp.float32))
            pv = jnp.concatenate(pv_rows, axis=0)            # (N, hd) sublane cat
            contrib = jnp.dot(pv, wo_h,
                              preferred_element_type=jnp.float32)  # (N, D)
            attn = contrib if attn is None else attn + contrib

        bo = slab_ref[base + OFF_VEC + 1: base + OFF_VEC + 2, 0:D]
        attn = attn + bo

        # residual + norm1 (dropout == identity in eval)
        g1 = slab_ref[base + OFF_VEC + 4: base + OFF_VEC + 5, 0:D]
        be1 = slab_ref[base + OFF_VEC + 5: base + OFF_VEC + 6, 0:D]
        x = _layernorm(x + attn, g1, be1)

        # --- feed-forward ---
        w1 = slab_ref[base + OFF_W1: base + OFF_W1 + D, 0:dim_ff]        # (D, F)
        b1 = slab_ref[base + OFF_VEC + 2: base + OFF_VEC + 3, 0:dim_ff]
        w2 = slab_ref[base + OFF_W2: base + OFF_W2 + dim_ff, 0:D]        # (F, D)
        b2 = slab_ref[base + OFF_VEC + 3: base + OFF_VEC + 4, 0:D]
        hdn = jnp.maximum(
            jnp.dot(x, w1, preferred_element_type=jnp.float32) + b1, 0.0)
        ff = jnp.dot(hdn, w2, preferred_element_type=jnp.float32) + b2

        # residual + norm2
        g2 = slab_ref[base + OFF_VEC + 6: base + OFF_VEC + 7, 0:D]
        be2 = slab_ref[base + OFF_VEC + 7: base + OFF_VEC + 8, 0:D]
        x = _layernorm(x + ff, g2, be2)

    # --- sigmoid head: p = sigmoid(x @ w_fc^T + b_fc), done as a lane reduce ---
    wfc = slab_ref[HEAD_ROW: HEAD_ROW + 1, 0:D]              # (1, D)
    bfc = slab_ref[HEAD_ROW + 1: HEAD_ROW + 2, 0:1]          # (1, 1)
    logits = jnp.sum(x * wfc, axis=-1, keepdims=True) + bfc  # (N, 1)
    o_ref[...] = jax.nn.sigmoid(logits).astype(o_ref.dtype)


def init_params(key, d_model, dim_ff, num_layers):
    def rn(k, shape, fan_in):
        return jax.random.normal(k, shape, jnp.float32) / math.sqrt(fan_in)

    layers = []
    for _ in range(num_layers):
        key, k0, k1, k2, k3 = jax.random.split(key, 5)
        wqkv = rn(k0, (3 * d_model, d_model), d_model)          # in_proj_weight
        bqkv = jnp.zeros((1, 3 * d_model), jnp.float32)         # in_proj_bias
        wo = rn(k1, (d_model, d_model), d_model)                # out_proj.weight
        bo = jnp.zeros((1, d_model), jnp.float32)
        w1 = rn(k2, (dim_ff, d_model), d_model)                 # linear1
        b1 = jnp.zeros((1, dim_ff), jnp.float32)
        w2 = rn(k3, (d_model, dim_ff), dim_ff)                  # linear2
        b2 = jnp.zeros((1, d_model), jnp.float32)
        g1 = jnp.ones((1, d_model), jnp.float32)                # norm1
        be1 = jnp.zeros((1, d_model), jnp.float32)
        g2 = jnp.ones((1, d_model), jnp.float32)                # norm2
        be2 = jnp.zeros((1, d_model), jnp.float32)
        layers.append((wqkv, bqkv, wo, bo, w1, b1, w2, b2, g1, be1, g2, be2))
    key, kf = jax.random.split(key)
    w_fc = jax.random.normal(kf, (1, d_model), jnp.float32) / math.sqrt(d_model)
    b_fc = jnp.zeros((1, 1), jnp.float32)
    return layers, w_fc, b_fc


def pack_params(layers, w_fc, b_fc):
    """Pack all (pre-transposed) weights into one (TOTAL_ROWS, 128) f32 slab."""
    D, F = IN_DIM, DIM_FF
    slab = np.zeros((TOTAL_ROWS, LANES), np.float32)
    for l, (wqkv, bqkv, wo, bo, w1, b1, w2, b2, g1, be1, g2, be2) in enumerate(layers):
        base = l * LAYER_ROWS
        slab[base + OFF_WQKV: base + OFF_WQKV + D, :3 * D] = np.asarray(wqkv).T
        slab[base + OFF_WO:   base + OFF_WO + D,   :D] = np.asarray(wo).T
        slab[base + OFF_W1:   base + OFF_W1 + D,   :F] = np.asarray(w1).T
        slab[base + OFF_W2:   base + OFF_W2 + F,   :D] = np.asarray(w2).T
        slab[base + OFF_VEC + 0, :3 * D] = np.asarray(bqkv)[0]
        slab[base + OFF_VEC + 1, :D] = np.asarray(bo)[0]
        slab[base + OFF_VEC + 2, :F] = np.asarray(b1)[0]
        slab[base + OFF_VEC + 3, :D] = np.asarray(b2)[0]
        slab[base + OFF_VEC + 4, :D] = np.asarray(g1)[0]
        slab[base + OFF_VEC + 5, :D] = np.asarray(be1)[0]
        slab[base + OFF_VEC + 6, :D] = np.asarray(g2)[0]
        slab[base + OFF_VEC + 7, :D] = np.asarray(be2)[0]
    slab[HEAD_ROW, :D] = np.asarray(w_fc)[0]
    slab[HEAD_ROW + 1, 0] = float(np.asarray(b_fc)[0, 0])
    return jnp.asarray(slab)


@jax.jit
def dsn_forward(x_sbd, slab):
    # torch layout in: (S, B, D) -> compute layout (B*S, D)
    S, B, D = x_sbd.shape
    x = jnp.transpose(x_sbd, (1, 0, 2)).reshape(B * S, D)
    # Single fused pallas_call: one activation DMA in, one slab DMA, one result out.
    # NOTE(v7x): with B this small we deliberately run on one TensorCore; a
    # size-B "parallel" grid axis could shard the batch across cores if B grows.
    p = pl.pallas_call(
        partial(dsn_kernel, NHEAD, NUM_LAYERS, B, S, DIM_FF),
        out_shape=jax.ShapeDtypeStruct((B * S, 1), jnp.float32),
        grid=(1,),
        in_specs=[pl.BlockSpec((B * S, D), lambda i: (0, 0)),
                  pl.BlockSpec((TOTAL_ROWS, LANES), lambda i: (0, 0))],
        out_specs=pl.BlockSpec((B * S, 1), lambda i: (0, 0)),
        compiler_params=pltpu.CompilerParams(
            dimension_semantics=("arbitrary",)),
    )(x, slab)
    return p.reshape(B, S, 1).transpose(1, 0, 2)   # (S, B, 1), matching torch


if __name__ == "__main__":
    key = jax.random.PRNGKey(0)
    key, kx, kp = jax.random.split(key, 3)
    x = jax.random.normal(kx, (SEQ, BATCH, IN_DIM), jnp.float32)
    layers, w_fc, b_fc = init_params(kp, IN_DIM, DIM_FF, NUM_LAYERS)
    slab = pack_params(layers, w_fc, b_fc)

    p = dsn_forward(x, slab)
    p = jax.block_until_ready(p)

    assert p.shape == (SEQ, BATCH, 1), p.shape
    assert bool(jnp.all(jnp.isfinite(p)))
    assert bool(jnp.all((p >= 0.0) & (p <= 1.0)))
    print("KERNEL_OK")
</pallas_src>

<mosaic_0001>
module attributes {stable_mosaic.version = 11 : i64} {
  func.func @dsn_kernel(%arg0: i32, %arg1: memref<16x32xf32, #tpu.memory_space<vmem>>, %arg2: memref<344x128xf32, #tpu.memory_space<vmem>>, %arg3: memref<16x1xf32, #tpu.memory_space<vmem>>) attributes {dimension_semantics = [#tpu.dimension_semantics<arbitrary>], iteration_bounds = array<i64: 1>, scalar_prefetch = 0 : i64, scratch_operands = 0 : i64, tpu.core_type = #tpu.core_type<tc>, window_params = [{pipeline_mode = #tpu.pipeline_mode<synchronous>, transform_indices = @transform_0, window_bounds = array<i64: 16, 32>}, {pipeline_mode = #tpu.pipeline_mode<synchronous>, transform_indices = @transform_1, window_bounds = array<i64: 344, 128>}, {pipeline_mode = #tpu.pipeline_mode<synchronous>, transform_indices = @transform_2, window_bounds = array<i64: 16, 1>}]} {
    %c0 = arith.constant 0 : index
    %c0_0 = arith.constant 0 : index
    %0 = vector.load %arg1[%c0, %c0_0] : memref<16x32xf32, #tpu.memory_space<vmem>>, vector<16x32xf32>
    %c0_1 = arith.constant 0 : index
    %c0_2 = arith.constant 0 : index
    %1 = vector.load %arg2[%c0_1, %c0_2] : memref<344x128xf32, #tpu.memory_space<vmem>>, vector<32x96xf32>
    %c160 = arith.constant 160 : index
    %c0_3 = arith.constant 0 : index
    %2 = vector.load %arg2[%c160, %c0_3] : memref<344x128xf32, #tpu.memory_space<vmem>>, vector<1x96xf32>
    %cst = arith.constant dense<0.000000e+00> : vector<16x96xf32>
    %3 = tpu.matmul %0, %1, %cst {dimension_numbers = #tpu.dot_dimension_numbers<[1], [0], [0], [1], [0, 0, 1, 1], [], []>} : vector<16x32xf32>, vector<32x96xf32>, vector<16x96xf32> -> vector<16x96xf32>
    %4 = vector.broadcast %2 : vector<1x96xf32> to vector<16x96xf32>
    %5 = arith.addf %3, %4 : vector<16x96xf32>
    %c32 = arith.constant 32 : index
    %c0_4 = arith.constant 0 : index
    %6 = vector.load %arg2[%c32, %c0_4] : memref<344x128xf32, #tpu.memory_space<vmem>>, vector<8x32xf32>
    %7 = vector.extract_strided_slice %5 {offsets = [0, 0], sizes = [8, 8], strides = [1, 1]} : vector<16x96xf32> to vector<8x8xf32>
    %cst_5 = arith.constant 0.353553385 : f32
    %8 = vector.broadcast %cst_5 : f32 to vector<8x8xf32>
    %9 = arith.mulf %7, %8 : vector<8x8xf32>
    %10 = vector.extract_strided_slice %5 {offsets = [0, 32], sizes = [8, 8], strides = [1, 1]} : vector<16x96xf32> to vector<8x8xf32>
    %11 = vector.extract_strided_slice %5 {offsets = [0, 64], sizes = [8, 8], strides = [1, 1]} : vector<16x96xf32> to vector<8x8xf32>
    %cst_6 = arith.constant dense<0.000000e+00> : vector<8x8xf32>
    %12 = tpu.matmul %9, %10, %cst_6 {dimension_numbers = #tpu.dot_dimension_numbers<[1], [1], [0], [0], [0, 0, 1, 0], [], []>} : vector<8x8xf32>, vector<8x8xf32>, vector<8x8xf32> -> vector<8x8xf32>
    %cst_7 = arith.constant dense<0xFF800000> : vector<8xf32>
    %13 = vector.multi_reduction <maximumf>, %12, %cst_7 [1] : vector<8x8xf32> to vector<8xf32>
    %14 = vector.shape_cast %13 : vector<8xf32> to vector<8x1xf32>
    %15 = vector.broadcast %14 : vector<8x1xf32> to vector<8x8xf32>
    %16 = arith.subf %12, %15 : vector<8x8xf32>
    %17 = math.exp %16 : vector<8x8xf32>
    %cst_8 = arith.constant dense<0.000000e+00> : vector<8xf32>
    %18 = vector.multi_reduction <add>, %17, %cst_8 [1] : vector<8x8xf32> to vector<8xf32>
    %19 = vector.shape_cast %18 : vector<8xf32> to vector<8x1xf32>
    %20 = tpu.reciprocal %19 {approx = true} : vector<8x1xf32> -> vector<8x1xf32>
    %21 = vector.broadcast %20 : vector<8x1xf32> to vector<8x8xf32>
    %22 = arith.mulf %17, %21 : vector<8x8xf32>
    %cst_9 = arith.constant dense<0.000000e+00> : vector<8x8xf32>
    %23 = tpu.matmul %22, %11, %cst_9 {dimension_numbers = #tpu.dot_dimension_numbers<[1], [0], [0], [1], [0, 0, 1, 1], [], []>} : vector<8x8xf32>, vector<8x8xf32>, vector<8x8xf32> -> vector<8x8xf32>
    %24 = vector.extract_strided_slice %5 {offsets = [8, 0], sizes = [8, 8], strides = [1, 1]} : vector<16x96xf32> to vector<8x8xf32>
    %cst_10 = arith.constant 0.353553385 : f32
    %25 = vector.broadcast %cst_10 : f32 to vector<8x8xf32>
    %26 = arith.mulf %24, %25 : vector<8x8xf32>
    %27 = vector.extract_strided_slice %5 {offsets = [8, 32], sizes = [8, 8], strides = [1, 1]} : vector<16x96xf32> to vector<8x8xf32>
    %28 = vector.extract_strided_slice %5 {offsets = [8, 64], sizes = [8, 8], strides = [1, 1]} : vector<16x96xf32> to vector<8x8xf32>
    %cst_11 = arith.constant dense<0.000000e+00> : vector<8x8xf32>
    %29 = tpu.matmul %26, %27, %cst_11 {dimension_numbers = #tpu.dot_dimension_numbers<[1], [1], [0], [0], [0, 0, 1, 0], [], []>} : vector<8x8xf32>, vector<8x8xf32>, vector<8x8xf32> -> vector<8x8xf32>
    %cst_12 = arith.constant dense<0xFF800000> : vector<8xf32>
    %30 = vector.multi_reduction <maximumf>, %29, %cst_12 [1] : vector<8x8xf32> to vector<8xf32>
    %31 = vector.shape_cast %30 : vector<8xf32> to vector<8x1xf32>
    %32 = vector.broadcast %31 : vector<8x1xf32> to vector<8x8xf32>
    %33 = arith.subf %29, %32 : vector<8x8xf32>
    %34 = math.exp %33 : vector<8x8xf32>
    %cst_13 = arith.constant dense<0.000000e+00> : vector<8xf32>
    %35 = vector.multi_reduction <add>, %34, %cst_13 [1] : vector<8x8xf32> to vector<8xf32>
    %36 = vector.shape_cast %35 : vector<8xf32> to vector<8x1xf32>
    %37 = tpu.reciprocal %36 {approx = true} : vector<8x1xf32> -> vector<8x1xf32>
    %38 = vector.broadcast %37 : vector<8x1xf32> to vector<8x8xf32>
    %39 = arith.mulf %34, %38 : vector<8x8xf32>
    %cst_14 = arith.constant dense<0.000000e+00> : vector<8x8xf32>
    %40 = tpu.matmul %39, %28, %cst_14 {dimension_numbers = #tpu.dot_dimension_numbers<[1], [0], [0], [1], [0, 0, 1, 1], [], []>} : vector<8x8xf32>, vector<8x8xf32>, vector<8x8xf32> -> vector<8x8xf32>
    %41 = tpu.concatenate %23, %40 in 0 : vector<8x8xf32>, vector<8x8xf32> -> vector<16x8xf32>
    %cst_15 = arith.constant dense<0.000000e+00> : vector<16x32xf32>
    %42 = tpu.matmul %41, %6, %cst_15 {dimension_numbers = #tpu.dot_dimension_numbers<[1], [0], [0], [1], [0, 0, 1, 1], [], []>} : vector<16x8xf32>, vector<8x32xf32>, vector<16x32xf32> -> vector<16x32xf32>
    %c40 = arith.constant 40 : index
    %c0_16 = arith.constant 0 : index
    %43 = vector.load %arg2[%c40, %c0_16] : memref<344x128xf32, #tpu.memory_space<vmem>>, vector<8x32xf32>
    %44 = vector.extract_strided_slice %5 {offsets = [0, 8], sizes = [8, 8], strides = [1, 1]} : vector<16x96xf32> to vector<8x8xf32>
    %cst_17 = arith.constant 0.353553385 : f32
    %45 = vector.broadcast %cst_17 : f32 to vector<8x8xf32>
    %46 = arith.mulf %44, %45 : vector<8x8xf32>
    %47 = vector.extract_strided_slice %5 {offsets = [0, 40], sizes = [8, 8], strides = [1, 1]} : vector<16x96xf32> to vector<8x8xf32>
    %48 = vector.extract_strided_slice %5 {offsets = [0, 72], sizes = [8, 8], strides = [1, 1]} : vector<16x96xf32> to vector<8x8xf32>
    %cst_18 = arith.constant dense<0.000000e+00> : vector<8x8xf32>
    %49 = tpu.matmul %46, %47, %cst_18 {dimension_numbers = #tpu.dot_dimension_numbers<[1], [1], [0], [0], [0, 0, 1, 0], [], []>} : vector<8x8xf32>, vector<8x8xf32>, vector<8x8xf32> -> vector<8x8xf32>
    %cst_19 = arith.constant dense<0xFF800000> : vector<8xf32>
    %50 = vector.multi_reduction <maximumf>, %49, %cst_19 [1] : vector<8x8xf32> to vector<8xf32>
    %51 = vector.shape_cast %50 : vector<8xf32> to vector<8x1xf32>
    %52 = vector.broadcast %51 : vector<8x1xf32> to vector<8x8xf32>
    %53 = arith.subf %49, %52 : vector<8x8xf32>
    %54 = math.exp %53 : vector<8x8xf32>
    %cst_20 = arith.constant dense<0.000000e+00> : vector<8xf32>
    %55 = vector.multi_reduction <add>, %54, %cst_20 [1] : vector<8x8xf32> to vector<8xf32>
    %56 = vector.shape_cast %55 : vector<8xf32> to vector<8x1xf32>
    %57 = tpu.reciprocal %56 {approx = true} : vector<8x1xf32> -> vector<8x1xf32>
    %58 = vector.broadcast %57 : vector<8x1xf32> to vector<8x8xf32>
    %59 = arith.mulf %54, %58 : vector<8x8xf32>
    %cst_21 = arith.constant dense<0.000000e+00> : vector<8x8xf32>
    %60 = tpu.matmul %59, %48, %cst_21 {dimension_numbers = #tpu.dot_dimension_numbers<[1], [0], [0], [1], [0, 0, 1, 1], [], []>} : vector<8x8xf32>, vector<8x8xf32>, vector<8x8xf32> -> vector<8x8xf32>
    %61 = vector.extract_strided_slice %5 {offsets = [8, 8], sizes = [8, 8], strides = [1, 1]} : vector<16x96xf32> to vector<8x8xf32>
    %cst_22 = arith.constant 0.353553385 : f32
    %62 = vector.broadcast %cst_22 : f32 to vector<8x8xf32>
    %63 = arith.mulf %61, %62 : vector<8x8xf32>
    %64 = vector.extract_strided_slice %5 {offsets = [8, 40], sizes = [8, 8], strides = [1, 1]} : vector<16x96xf32> to vector<8x8xf32>
    %65 = vector.extract_strided_slice %5 {offsets = [8, 72], sizes = [8, 8], strides = [1, 1]} : vector<16x96xf32> to vector<8x8xf32>
    %cst_23 = arith.constant dense<0.000000e+00> : vector<8x8xf32>
    %66 = tpu.matmul %63, %64, %cst_23 {dimension_numbers = #tpu.dot_dimension_numbers<[1], [1], [0], [0], [0, 0, 1, 0], [], []>} : vector<8x8xf32>, vector<8x8xf32>, vector<8x8xf32> -> vector<8x8xf32>
    %cst_24 = arith.constant dense<0xFF800000> : vector<8xf32>
    %67 = vector.multi_reduction <maximumf>, %66, %cst_24 [1] : vector<8x8xf32> to vector<8xf32>
    %68 = vector.shape_cast %67 : vector<8xf32> to vector<8x1xf32>
    %69 = vector.broadcast %68 : vector<8x1xf32> to vector<8x8xf32>
    %70 = arith.subf %66, %69 : vector<8x8xf32>
    %71 = math.exp %70 : vector<8x8xf32>
    %cst_25 = arith.constant dense<0.000000e+00> : vector<8xf32>
    %72 = vector.multi_reduction <add>, %71, %cst_25 [1] : vector<8x8xf32> to vector<8xf32>
    %73 = vector.shape_cast %72 : vector<8xf32> to vector<8x1xf32>
    %74 = tpu.reciprocal %73 {approx = true} : vector<8x1xf32> -> vector<8x1xf32>
    %75 = vector.broadcast %74 : vector<8x1xf32> to vector<8x8xf32>
    %76 = arith.mulf %71, %75 : vector<8x8xf32>
    %cst_26 = arith.constant dense<0.000000e+00> : vector<8x8xf32>
    %77 = tpu.matmul %76, %65, %cst_26 {dimension_numbers = #tpu.dot_dimension_numbers<[1], [0], [0], [1], [0, 0, 1, 1], [], []>} : vector<8x8xf32>, vector<8x8xf32>, vector<8x8xf32> -> vector<8x8xf32>
    %78 = tpu.concatenate %60, %77 in 0 : vector<8x8xf32>, vector<8x8xf32> -> vector<16x8xf32>
    %cst_27 = arith.constant dense<0.000000e+00> : vector<16x32xf32>
    %79 = tpu.matmul %78, %43, %cst_27 {dimension_numbers = #tpu.dot_dimension_numbers<[1], [0], [0], [1], [0, 0, 1, 1], [], []>} : vector<16x8xf32>, vector<8x32xf32>, vector<16x32xf32> -> vector<16x32xf32>
    %80 = arith.addf %42, %79 : vector<16x32xf32>
    %c48 = arith.constant 48 : index
    %c0_28 = arith.constant 0 : index
    %81 = vector.load %arg2[%c48, %c0_28] : memref<344x128xf32, #tpu.memory_space<vmem>>, vector<8x32xf32>
    %82 = vector.extract_strided_slice %5 {offsets = [0, 16], sizes = [8, 8], strides = [1, 1]} : vector<16x96xf32> to vector<8x8xf32>
    %cst_29 = arith.constant 0.353553385 : f32
    %83 = vector.broadcast %cst_29 : f32 to vector<8x8xf32>
    %84 = arith.mulf %82, %83 : vector<8x8xf32>
    %85 = vector.extract_strided_slice %5 {offsets = [0, 48], sizes = [8, 8], strides = [1, 1]} : vector<16x96xf32> to vector<8x8xf32>
    %86 = vector.extract_strided_slice %5 {offsets = [0, 80], sizes = [8, 8], strides = [1, 1]} : vector<16x96xf32> to vector<8x8xf32>
    %cst_30 = arith.constant dense<0.000000e+00> : vector<8x8xf32>
    %87 = tpu.matmul %84, %85, %cst_30 {dimension_numbers = #tpu.dot_dimension_numbers<[1], [1], [0], [0], [0, 0, 1, 0], [], []>} : vector<8x8xf32>, vector<8x8xf32>, vector<8x8xf32> -> vector<8x8xf32>
    %cst_31 = arith.constant dense<0xFF800000> : vector<8xf32>
    %88 = vector.multi_reduction <maximumf>, %87, %cst_31 [1] : vector<8x8xf32> to vector<8xf32>
    %89 = vector.shape_cast %88 : vector<8xf32> to vector<8x1xf32>
    %90 = vector.broadcast %89 : vector<8x1xf32> to vector<8x8xf32>
    %91 = arith.subf %87, %90 : vector<8x8xf32>
    %92 = math.exp %91 : vector<8x8xf32>
    %cst_32 = arith.constant dense<0.000000e+00> : vector<8xf32>
    %93 = vector.multi_reduction <add>, %92, %cst_32 [1] : vector<8x8xf32> to vector<8xf32>
    %94 = vector.shape_cast %93 : vector<8xf32> to vector<8x1xf32>
    %95 = tpu.reciprocal %94 {approx = true} : vector<8x1xf32> -> vector<8x1xf32>
    %96 = vector.broadcast %95 : vector<8x1xf32> to vector<8x8xf32>
    %97 = arith.mulf %92, %96 : vector<8x8xf32>
    %cst_33 = arith.constant dense<0.000000e+00> : vector<8x8xf32>
    %98 = tpu.matmul %97, %86, %cst_33 {dimension_numbers = #tpu.dot_dimension_numbers<[1], [0], [0], [1], [0, 0, 1, 1], [], []>} : vector<8x8xf32>, vector<8x8xf32>, vector<8x8xf32> -> vector<8x8xf32>
    %99 = vector.extract_strided_slice %5 {offsets = [8, 16], sizes = [8, 8], strides = [1, 1]} : vector<16x96xf32> to vector<8x8xf32>
    %cst_34 = arith.constant 0.353553385 : f32
    %100 = vector.broadcast %cst_34 : f32 to vector<8x8xf32>
    %101 = arith.mulf %99, %100 : vector<8x8xf32>
    %102 = vector.extract_strided_slice %5 {offsets = [8, 48], sizes = [8, 8], strides = [1, 1]} : vector<16x96xf32> to vector<8x8xf32>
    %103 = vector.extract_strided_slice %5 {offsets = [8, 80], sizes = [8, 8], strides = [1, 1]} : vector<16x96xf32> to vector<8x8xf32>
    %cst_35 = arith.constant dense<0.000000e+00> : vector<8x8xf32>
    %104 = tpu.matmul %101, %102, %cst_35 {dimension_numbers = #tpu.dot_dimension_numbers<[1], [1], [0], [0], [0, 0, 1, 0], [], []>} : vector<8x8xf32>, vector<8x8xf32>, vector<8x8xf32> -> vector<8x8xf32>
    %cst_36 = arith.constant dense<0xFF800000> : vector<8xf32>
    %105 = vector.multi_reduction <maximumf>, %104, %cst_36 [1] : vector<8x8xf32> to vector<8xf32>
    %106 = vector.shape_cast %105 : vector<8xf32> to vector<8x1xf32>
    %107 = vector.broadcast %106 : vector<8x1xf32> to vector<8x8xf32>
    %108 = arith.subf %104, %107 : vector<8x8xf32>
    %109 = math.exp %108 : vector<8x8xf32>
    %cst_37 = arith.constant dense<0.000000e+00> : vector<8xf32>
    %110 = vector.multi_reduction <add>, %109, %cst_37 [1] : vector<8x8xf32> to vector<8xf32>
    %111 = vector.shape_cast %110 : vector<8xf32> to vector<8x1xf32>
    %112 = tpu.reciprocal %111 {approx = true} : vector<8x1xf32> -> vector<8x1xf32>
    %113 = vector.broadcast %112 : vector<8x1xf32> to vector<8x8xf32>
    %114 = arith.mulf %109, %113 : vector<8x8xf32>
    %cst_38 = arith.constant dense<0.000000e+00> : vector<8x8xf32>
    %115 = tpu.matmul %114, %103, %cst_38 {dimension_numbers = #tpu.dot_dimension_numbers<[1], [0], [0], [1], [0, 0, 1, 1], [], []>} : vector<8x8xf32>, vector<8x8xf32>, vector<8x8xf32> -> vector<8x8xf32>
    %116 = tpu.concatenate %98, %115 in 0 : vector<8x8xf32>, vector<8x8xf32> -> vector<16x8xf32>
    %cst_39 = arith.constant dense<0.000000e+00> : vector<16x32xf32>
    %117 = tpu.matmul %116, %81, %cst_39 {dimension_numbers = #tpu.dot_dimension_numbers<[1], [0], [0], [1], [0, 0, 1, 1], [], []>} : vector<16x8xf32>, vector<8x32xf32>, vector<16x32xf32> -> vector<16x32xf32>
    %118 = arith.addf %80, %117 : vector<16x32xf32>
    %c56 = arith.constant 56 : index
    %c0_40 = arith.constant 0 : index
    %119 = vector.load %arg2[%c56, %c0_40] : memref<344x128xf32, #tpu.memory_space<vmem>>, vector<8x32xf32>
    %120 = vector.extract_strided_slice %5 {offsets = [0, 24], sizes = [8, 8], strides = [1, 1]} : vector<16x96xf32> to vector<8x8xf32>
    %cst_41 = arith.constant 0.353553385 : f32
    %121 = vector.broadcast %cst_41 : f32 to vector<8x8xf32>
    %122 = arith.mulf %120, %121 : vector<8x8xf32>
    %123 = vector.extract_strided_slice %5 {offsets = [0, 56], sizes = [8, 8], strides = [1, 1]} : vector<16x96xf32> to vector<8x8xf32>
    %124 = vector.extract_strided_slice %5 {offsets = [0, 88], sizes = [8, 8], strides = [1, 1]} : vector<16x96xf32> to vector<8x8xf32>
    %cst_42 = arith.constant dense<0.000000e+00> : vector<8x8xf32>
    %125 = tpu.matmul %122, %123, %cst_42 {dimension_numbers = #tpu.dot_dimension_numbers<[1], [1], [0], [0], [0, 0, 1, 0], [], []>} : vector<8x8xf32>, vector<8x8xf32>, vector<8x8xf32> -> vector<8x8xf32>
    %cst_43 = arith.constant dense<0xFF800000> : vector<8xf32>
    %126 = vector.multi_reduction <maximumf>, %125, %cst_43 [1] : vector<8x8xf32> to vector<8xf32>
    %127 = vector.shape_cast %126 : vector<8xf32> to vector<8x1xf32>
    %128 = vector.broadcast %127 : vector<8x1xf32> to vector<8x8xf32>
    %129 = arith.subf %125, %128 : vector<8x8xf32>
    %130 = math.exp %129 : vector<8x8xf32>
    %cst_44 = arith.constant dense<0.000000e+00> : vector<8xf32>
    %131 = vector.multi_reduction <add>, %130, %cst_44 [1] : vector<8x8xf32> to vector<8xf32>
    %132 = vector.shape_cast %131 : vector<8xf32> to vector<8x1xf32>
    %133 = tpu.reciprocal %132 {approx = true} : vector<8x1xf32> -> vector<8x1xf32>
    %134 = vector.broadcast %133 : vector<8x1xf32> to vector<8x8xf32>
    %135 = arith.mulf %130, %134 : vector<8x8xf32>
    %cst_45 = arith.constant dense<0.000000e+00> : vector<8x8xf32>
    %136 = tpu.matmul %135, %124, %cst_45 {dimension_numbers = #tpu.dot_dimension_numbers<[1], [0], [0], [1], [0, 0, 1, 1], [], []>} : vector<8x8xf32>, vector<8x8xf32>, vector<8x8xf32> -> vector<8x8xf32>
    %137 = vector.extract_strided_slice %5 {offsets = [8, 24], sizes = [8, 8], strides = [1, 1]} : vector<16x96xf32> to vector<8x8xf32>
    %cst_46 = arith.constant 0.353553385 : f32
    %138 = vector.broadcast %cst_46 : f32 to vector<8x8xf32>
    %139 = arith.mulf %137, %138 : vector<8x8xf32>
    %140 = vector.extract_strided_slice %5 {offsets = [8, 56], sizes = [8, 8], strides = [1, 1]} : vector<16x96xf32> to vector<8x8xf32>
    %141 = vector.extract_strided_slice %5 {offsets = [8, 88], sizes = [8, 8], strides = [1, 1]} : vector<16x96xf32> to vector<8x8xf32>
    %cst_47 = arith.constant dense<0.000000e+00> : vector<8x8xf32>
    %142 = tpu.matmul %139, %140, %cst_47 {dimension_numbers = #tpu.dot_dimension_numbers<[1], [1], [0], [0], [0, 0, 1, 0], [], []>} : vector<8x8xf32>, vector<8x8xf32>, vector<8x8xf32> -> vector<8x8xf32>
    %cst_48 = arith.constant dense<0xFF800000> : vector<8xf32>
    %143 = vector.multi_reduction <maximumf>, %142, %cst_48 [1] : vector<8x8xf32> to vector<8xf32>
    %144 = vector.shape_cast %143 : vector<8xf32> to vector<8x1xf32>
    %145 = vector.broadcast %144 : vector<8x1xf32> to vector<8x8xf32>
    %146 = arith.subf %142, %145 : vector<8x8xf32>
    %147 = math.exp %146 : vector<8x8xf32>
    %cst_49 = arith.constant dense<0.000000e+00> : vector<8xf32>
    %148 = vector.multi_reduction <add>, %147, %cst_49 [1] : vector<8x8xf32> to vector<8xf32>
    %149 = vector.shape_cast %148 : vector<8xf32> to vector<8x1xf32>
    %150 = tpu.reciprocal %149 {approx = true} : vector<8x1xf32> -> vector<8x1xf32>
    %151 = vector.broadcast %150 : vector<8x1xf32> to vector<8x8xf32>
    %152 = arith.mulf %147, %151 : vector<8x8xf32>
    %cst_50 = arith.constant dense<0.000000e+00> : vector<8x8xf32>
    %153 = tpu.matmul %152, %141, %cst_50 {dimension_numbers = #tpu.dot_dimension_numbers<[1], [0], [0], [1], [0, 0, 1, 1], [], []>} : vector<8x8xf32>, vector<8x8xf32>, vector<8x8xf32> -> vector<8x8xf32>
    %154 = tpu.concatenate %136, %153 in 0 : vector<8x8xf32>, vector<8x8xf32> -> vector<16x8xf32>
    %cst_51 = arith.constant dense<0.000000e+00> : vector<16x32xf32>
    %155 = tpu.matmul %154, %119, %cst_51 {dimension_numbers = #tpu.dot_dimension_numbers<[1], [0], [0], [1], [0, 0, 1, 1], [], []>} : vector<16x8xf32>, vector<8x32xf32>, vector<16x32xf32> -> vector<16x32xf32>
    %156 = arith.addf %118, %155 : vector<16x32xf32>
    %c161 = arith.constant 161 : index
    %c0_52 = arith.constant 0 : index
    %157 = vector.load %arg2[%c161, %c0_52] : memref<344x128xf32, #tpu.memory_space<vmem>>, vector<1x32xf32>
    %158 = vector.broadcast %157 : vector<1x32xf32> to vector<16x32xf32>
    %159 = arith.addf %156, %158 : vector<16x32xf32>
    %c164 = arith.constant 164 : index
    %c0_53 = arith.constant 0 : index
    %160 = vector.load %arg2[%c164, %c0_53] : memref<344x128xf32, #tpu.memory_space<vmem>>, vector<1x32xf32>
    %c165 = arith.constant 165 : index
    %c0_54 = arith.constant 0 : index
    %161 = vector.load %arg2[%c165, %c0_54] : memref<344x128xf32, #tpu.memory_space<vmem>>, vector<1x32xf32>
    %162 = arith.addf %0, %159 : vector<16x32xf32>
    %cst_55 = arith.constant dense<0.000000e+00> : vector<16xf32>
    %163 = vector.multi_reduction <add>, %162, %cst_55 [1] : vector<16x32xf32> to vector<16xf32>
    %164 = vector.shape_cast %163 : vector<16xf32> to vector<16x1xf32>
    %cst_56 = arith.constant 3.200000e+01 : f32
    %165 = vector.broadcast %cst_56 : f32 to vector<16x1xf32>
    %166 = arith.divf %164, %165 : vector<16x1xf32>
    %167 = vector.broadcast %166 : vector<16x1xf32> to vector<16x32xf32>
    %168 = arith.subf %162, %167 : vector<16x32xf32>
    %169 = arith.mulf %168, %168 : vector<16x32xf32>
    %cst_57 = arith.constant dense<0.000000e+00> : vector<16xf32>
    %170 = vector.multi_reduction <add>, %169, %cst_57 [1] : vector<16x32xf32> to vector<16xf32>
    %171 = vector.shape_cast %170 : vector<16xf32> to vector<16x1xf32>
    %cst_58 = arith.constant 3.200000e+01 : f32
    %172 = vector.broadcast %cst_58 : f32 to vector<16x1xf32>
    %173 = arith.divf %171, %172 : vector<16x1xf32>
    %174 = vector.broadcast %166 : vector<16x1xf32> to vector<16x32xf32>
    %175 = arith.subf %162, %174 : vector<16x32xf32>
    %cst_59 = arith.constant 9.99999974E-6 : f32
    %176 = vector.broadcast %cst_59 : f32 to vector<16x1xf32>
    %177 = arith.addf %173, %176 : vector<16x1xf32>
    %178 = math.rsqrt %177 : vector<16x1xf32>
    %179 = vector.broadcast %178 : vector<16x1xf32> to vector<16x32xf32>
    %180 = arith.mulf %175, %179 : vector<16x32xf32>
    %181 = vector.broadcast %160 : vector<1x32xf32> to vector<16x32xf32>
    %182 = arith.mulf %180, %181 : vector<16x32xf32>
    %183 = vector.broadcast %161 : vector<1x32xf32> to vector<16x32xf32>
    %184 = arith.addf %182, %183 : vector<16x32xf32>
    %c64 = arith.constant 64 : index
    %c0_60 = arith.constant 0 : index
    %185 = vector.load %arg2[%c64, %c0_60] : memref<344x128xf32, #tpu.memory_space<vmem>>, vector<32x64xf32>
    %c162 = arith.constant 162 : index
    %c0_61 = arith.constant 0 : index
    %186 = vector.load %arg2[%c162, %c0_61] : memref<344x128xf32, #tpu.memory_space<vmem>>, vector<1x64xf32>
    %c96 = arith.constant 96 : index
    %c0_62 = arith.constant 0 : index
    %187 = vector.load %arg2[%c96, %c0_62] : memref<344x128xf32, #tpu.memory_space<vmem>>, vector<64x32xf32>
    %c163 = arith.constant 163 : index
    %c0_63 = arith.constant 0 : index
    %188 = vector.load %arg2[%c163, %c0_63] : memref<344x128xf32, #tpu.memory_space<vmem>>, vector<1x32xf32>
    %cst_64 = arith.constant dense<0.000000e+00> : vector<16x64xf32>
    %189 = tpu.matmul %184, %185, %cst_64 {dimension_numbers = #tpu.dot_dimension_numbers<[1], [0], [0], [1], [0, 0, 1, 1], [], []>} : vector<16x32xf32>, vector<32x64xf32>, vector<16x64xf32> -> vector<16x64xf32>
    %190 = vector.broadcast %186 : vector<1x64xf32> to vector<16x64xf32>
    %191 = arith.addf %189, %190 : vector<16x64xf32>
    %cst_65 = arith.constant 0.000000e+00 : f32
    %192 = vector.broadcast %cst_65 : f32 to vector<16x64xf32>
    %193 = arith.maximumf %191, %192 : vector<16x64xf32>
    %cst_66 = arith.constant dense<0.000000e+00> : vector<16x32xf32>
    %194 = tpu.matmul %193, %187, %cst_66 {dimension_numbers = #tpu.dot_dimension_numbers<[1], [0], [0], [1], [0, 0, 1, 1], [], []>} : vector<16x64xf32>, vector<64x32xf32>, vector<16x32xf32> -> vector<16x32xf32>
    %195 = vector.broadcast %188 : vector<1x32xf32> to vector<16x32xf32>
    %196 = arith.addf %194, %195 : vector<16x32xf32>
    %c166 = arith.constant 166 : index
    %c0_67 = arith.constant 0 : index
    %197 = vector.load %arg2[%c166, %c0_67] : memref<344x128xf32, #tpu.memory_space<vmem>>, vector<1x32xf32>
    %c167 = arith.constant 167 : index
    %c0_68 = arith.constant 0 : index
    %198 = vector.load %arg2[%c167, %c0_68] : memref<344x128xf32, #tpu.memory_space<vmem>>, vector<1x32xf32>
    %199 = arith.addf %184, %196 : vector<16x32xf32>
    %cst_69 = arith.constant dense<0.000000e+00> : vector<16xf32>
    %200 = vector.multi_reduction <add>, %199, %cst_69 [1] : vector<16x32xf32> to vector<16xf32>
    %201 = vector.shape_cast %200 : vector<16xf32> to vector<16x1xf32>
    %cst_70 = arith.constant 3.200000e+01 : f32
    %202 = vector.broadcast %cst_70 : f32 to vector<16x1xf32>
    %203 = arith.divf %201, %202 : vector<16x1xf32>
    %204 = vector.broadcast %203 : vector<16x1xf32> to vector<16x32xf32>
    %205 = arith.subf %199, %204 : vector<16x32xf32>
    %206 = arith.mulf %205, %205 : vector<16x32xf32>
    %cst_71 = arith.constant dense<0.000000e+00> : vector<16xf32>
    %207 = vector.multi_reduction <add>, %206, %cst_71 [1] : vector<16x32xf32> to vector<16xf32>
    %208 = vector.shape_cast %207 : vector<16xf32> to vector<16x1xf32>
    %cst_72 = arith.constant 3.200000e+01 : f32
    %209 = vector.broadcast %cst_72 : f32 to vector<16x1xf32>
    %210 = arith.divf %208, %209 : vector<16x1xf32>
    %211 = vector.broadcast %203 : vector<16x1xf32> to vector<16x32xf32>
    %212 = arith.subf %199, %211 : vector<16x32xf32>
    %cst_73 = arith.constant 9.99999974E-6 : f32
    %213 = vector.broadcast %cst_73 : f32 to vector<16x1xf32>
    %214 = arith.addf %210, %213 : vector<16x1xf32>
    %215 = math.rsqrt %214 : vector<16x1xf32>
    %216 = vector.broadcast %215 : vector<16x1xf32> to vector<16x32xf32>
    %217 = arith.mulf %212, %216 : vector<16x32xf32>
    %218 = vector.broadcast %197 : vector<1x32xf32> to vector<16x32xf32>
    %219 = arith.mulf %217, %218 : vector<16x32xf32>
    %220 = vector.broadcast %198 : vector<1x32xf32> to vector<16x32xf32>
    %221 = arith.addf %219, %220 : vector<16x32xf32>
    %c168 = arith.constant 168 : index
    %c0_74 = arith.constant 0 : index
    %222 = vector.load %arg2[%c168, %c0_74] : memref<344x128xf32, #tpu.memory_space<vmem>>, vector<32x96xf32>
    %c328 = arith.constant 328 : index
    %c0_75 = arith.constant 0 : index
    %223 = vector.load %arg2[%c328, %c0_75] : memref<344x128xf32, #tpu.memory_space<vmem>>, vector<1x96xf32>
    %cst_76 = arith.constant dense<0.000000e+00> : vector<16x96xf32>
    %224 = tpu.matmul %221, %222, %cst_76 {dimension_numbers = #tpu.dot_dimension_numbers<[1], [0], [0], [1], [0, 0, 1, 1], [], []>} : vector<16x32xf32>, vector<32x96xf32>, vector<16x96xf32> -> vector<16x96xf32>
    %225 = vector.broadcast %223 : vector<1x96xf32> to vector<16x96xf32>
    %226 = arith.addf %224, %225 : vector<16x96xf32>
    %c200 = arith.constant 200 : index
    %c0_77 = arith.constant 0 : index
    %227 = vector.load %arg2[%c200, %c0_77] : memref<344x128xf32, #tpu.memory_space<vmem>>, vector<8x32xf32>
    %228 = vector.extract_strided_slice %226 {offsets = [0, 0], sizes = [8, 8], strides = [1, 1]} : vector<16x96xf32> to vector<8x8xf32>
    %cst_78 = arith.constant 0.353553385 : f32
    %229 = vector.broadcast %cst_78 : f32 to vector<8x8xf32>
    %230 = arith.mulf %228, %229 : vector<8x8xf32>
    %231 = vector.extract_strided_slice %226 {offsets = [0, 32], sizes = [8, 8], strides = [1, 1]} : vector<16x96xf32> to vector<8x8xf32>
    %232 = vector.extract_strided_slice %226 {offsets = [0, 64], sizes = [8, 8], strides = [1, 1]} : vector<16x96xf32> to vector<8x8xf32>
    %cst_79 = arith.constant dense<0.000000e+00> : vector<8x8xf32>
    %233 = tpu.matmul %230, %231, %cst_79 {dimension_numbers = #tpu.dot_dimension_numbers<[1], [1], [0], [0], [0, 0, 1, 0], [], []>} : vector<8x8xf32>, vector<8x8xf32>, vector<8x8xf32> -> vector<8x8xf32>
    %cst_80 = arith.constant dense<0xFF800000> : vector<8xf32>
    %234 = vector.multi_reduction <maximumf>, %233, %cst_80 [1] : vector<8x8xf32> to vector<8xf32>
    %235 = vector.shape_cast %234 : vector<8xf32> to vector<8x1xf32>
    %236 = vector.broadcast %235 : vector<8x1xf32> to vector<8x8xf32>
    %237 = arith.subf %233, %236 : vector<8x8xf32>
    %238 = math.exp %237 : vector<8x8xf32>
    %cst_81 = arith.constant dense<0.000000e+00> : vector<8xf32>
    %239 = vector.multi_reduction <add>, %238, %cst_81 [1] : vector<8x8xf32> to vector<8xf32>
    %240 = vector.shape_cast %239 : vector<8xf32> to vector<8x1xf32>
    %241 = tpu.reciprocal %240 {approx = true} : vector<8x1xf32> -> vector<8x1xf32>
    %242 = vector.broadcast %241 : vector<8x1xf32> to vector<8x8xf32>
    %243 = arith.mulf %238, %242 : vector<8x8xf32>
    %cst_82 = arith.constant dense<0.000000e+00> : vector<8x8xf32>
    %244 = tpu.matmul %243, %232, %cst_82 {dimension_numbers = #tpu.dot_dimension_numbers<[1], [0], [0], [1], [0, 0, 1, 1], [], []>} : vector<8x8xf32>, vector<8x8xf32>, vector<8x8xf32> -> vector<8x8xf32>
    %245 = vector.extract_strided_slice %226 {offsets = [8, 0], sizes = [8, 8], strides = [1, 1]} : vector<16x96xf32> to vector<8x8xf32>
    %cst_83 = arith.constant 0.353553385 : f32
    %246 = vector.broadcast %cst_83 : f32 to vector<8x8xf32>
    %247 = arith.mulf %245, %246 : vector<8x8xf32>
    %248 = vector.extract_strided_slice %226 {offsets = [8, 32], sizes = [8, 8], strides = [1, 1]} : vector<16x96xf32> to vector<8x8xf32>
    %249 = vector.extract_strided_slice %226 {offsets = [8, 64], sizes = [8, 8], strides = [1, 1]} : vector<16x96xf32> to vector<8x8xf32>
    %cst_84 = arith.constant dense<0.000000e+00> : vector<8x8xf32>
    %250 = tpu.matmul %247, %248, %cst_84 {dimension_numbers = #tpu.dot_dimension_numbers<[1], [1], [0], [0], [0, 0, 1, 0], [], []>} : vector<8x8xf32>, vector<8x8xf32>, vector<8x8xf32> -> vector<8x8xf32>
    %cst_85 = arith.constant dense<0xFF800000> : vector<8xf32>
    %251 = vector.multi_reduction <maximumf>, %250, %cst_85 [1] : vector<8x8xf32> to vector<8xf32>
    %252 = vector.shape_cast %251 : vector<8xf32> to vector<8x1xf32>
    %253 = vector.broadcast %252 : vector<8x1xf32> to vector<8x8xf32>
    %254 = arith.subf %250, %253 : vector<8x8xf32>
    %255 = math.exp %254 : vector<8x8xf32>
    %cst_86 = arith.constant dense<0.000000e+00> : vector<8xf32>
    %256 = vector.multi_reduction <add>, %255, %cst_86 [1] : vector<8x8xf32> to vector<8xf32>
    %257 = vector.shape_cast %256 : vector<8xf32> to vector<8x1xf32>
    %258 = tpu.reciprocal %257 {approx = true} : vector<8x1xf32> -> vector<8x1xf32>
    %259 = vector.broadcast %258 : vector<8x1xf32> to vector<8x8xf32>
    %260 = arith.mulf %255, %259 : vector<8x8xf32>
    %cst_87 = arith.constant dense<0.000000e+00> : vector<8x8xf32>
    %261 = tpu.matmul %260, %249, %cst_87 {dimension_numbers = #tpu.dot_dimension_numbers<[1], [0], [0], [1], [0, 0, 1, 1], [], []>} : vector<8x8xf32>, vector<8x8xf32>, vector<8x8xf32> -> vector<8x8xf32>
    %262 = tpu.concatenate %244, %261 in 0 : vector<8x8xf32>, vector<8x8xf32> -> vector<16x8xf32>
    %cst_88 = arith.constant dense<0.000000e+00> : vector<16x32xf32>
    %263 = tpu.matmul %262, %227, %cst_88 {dimension_numbers = #tpu.dot_dimension_numbers<[1], [0], [0], [1], [0, 0, 1, 1], [], []>} : vector<16x8xf32>, vector<8x32xf32>, vector<16x32xf32> -> vector<16x32xf32>
    %c208 = arith.constant 208 : index
    %c0_89 = arith.constant 0 : index
    %264 = vector.load %arg2[%c208, %c0_89] : memref<344x128xf32, #tpu.memory_space<vmem>>, vector<8x32xf32>
    %265 = vector.extract_strided_slice %226 {offsets = [0, 8], sizes = [8, 8], strides = [1, 1]} : vector<16x96xf32> to vector<8x8xf32>
    %cst_90 = arith.constant 0.353553385 : f32
    %266 = vector.broadcast %cst_90 : f32 to vector<8x8xf32>
    %267 = arith.mulf %265, %266 : vector<8x8xf32>
    %268 = vector.extract_strided_slice %226 {offsets = [0, 40], sizes = [8, 8], strides = [1, 1]} : vector<16x96xf32> to vector<8x8xf32>
    %269 = vector.extract_strided_slice %226 {offsets = [0, 72], sizes = [8, 8], strides = [1, 1]} : vector<16x96xf32> to vector<8x8xf32>
    %cst_91 = arith.constant dense<0.000000e+00> : vector<8x8xf32>
    %270 = tpu.matmul %267, %268, %cst_91 {dimension_numbers = #tpu.dot_dimension_numbers<[1], [1], [0], [0], [0, 0, 1, 0], [], []>} : vector<8x8xf32>, vector<8x8xf32>, vector<8x8xf32> -> vector<8x8xf32>
    %cst_92 = arith.constant dense<0xFF800000> : vector<8xf32>
    %271 = vector.multi_reduction <maximumf>, %270, %cst_92 [1] : vector<8x8xf32> to vector<8xf32>
    %272 = vector.shape_cast %271 : vector<8xf32> to vector<8x1xf32>
    %273 = vector.broadcast %272 : vector<8x1xf32> to vector<8x8xf32>
    %274 = arith.subf %270, %273 : vector<8x8xf32>
    %275 = math.exp %274 : vector<8x8xf32>
    %cst_93 = arith.constant dense<0.000000e+00> : vector<8xf32>
    %276 = vector.multi_reduction <add>, %275, %cst_93 [1] : vector<8x8xf32> to vector<8xf32>
    %277 = vector.shape_cast %276 : vector<8xf32> to vector<8x1xf32>
    %278 = tpu.reciprocal %277 {approx = true} : vector<8x1xf32> -> vector<8x1xf32>
    %279 = vector.broadcast %278 : vector<8x1xf32> to vector<8x8xf32>
    %280 = arith.mulf %275, %279 : vector<8x8xf32>
    %cst_94 = arith.constant dense<0.000000e+00> : vector<8x8xf32>
    %281 = tpu.matmul %280, %269, %cst_94 {dimension_numbers = #tpu.dot_dimension_numbers<[1], [0], [0], [1], [0, 0, 1, 1], [], []>} : vector<8x8xf32>, vector<8x8xf32>, vector<8x8xf32> -> vector<8x8xf32>
    %282 = vector.extract_strided_slice %226 {offsets = [8, 8], sizes = [8, 8], strides = [1, 1]} : vector<16x96xf32> to vector<8x8xf32>
    %cst_95 = arith.constant 0.353553385 : f32
    %283 = vector.broadcast %cst_95 : f32 to vector<8x8xf32>
    %284 = arith.mulf %282, %283 : vector<8x8xf32>
    %285 = vector.extract_strided_slice %226 {offsets = [8, 40], sizes = [8, 8], strides = [1, 1]} : vector<16x96xf32> to vector<8x8xf32>
    %286 = vector.extract_strided_slice %226 {offsets = [8, 72], sizes = [8, 8], strides = [1, 1]} : vector<16x96xf32> to vector<8x8xf32>
    %cst_96 = arith.constant dense<0.000000e+00> : vector<8x8xf32>
    %287 = tpu.matmul %284, %285, %cst_96 {dimension_numbers = #tpu.dot_dimension_numbers<[1], [1], [0], [0], [0, 0, 1, 0], [], []>} : vector<8x8xf32>, vector<8x8xf32>, vector<8x8xf32> -> vector<8x8xf32>
    %cst_97 = arith.constant dense<0xFF800000> : vector<8xf32>
    %288 = vector.multi_reduction <maximumf>, %287, %cst_97 [1] : vector<8x8xf32> to vector<8xf32>
    %289 = vector.shape_cast %288 : vector<8xf32> to vector<8x1xf32>
    %290 = vector.broadcast %289 : vector<8x1xf32> to vector<8x8xf32>
    %291 = arith.subf %287, %290 : vector<8x8xf32>
    %292 = math.exp %291 : vector<8x8xf32>
    %cst_98 = arith.constant dense<0.000000e+00> : vector<8xf32>
    %293 = vector.multi_reduction <add>, %292, %cst_98 [1] : vector<8x8xf32> to vector<8xf32>
    %294 = vector.shape_cast %293 : vector<8xf32> to vector<8x1xf32>
    %295 = tpu.reciprocal %294 {approx = true} : vector<8x1xf32> -> vector<8x1xf32>
    %296 = vector.broadcast %295 : vector<8x1xf32> to vector<8x8xf32>
    %297 = arith.mulf %292, %296 : vector<8x8xf32>
    %cst_99 = arith.constant dense<0.000000e+00> : vector<8x8xf32>
    %298 = tpu.matmul %297, %286, %cst_99 {dimension_numbers = #tpu.dot_dimension_numbers<[1], [0], [0], [1], [0, 0, 1, 1], [], []>} : vector<8x8xf32>, vector<8x8xf32>, vector<8x8xf32> -> vector<8x8xf32>
    %299 = tpu.concatenate %281, %298 in 0 : vector<8x8xf32>, vector<8x8xf32> -> vector<16x8xf32>
    %cst_100 = arith.constant dense<0.000000e+00> : vector<16x32xf32>
    %300 = tpu.matmul %299, %264, %cst_100 {dimension_numbers = #tpu.dot_dimension_numbers<[1], [0], [0], [1], [0, 0, 1, 1], [], []>} : vector<16x8xf32>, vector<8x32xf32>, vector<16x32xf32> -> vector<16x32xf32>
    %301 = arith.addf %263, %300 : vector<16x32xf32>
    %c216 = arith.constant 216 : index
    %c0_101 = arith.constant 0 : index
    %302 = vector.load %arg2[%c216, %c0_101] : memref<344x128xf32, #tpu.memory_space<vmem>>, vector<8x32xf32>
    %303 = vector.extract_strided_slice %226 {offsets = [0, 16], sizes = [8, 8], strides = [1, 1]} : vector<16x96xf32> to vector<8x8xf32>
    %cst_102 = arith.constant 0.353553385 : f32
    %304 = vector.broadcast %cst_102 : f32 to vector<8x8xf32>
    %305 = arith.mulf %303, %304 : vector<8x8xf32>
    %306 = vector.extract_strided_slice %226 {offsets = [0, 48], sizes = [8, 8], strides = [1, 1]} : vector<16x96xf32> to vector<8x8xf32>
    %307 = vector.extract_strided_slice %226 {offsets = [0, 80], sizes = [8, 8], strides = [1, 1]} : vector<16x96xf32> to vector<8x8xf32>
    %cst_103 = arith.constant dense<0.000000e+00> : vector<8x8xf32>
    %308 = tpu.matmul %305, %306, %cst_103 {dimension_numbers = #tpu.dot_dimension_numbers<[1], [1], [0], [0], [0, 0, 1, 0], [], []>} : vector<8x8xf32>, vector<8x8xf32>, vector<8x8xf32> -> vector<8x8xf32>
    %cst_104 = arith.constant dense<0xFF800000> : vector<8xf32>
    %309 = vector.multi_reduction <maximumf>, %308, %cst_104 [1] : vector<8x8xf32> to vector<8xf32>
    %310 = vector.shape_cast %309 : vector<8xf32> to vector<8x1xf32>
    %311 = vector.broadcast %310 : vector<8x1xf32> to vector<8x8xf32>
    %312 = arith.subf %308, %311 : vector<8x8xf32>
    %313 = math.exp %312 : vector<8x8xf32>
    %cst_105 = arith.constant dense<0.000000e+00> : vector<8xf32>
    %314 = vector.multi_reduction <add>, %313, %cst_105 [1] : vector<8x8xf32> to vector<8xf32>
    %315 = vector.shape_cast %314 : vector<8xf32> to vector<8x1xf32>
    %316 = tpu.reciprocal %315 {approx = true} : vector<8x1xf32> -> vector<8x1xf32>
    %317 = vector.broadcast %316 : vector<8x1xf32> to vector<8x8xf32>
    %318 = arith.mulf %313, %317 : vector<8x8xf32>
    %cst_106 = arith.constant dense<0.000000e+00> : vector<8x8xf32>
    %319 = tpu.matmul %318, %307, %cst_106 {dimension_numbers = #tpu.dot_dimension_numbers<[1], [0], [0], [1], [0, 0, 1, 1], [], []>} : vector<8x8xf32>, vector<8x8xf32>, vector<8x8xf32> -> vector<8x8xf32>
    %320 = vector.extract_strided_slice %226 {offsets = [8, 16], sizes = [8, 8], strides = [1, 1]} : vector<16x96xf32> to vector<8x8xf32>
    %cst_107 = arith.constant 0.353553385 : f32
    %321 = vector.broadcast %cst_107 : f32 to vector<8x8xf32>
    %322 = arith.mulf %320, %321 : vector<8x8xf32>
    %323 = vector.extract_strided_slice %226 {offsets = [8, 48], sizes = [8, 8], strides = [1, 1]} : vector<16x96xf32> to vector<8x8xf32>
    %324 = vector.extract_strided_slice %226 {offsets = [8, 80], sizes = [8, 8], strides = [1, 1]} : vector<16x96xf32> to vector<8x8xf32>
    %cst_108 = arith.constant dense<0.000000e+00> : vector<8x8xf32>
    %325 = tpu.matmul %322, %323, %cst_108 {dimension_numbers = #tpu.dot_dimension_numbers<[1], [1], [0], [0], [0, 0, 1, 0], [], []>} : vector<8x8xf32>, vector<8x8xf32>, vector<8x8xf32> -> vector<8x8xf32>
    %cst_109 = arith.constant dense<0xFF800000> : vector<8xf32>
    %326 = vector.multi_reduction <maximumf>, %325, %cst_109 [1] : vector<8x8xf32> to vector<8xf32>
    %327 = vector.shape_cast %326 : vector<8xf32> to vector<8x1xf32>
    %328 = vector.broadcast %327 : vector<8x1xf32> to vector<8x8xf32>
    %329 = arith.subf %325, %328 : vector<8x8xf32>
    %330 = math.exp %329 : vector<8x8xf32>
    %cst_110 = arith.constant dense<0.000000e+00> : vector<8xf32>
    %331 = vector.multi_reduction <add>, %330, %cst_110 [1] : vector<8x8xf32> to vector<8xf32>
    %332 = vector.shape_cast %331 : vector<8xf32> to vector<8x1xf32>
    %333 = tpu.reciprocal %332 {approx = true} : vector<8x1xf32> -> vector<8x1xf32>
    %334 = vector.broadcast %333 : vector<8x1xf32> to vector<8x8xf32>
    %335 = arith.mulf %330, %334 : vector<8x8xf32>
    %cst_111 = arith.constant dense<0.000000e+00> : vector<8x8xf32>
    %336 = tpu.matmul %335, %324, %cst_111 {dimension_numbers = #tpu.dot_dimension_numbers<[1], [0], [0], [1], [0, 0, 1, 1], [], []>} : vector<8x8xf32>, vector<8x8xf32>, vector<8x8xf32> -> vector<8x8xf32>
    %337 = tpu.concatenate %319, %336 in 0 : vector<8x8xf32>, vector<8x8xf32> -> vector<16x8xf32>
    %cst_112 = arith.constant dense<0.000000e+00> : vector<16x32xf32>
    %338 = tpu.matmul %337, %302, %cst_112 {dimension_numbers = #tpu.dot_dimension_numbers<[1], [0], [0], [1], [0, 0, 1, 1], [], []>} : vector<16x8xf32>, vector<8x32xf32>, vector<16x32xf32> -> vector<16x32xf32>
    %339 = arith.addf %301, %338 : vector<16x32xf32>
    %c224 = arith.constant 224 : index
    %c0_113 = arith.constant 0 : index
    %340 = vector.load %arg2[%c224, %c0_113] : memref<344x128xf32, #tpu.memory_space<vmem>>, vector<8x32xf32>
    %341 = vector.extract_strided_slice %226 {offsets = [0, 24], sizes = [8, 8], strides = [1, 1]} : vector<16x96xf32> to vector<8x8xf32>
    %cst_114 = arith.constant 0.353553385 : f32
    %342 = vector.broadcast %cst_114 : f32 to vector<8x8xf32>
    %343 = arith.mulf %341, %342 : vector<8x8xf32>
    %344 = vector.extract_strided_slice %226 {offsets = [0, 56], sizes = [8, 8], strides = [1, 1]} : vector<16x96xf32> to vector<8x8xf32>
    %345 = vector.extract_strided_slice %226 {offsets = [0, 88], sizes = [8, 8], strides = [1, 1]} : vector<16x96xf32> to vector<8x8xf32>
    %cst_115 = arith.constant dense<0.000000e+00> : vector<8x8xf32>
    %346 = tpu.matmul %343, %344, %cst_115 {dimension_numbers = #tpu.dot_dimension_numbers<[1], [1], [0], [0], [0, 0, 1, 0], [], []>} : vector<8x8xf32>, vector<8x8xf32>, vector<8x8xf32> -> vector<8x8xf32>
    %cst_116 = arith.constant dense<0xFF800000> : vector<8xf32>
    %347 = vector.multi_reduction <maximumf>, %346, %cst_116 [1] : vector<8x8xf32> to vector<8xf32>
    %348 = vector.shape_cast %347 : vector<8xf32> to vector<8x1xf32>
    %349 = vector.broadcast %348 : vector<8x1xf32> to vector<8x8xf32>
    %350 = arith.subf %346, %349 : vector<8x8xf32>
    %351 = math.exp %350 : vector<8x8xf32>
    %cst_117 = arith.constant dense<0.000000e+00> : vector<8xf32>
    %352 = vector.multi_reduction <add>, %351, %cst_117 [1] : vector<8x8xf32> to vector<8xf32>
    %353 = vector.shape_cast %352 : vector<8xf32> to vector<8x1xf32>
    %354 = tpu.reciprocal %353 {approx = true} : vector<8x1xf32> -> vector<8x1xf32>
    %355 = vector.broadcast %354 : vector<8x1xf32> to vector<8x8xf32>
    %356 = arith.mulf %351, %355 : vector<8x8xf32>
    %cst_118 = arith.constant dense<0.000000e+00> : vector<8x8xf32>
    %357 = tpu.matmul %356, %345, %cst_118 {dimension_numbers = #tpu.dot_dimension_numbers<[1], [0], [0], [1], [0, 0, 1, 1], [], []>} : vector<8x8xf32>, vector<8x8xf32>, vector<8x8xf32> -> vector<8x8xf32>
    %358 = vector.extract_strided_slice %226 {offsets = [8, 24], sizes = [8, 8], strides = [1, 1]} : vector<16x96xf32> to vector<8x8xf32>
    %cst_119 = arith.constant 0.353553385 : f32
    %359 = vector.broadcast %cst_119 : f32 to vector<8x8xf32>
    %360 = arith.mulf %358, %359 : vector<8x8xf32>
    %361 = vector.extract_strided_slice %226 {offsets = [8, 56], sizes = [8, 8], strides = [1, 1]} : vector<16x96xf32> to vector<8x8xf32>
    %362 = vector.extract_strided_slice %226 {offsets = [8, 88], sizes = [8, 8], strides = [1, 1]} : vector<16x96xf32> to vector<8x8xf32>
    %cst_120 = arith.constant dense<0.000000e+00> : vector<8x8xf32>
    %363 = tpu.matmul %360, %361, %cst_120 {dimension_numbers = #tpu.dot_dimension_numbers<[1], [1], [0], [0], [0, 0, 1, 0], [], []>} : vector<8x8xf32>, vector<8x8xf32>, vector<8x8xf32> -> vector<8x8xf32>
    %cst_121 = arith.constant dense<0xFF800000> : vector<8xf32>
    %364 = vector.multi_reduction <maximumf>, %363, %cst_121 [1] : vector<8x8xf32> to vector<8xf32>
    %365 = vector.shape_cast %364 : vector<8xf32> to vector<8x1xf32>
    %366 = vector.broadcast %365 : vector<8x1xf32> to vector<8x8xf32>
    %367 = arith.subf %363, %366 : vector<8x8xf32>
    %368 = math.exp %367 : vector<8x8xf32>
    %cst_122 = arith.constant dense<0.000000e+00> : vector<8xf32>
    %369 = vector.multi_reduction <add>, %368, %cst_122 [1] : vector<8x8xf32> to vector<8xf32>
    %370 = vector.shape_cast %369 : vector<8xf32> to vector<8x1xf32>
    %371 = tpu.reciprocal %370 {approx = true} : vector<8x1xf32> -> vector<8x1xf32>
    %372 = vector.broadcast %371 : vector<8x1xf32> to vector<8x8xf32>
    %373 = arith.mulf %368, %372 : vector<8x8xf32>
    %cst_123 = arith.constant dense<0.000000e+00> : vector<8x8xf32>
    %374 = tpu.matmul %373, %362, %cst_123 {dimension_numbers = #tpu.dot_dimension_numbers<[1], [0], [0], [1], [0, 0, 1, 1], [], []>} : vector<8x8xf32>, vector<8x8xf32>, vector<8x8xf32> -> vector<8x8xf32>
    %375 = tpu.concatenate %357, %374 in 0 : vector<8x8xf32>, vector<8x8xf32> -> vector<16x8xf32>
    %cst_124 = arith.constant dense<0.000000e+00> : vector<16x32xf32>
    %376 = tpu.matmul %375, %340, %cst_124 {dimension_numbers = #tpu.dot_dimension_numbers<[1], [0], [0], [1], [0, 0, 1, 1], [], []>} : vector<16x8xf32>, vector<8x32xf32>, vector<16x32xf32> -> vector<16x32xf32>
    %377 = arith.addf %339, %376 : vector<16x32xf32>
    %c329 = arith.constant 329 : index
    %c0_125 = arith.constant 0 : index
    %378 = vector.load %arg2[%c329, %c0_125] : memref<344x128xf32, #tpu.memory_space<vmem>>, vector<1x32xf32>
    %379 = vector.broadcast %378 : vector<1x32xf32> to vector<16x32xf32>
    %380 = arith.addf %377, %379 : vector<16x32xf32>
    %c332 = arith.constant 332 : index
    %c0_126 = arith.constant 0 : index
    %381 = vector.load %arg2[%c332, %c0_126] : memref<344x128xf32, #tpu.memory_space<vmem>>, vector<1x32xf32>
    %c333 = arith.constant 333 : index
    %c0_127 = arith.constant 0 : index
    %382 = vector.load %arg2[%c333, %c0_127] : memref<344x128xf32, #tpu.memory_space<vmem>>, vector<1x32xf32>
    %383 = arith.addf %221, %380 : vector<16x32xf32>
    %cst_128 = arith.constant dense<0.000000e+00> : vector<16xf32>
    %384 = vector.multi_reduction <add>, %383, %cst_128 [1] : vector<16x32xf32> to vector<16xf32>
    %385 = vector.shape_cast %384 : vector<16xf32> to vector<16x1xf32>
    %cst_129 = arith.constant 3.200000e+01 : f32
    %386 = vector.broadcast %cst_129 : f32 to vector<16x1xf32>
    %387 = arith.divf %385, %386 : vector<16x1xf32>
    %388 = vector.broadcast %387 : vector<16x1xf32> to vector<16x32xf32>
    %389 = arith.subf %383, %388 : vector<16x32xf32>
    %390 = arith.mulf %389, %389 : vector<16x32xf32>
    %cst_130 = arith.constant dense<0.000000e+00> : vector<16xf32>
    %391 = vector.multi_reduction <add>, %390, %cst_130 [1] : vector<16x32xf32> to vector<16xf32>
    %392 = vector.shape_cast %391 : vector<16xf32> to vector<16x1xf32>
    %cst_131 = arith.constant 3.200000e+01 : f32
    %393 = vector.broadcast %cst_131 : f32 to vector<16x1xf32>
    %394 = arith.divf %392, %393 : vector<16x1xf32>
    %395 = vector.broadcast %387 : vector<16x1xf32> to vector<16x32xf32>
    %396 = arith.subf %383, %395 : vector<16x32xf32>
    %cst_132 = arith.constant 9.99999974E-6 : f32
    %397 = vector.broadcast %cst_132 : f32 to vector<16x1xf32>
    %398 = arith.addf %394, %397 : vector<16x1xf32>
    %399 = math.rsqrt %398 : vector<16x1xf32>
    %400 = vector.broadcast %399 : vector<16x1xf32> to vector<16x32xf32>
    %401 = arith.mulf %396, %400 : vector<16x32xf32>
    %402 = vector.broadcast %381 : vector<1x32xf32> to vector<16x32xf32>
    %403 = arith.mulf %401, %402 : vector<16x32xf32>
    %404 = vector.broadcast %382 : vector<1x32xf32> to vector<16x32xf32>
    %405 = arith.addf %403, %404 : vector<16x32xf32>
    %c232 = arith.constant 232 : index
    %c0_133 = arith.constant 0 : index
    %406 = vector.load %arg2[%c232, %c0_133] : memref<344x128xf32, #tpu.memory_space<vmem>>, vector<32x64xf32>
    %c330 = arith.constant 330 : index
    %c0_134 = arith.constant 0 : index
    %407 = vector.load %arg2[%c330, %c0_134] : memref<344x128xf32, #tpu.memory_space<vmem>>, vector<1x64xf32>
    %c264 = arith.constant 264 : index
    %c0_135 = arith.constant 0 : index
    %408 = vector.load %arg2[%c264, %c0_135] : memref<344x128xf32, #tpu.memory_space<vmem>>, vector<64x32xf32>
    %c331 = arith.constant 331 : index
    %c0_136 = arith.constant 0 : index
    %409 = vector.load %arg2[%c331, %c0_136] : memref<344x128xf32, #tpu.memory_space<vmem>>, vector<1x32xf32>
    %cst_137 = arith.constant dense<0.000000e+00> : vector<16x64xf32>
    %410 = tpu.matmul %405, %406, %cst_137 {dimension_numbers = #tpu.dot_dimension_numbers<[1], [0], [0], [1], [0, 0, 1, 1], [], []>} : vector<16x32xf32>, vector<32x64xf32>, vector<16x64xf32> -> vector<16x64xf32>
    %411 = vector.broadcast %407 : vector<1x64xf32> to vector<16x64xf32>
    %412 = arith.addf %410, %411 : vector<16x64xf32>
    %cst_138 = arith.constant 0.000000e+00 : f32
    %413 = vector.broadcast %cst_138 : f32 to vector<16x64xf32>
    %414 = arith.maximumf %412, %413 : vector<16x64xf32>
    %cst_139 = arith.constant dense<0.000000e+00> : vector<16x32xf32>
    %415 = tpu.matmul %414, %408, %cst_139 {dimension_numbers = #tpu.dot_dimension_numbers<[1], [0], [0], [1], [0, 0, 1, 1], [], []>} : vector<16x64xf32>, vector<64x32xf32>, vector<16x32xf32> -> vector<16x32xf32>
    %416 = vector.broadcast %409 : vector<1x32xf32> to vector<16x32xf32>
    %417 = arith.addf %415, %416 : vector<16x32xf32>
    %c334 = arith.constant 334 : index
    %c0_140 = arith.constant 0 : index
    %418 = vector.load %arg2[%c334, %c0_140] : memref<344x128xf32, #tpu.memory_space<vmem>>, vector<1x32xf32>
    %c335 = arith.constant 335 : index
    %c0_141 = arith.constant 0 : index
    %419 = vector.load %arg2[%c335, %c0_141] : memref<344x128xf32, #tpu.memory_space<vmem>>, vector<1x32xf32>
    %420 = arith.addf %405, %417 : vector<16x32xf32>
    %cst_142 = arith.constant dense<0.000000e+00> : vector<16xf32>
    %421 = vector.multi_reduction <add>, %420, %cst_142 [1] : vector<16x32xf32> to vector<16xf32>
    %422 = vector.shape_cast %421 : vector<16xf32> to vector<16x1xf32>
    %cst_143 = arith.constant 3.200000e+01 : f32
    %423 = vector.broadcast %cst_143 : f32 to vector<16x1xf32>
    %424 = arith.divf %422, %423 : vector<16x1xf32>
    %425 = vector.broadcast %424 : vector<16x1xf32> to vector<16x32xf32>
    %426 = arith.subf %420, %425 : vector<16x32xf32>
    %427 = arith.mulf %426, %426 : vector<16x32xf32>
    %cst_144 = arith.constant dense<0.000000e+00> : vector<16xf32>
    %428 = vector.multi_reduction <add>, %427, %cst_144 [1] : vector<16x32xf32> to vector<16xf32>
    %429 = vector.shape_cast %428 : vector<16xf32> to vector<16x1xf32>
    %cst_145 = arith.constant 3.200000e+01 : f32
    %430 = vector.broadcast %cst_145 : f32 to vector<16x1xf32>
    %431 = arith.divf %429, %430 : vector<16x1xf32>
    %432 = vector.broadcast %424 : vector<16x1xf32> to vector<16x32xf32>
    %433 = arith.subf %420, %432 : vector<16x32xf32>
    %cst_146 = arith.constant 9.99999974E-6 : f32
    %434 = vector.broadcast %cst_146 : f32 to vector<16x1xf32>
    %435 = arith.addf %431, %434 : vector<16x1xf32>
    %436 = math.rsqrt %435 : vector<16x1xf32>
    %437 = vector.broadcast %436 : vector<16x1xf32> to vector<16x32xf32>
    %438 = arith.mulf %433, %437 : vector<16x32xf32>
    %439 = vector.broadcast %418 : vector<1x32xf32> to vector<16x32xf32>
    %440 = arith.mulf %438, %439 : vector<16x32xf32>
    %441 = vector.broadcast %419 : vector<1x32xf32> to vector<16x32xf32>
    %442 = arith.addf %440, %441 : vector<16x32xf32>
    %c336 = arith.constant 336 : index
    %c0_147 = arith.constant 0 : index
    %443 = vector.load %arg2[%c336, %c0_147] : memref<344x128xf32, #tpu.memory_space<vmem>>, vector<1x32xf32>
    %c337 = arith.constant 337 : index
    %c0_148 = arith.constant 0 : index
    %444 = vector.load %arg2[%c337, %c0_148] : memref<344x128xf32, #tpu.memory_space<vmem>>, vector<1x1xf32>
    %445 = vector.broadcast %443 : vector<1x32xf32> to vector<16x32xf32>
    %446 = arith.mulf %442, %445 : vector<16x32xf32>
    %cst_149 = arith.constant dense<0.000000e+00> : vector<16xf32>
    %447 = vector.multi_reduction <add>, %446, %cst_149 [1] : vector<16x32xf32> to vector<16xf32>
    %448 = vector.shape_cast %447 : vector<16xf32> to vector<16x1xf32>
    %449 = vector.broadcast %444 : vector<1x1xf32> to vector<16x1xf32>
    %450 = arith.addf %448, %449 : vector<16x1xf32>
    %451 = arith.negf %450 : vector<16x1xf32>
    %452 = math.exp %451 : vector<16x1xf32>
    %cst_150 = arith.constant 1.000000e+00 : f32
    %453 = vector.broadcast %cst_150 : f32 to vector<16x1xf32>
    %454 = arith.addf %453, %452 : vector<16x1xf32>
    %455 = arith.divf %453, %454 : vector<16x1xf32>
    %c0_151 = arith.constant 0 : index
    %c0_152 = arith.constant 0 : index
    %456 = vector.load %arg3[%c0_151, %c0_152] : memref<16x1xf32, #tpu.memory_space<vmem>>, vector<16x1xf32>
    tpu.vector_store %arg3[%c0_151, %c0_152], %455 {strides = array<i32>} : memref<16x1xf32, #tpu.memory_space<vmem>>, vector<16x1xf32>,
    return
  }
  func.func @transform_0(%arg0: i32) -> (i32, i32) {
    %c0_i32 = arith.constant 0 : i32
    %c0_i32_0 = arith.constant 0 : i32
    %c0_i32_1 = arith.constant 0 : i32
    return %c0_i32, %c0_i32_0 : i32, i32
  }
  func.func @transform_1(%arg0: i32) -> (i32, i32) {
    %c0_i32 = arith.constant 0 : i32
    %c0_i32_0 = arith.constant 0 : i32
    %c0_i32_1 = arith.constant 0 : i32
    return %c0_i32, %c0_i32_0 : i32, i32
  }
  func.func @transform_2(%arg0: i32) -> (i32, i32) {
    %c0_i32 = arith.constant 0 : i32
    %c0_i32_0 = arith.constant 0 : i32
    %c0_i32_1 = arith.constant 0 : i32
    return %c0_i32, %c0_i32_0 : i32, i32
  }
}

</mosaic_0001>

<llo_original>
// kernel: dsn_forward.1
$region0: #{dsn_forward.1}
  #allocation0 [shape = 'u32[]', space=smem, size = 0x4, offset = 0x4, fixed_abs, tag = 'smem constant byte address 0x4 - core index']
  #allocation1 [shape = 'u32[144,128]{1,0:T(1,128)}', space=vmem, size = 0x12000, scoped, tag = 'internal scratch']
  %s0 = inlined_call_operand.vmem [shape: f32[16,32], index: 0, kind: input, shape index: {}]
  %s1 = inlined_call_operand.hbm [shape: f32[344,128], index: 1, kind: input, shape index: {}]
  %s2 = inlined_call_operand.vmem [shape: f32[16,1], index: 2, kind: output, shape index: {}]
  %s3 = sld [smem:[#allocation0]]
  $region22: #{dsn_forward.1} parent=0
    _
  %s5 = ssub.s32 1, %s3
  %s6 = scalar_select 0, %s5, %s3
  $region1: #{dsn_forward.1} parent=0
    #allocation2 [shape = 'u8[176128]{0}', space=vmem, size = 0x2b000, scoped, tag = 'input window, operand 1, single buffered']
    #allocation3 [shape = 's32[1]{0}', space=sflag, size = 0x4, scoped, tag = 'scoped memory for dsn_forward.1']
    %7 = vsyncpa [#allocation3], 0
    // Predicated region
    $region2: #{dsn_forward.1} parent=1 // pred_check
      _
    $region3: #{dsn_forward.1} parent=1 // pred_check_branch
      %9 = sbr.rel (0) target = $region5
    $region4: #{dsn_forward.1} parent=1 // pred_region
      _
    $region5: #{dsn_forward.1} parent=1 // pred_fallthru
      _
    // Predicated region
    $region6: #{dsn_forward.1} parent=1 // pred_check
      _
    $region7: #{dsn_forward.1} parent=1 // pred_check_branch
      %11 = sbr.rel (0) target = $region9
    $region8: #{dsn_forward.1} parent=1 // pred_region
      %s13 = ssub.s32 5504, 5504
      %14 = vsyncadd [#allocation3], %s13
      %s15 = sshll.u32 [#allocation2], 4
      %s16 = int_to_ptr.vmem [resolvable:$true] %s15
      %21 = dma.hbm_to_vmem [thread:$0]  %s1, 5504, %s16, [#allocation3], 128, 128, 8
    $region9: #{dsn_forward.1} parent=1 // pred_fallthru
      _
    // Predicated region
    $region10: #{dsn_forward.1} parent=1 // pred_check
      _
    $region11: #{dsn_forward.1} parent=1 // pred_check_branch
      %23 = sbr.rel (0) target = $region13
    $region12: #{dsn_forward.1} parent=1 // pred_region
      %24 = dma.done [#allocation3], 5504
    $region13: #{dsn_forward.1} parent=1 // pred_fallthru
      _
    %v25 = vld [vmem:[%s0] sm:$0xff]
    %v26 = vld [vmem:[%s0 + $0x8] sm:$0xff]
    %v27 = vld [vmem:[#allocation2] sm:$0xff]
    %v28 = vld [vmem:[#allocation2 + $0x8] sm:$0xff]
    %v29 = vld [vmem:[#allocation2 + $0x10] sm:$0xff]
    %v30 = vld [vmem:[#allocation2 + $0x18] sm:$0xff]
    %v31 = vld [vmem:[#allocation2 + $0xa0] sm:$0x1]
    %v32 = vlaneseq
    %v33 = vshrl.u32 %v32, 7
    %v34 = vsub.s32 0, %v33
    %v35 = vrot.slane %v31, %v34
    %vm36 = vcmask 261120
    %v38 = vsel %vm36, %v25, 0
    %v41 = vsel %vm36, %v26, 0
    %43 = vmatprep.subr.mxu0 0.0
    %44 = vmatpush1.msra.mxu0 0.0
    %45 = vmatprep.subr.mxu0 0.0
    %46 = vmatpush1.msra.mxu0 0.0
    %47 = vmatprep.subr.mxu0 0.0
    %48 = vmatpush1.msra.mxu0 0.0
    %49 = vmatprep.subr.mxu0 0.0
    %50 = vmatpush1.msra.mxu0 0.0
    %51 = vmatprep.subr.mxu0 0.0
    %52 = vmatpush1.msra.mxu0 0.0
    %53 = vmatprep.subr.mxu0 0.0
    %54 = vmatpush1.msra.mxu0 0.0
    %55 = vmatprep.subr.mxu0 0.0
    %56 = vmatpush1.msra.mxu0 0.0
    %57 = vmatprep.subr.mxu0 0.0
    %58 = vmatpush1.msra.mxu0 0.0
    %59 = vmatprep.subr.mxu0 0.0
    %60 = vmatpush1.msra.mxu0 0.0
    %61 = vmatprep.subr.mxu0 0.0
    %62 = vmatpush1.msra.mxu0 0.0
    %63 = vmatprep.subr.mxu0 0.0
    %64 = vmatpush1.msra.mxu0 0.0
    %65 = vmatprep.subr.mxu0 0.0
    %66 = vmatpush1.msra.mxu0 0.0
    %67 = vmatprep.subr.mxu0 0.0
    %68 = vmatpush1.msra.mxu0 %v30
    %69 = vmatprep.subr.mxu0 0.0
    %70 = vmatpush1.msra.mxu0 %v29
    %71 = vmatprep.subr.mxu0 0.0
    %72 = vmatpush1.msra.mxu0 %v28
    %73 = vmatprep.subr.mxu0 0.0
    %74 = vmatpush1.msra.mxu0 %v27
    %75 = vmatprep.subr.mxu0 0.0
    %76 = vmatpush2.msra.mxu0 0.0
    %77 = vmatprep.subr.mxu0 0.0
    %78 = vmatpush2.msra.mxu0 0.0
    %79 = vmatprep.subr.mxu0 0.0
    %80 = vmatpush2.msra.mxu0 0.0
    %81 = vmatprep.subr.mxu0 0.0
    %82 = vmatpush2.msra.mxu0 0.0
    %83 = vmatprep.subr.mxu0 0.0
    %84 = vmatpush2.msra.mxu0 0.0
    %85 = vmatprep.subr.mxu0 0.0
    %86 = vmatpush2.msra.mxu0 0.0
    %87 = vmatprep.subr.mxu0 0.0
    %88 = vmatpush2.msra.mxu0 0.0
    %89 = vmatprep.subr.mxu0 0.0
    %90 = vmatpush2.msra.mxu0 0.0
    %91 = vmatprep.subr.mxu0 0.0
    %92 = vmatpush2.msra.mxu0 0.0
    %93 = vmatprep.subr.mxu0 0.0
    %94 = vmatpush2.msra.mxu0 0.0
    %95 = vmatprep.subr.mxu0 0.0
    %96 = vmatpush2.msra.mxu0 0.0
    %97 = vmatprep.subr.mxu0 0.0
    %98 = vmatpush2.msra.mxu0 0.0
    %99 = vmatprep.subr.mxu0 0.0
    %100 = vmatpush2.msra.mxu0 0.0
    %101 = vmatprep.subr.mxu0 0.0
    %102 = vmatpush2.msra.mxu0 0.0
    %103 = vmatprep.subr.mxu0 0.0
    %104 = vmatpush2.msra.mxu0 0.0
    %105 = vmatprep.subr.mxu0 0.0
    %106 = vmatpush2.msra.mxu0 0.0
    %107 = vmatprep.mubr.f32.mxu0 0.0
    %108 = vmatmul.mubr.f32.gmra.mxu0 %v38
    %v109 = vpop.f32.mrf.mxu0
    %v110 = vadd.f32 %v35, %v109
    %v111 = vpop.f32.mrf.mxu0
    %112 = vmatprep.mubr.f32.mxu0 0.0
    %113 = vmatmul.mubr.f32.gmra.mxu0 %v41
    %v114 = vpop.f32.mrf.mxu0
    %v115 = vadd.f32 %v35, %v114
    %v116 = vpop.f32.mrf.mxu0
    %117 = vdwg.mxu0
    %v118 = vld [vmem:[#allocation2 + $0x20] sm:$0xff]
    %v119 = vmul.f32 %v110, 0.35355338
    %121 = vrot.lane.b32.xlu0 %v110, 96
    %v122 = vpop.permute.xlu0 %121
    %vm123 = vcmask 64512
    %v125 = vsel %vm123, %v119, 0
    %v127 = vsel %vm123, %v122, 0
    %129 = vmatprep.subr.mxu0 0.0
    %130 = vmatpush1.xpose.msra.mxu0 0.0
    %131 = vmatprep.subr.mxu0 0.0
    %132 = vmatpush1.xpose.msra.mxu0 0.0
    %133 = vmatprep.subr.mxu0 0.0
    %134 = vmatpush1.xpose.msra.mxu0 0.0
    %135 = vmatprep.subr.mxu0 0.0
    %136 = vmatpush1.xpose.msra.mxu0 0.0
    %137 = vmatprep.subr.mxu0 0.0
    %138 = vmatpush1.xpose.msra.mxu0 0.0
    %139 = vmatprep.subr.mxu0 0.0
    %140 = vmatpush1.xpose.msra.mxu0 0.0
    %141 = vmatprep.subr.mxu0 0.0
    %142 = vmatpush1.xpose.msra.mxu0 0.0
    %143 = vmatprep.subr.mxu0 0.0
    %144 = vmatpush1.xpose.msra.mxu0 0.0
    %145 = vmatprep.subr.mxu0 0.0
    %146 = vmatpush1.xpose.msra.mxu0 0.0
    %147 = vmatprep.subr.mxu0 0.0
    %148 = vmatpush1.xpose.msra.mxu0 0.0
    %149 = vmatprep.subr.mxu0 0.0
    %150 = vmatpush1.xpose.msra.mxu0 0.0
    %151 = vmatprep.subr.mxu0 0.0
    %152 = vmatpush1.xpose.msra.mxu0 0.0
    %153 = vmatprep.subr.mxu0 0.0
    %154 = vmatpush1.xpose.msra.mxu0 0.0
    %155 = vmatprep.subr.mxu0 0.0
    %156 = vmatpush1.xpose.msra.mxu0 0.0
    %157 = vmatprep.subr.mxu0 0.0
    %158 = vmatpush1.xpose.msra.mxu0 0.0
    %159 = vmatprep.subr.mxu0 0.0
    %160 = vmatpush1.xpose.msra.mxu0 %v127
    %161 = vmatprep.subr.mxu0 0.0
    %162 = vmatpush2.xpose.msra.mxu0 0.0
    %163 = vmatprep.subr.mxu0 0.0
    %164 = vmatpush2.xpose.msra.mxu0 0.0
    %165 = vmatprep.subr.mxu0 0.0
    %166 = vmatpush2.xpose.msra.mxu0 0.0
    %167 = vmatprep.subr.mxu0 0.0
    %168 = vmatpush2.xpose.msra.mxu0 0.0
    %169 = vmatprep.subr.mxu0 0.0
    %170 = vmatpush2.xpose.msra.mxu0 0.0
    %171 = vmatprep.subr.mxu0 0.0
    %172 = vmatpush2.xpose.msra.mxu0 0.0
    %173 = vmatprep.subr.mxu0 0.0
    %174 = vmatpush2.xpose.msra.mxu0 0.0
    %175 = vmatprep.subr.mxu0 0.0
    %176 = vmatpush2.xpose.msra.mxu0 0.0
    %177 = vmatprep.subr.mxu0 0.0
    %178 = vmatpush2.xpose.msra.mxu0 0.0
    %179 = vmatprep.subr.mxu0 0.0
    %180 = vmatpush2.xpose.msra.mxu0 0.0
    %181 = vmatprep.subr.mxu0 0.0
    %182 = vmatpush2.xpose.msra.mxu0 0.0
    %183 = vmatprep.subr.mxu0 0.0
    %184 = vmatpush2.xpose.msra.mxu0 0.0
    %185 = vmatprep.subr.mxu0 0.0
    %186 = vmatpush2.xpose.msra.mxu0 0.0
    %187 = vmatprep.subr.mxu0 0.0
    %188 = vmatpush2.xpose.msra.mxu0 0.0
    %189 = vmatprep.subr.mxu0 0.0
    %190 = vmatpush2.xpose.msra.mxu0 0.0
    %191 = vmatprep.subr.mxu0 0.0
    %192 = vmatpush2.xpose.msra.mxu0 0.0
    %193 = vmatprep.mubr.f32.mxu0 0.0
    %194 = vmatmul.mubr.f32.gmra.mxu0 %v125
    %v195 = vpop.f32.mrf.mxu0
    %v196 = vadd.f32 0.0, %v195
    %v197 = vpop.f32.mrf.mxu0
    %198 = vdwg.mxu0
    %v199 = vsel %vm123, %v196, -inf
    %200 = vmax.xlane.f32.xlu0 %v199
    %v201 = vpop.xlane.xlu0 %200
    %v202 = vsub.f32 %v196, %v201
    %v203 = vmul.f32 %v202, 1.442695
    %v204 = vpow.pop %v203
    %v205 = vsel %vm123, %v204, 0.0
    %206 = vadd.xlane.f32.xlu0 %v205
    %v207 = vpop.xlane.xlu0 %206
    %v208 = vrcp.pop %v207
    %v209 = vmul.f32 %v204, %v208
    %210 = vrot.lane.b32.xlu0 %v110, 64
    %v211 = vpop.permute.xlu0 %210
    %v214 = vsel %vm123, %v209, 0
    %216 = vmatprep.subr.mxu0 0.0
    %217 = vmatpush1.msra.mxu0 0.0
    %218 = vmatprep.subr.mxu0 0.0
    %219 = vmatpush1.msra.mxu0 0.0
    %220 = vmatprep.subr.mxu0 0.0
    %221 = vmatpush1.msra.mxu0 0.0
    %222 = vmatprep.subr.mxu0 0.0
    %223 = vmatpush1.msra.mxu0 0.0
    %224 = vmatprep.subr.mxu0 0.0
    %225 = vmatpush1.msra.mxu0 0.0
    %226 = vmatprep.subr.mxu0 0.0
    %227 = vmatpush1.msra.mxu0 0.0
    %228 = vmatprep.subr.mxu0 0.0
    %229 = vmatpush1.msra.mxu0 0.0
    %230 = vmatprep.subr.mxu0 0.0
    %231 = vmatpush1.msra.mxu0 0.0
    %232 = vmatprep.subr.mxu0 0.0
    %233 = vmatpush1.msra.mxu0 0.0
    %234 = vmatprep.subr.mxu0 0.0
    %235 = vmatpush1.msra.mxu0 0.0
    %236 = vmatprep.subr.mxu0 0.0
    %237 = vmatpush1.msra.mxu0 0.0
    %238 = vmatprep.subr.mxu0 0.0
    %239 = vmatpush1.msra.mxu0 0.0
    %240 = vmatprep.subr.mxu0 0.0
    %241 = vmatpush1.msra.mxu0 0.0
    %242 = vmatprep.subr.mxu0 0.0
    %243 = vmatpush1.msra.mxu0 0.0
    %244 = vmatprep.subr.mxu0 0.0
    %245 = vmatpush1.msra.mxu0 0.0
    %246 = vmatprep.subr.mxu0 0.0
    %247 = vmatpush1.msra.mxu0 %v211
    %248 = vmatprep.subr.mxu0 0.0
    %249 = vmatpush2.msra.mxu0 0.0
    %250 = vmatprep.subr.mxu0 0.0
    %251 = vmatpush2.msra.mxu0 0.0
    %252 = vmatprep.subr.mxu0 0.0
    %253 = vmatpush2.msra.mxu0 0.0
    %254 = vmatprep.subr.mxu0 0.0
    %255 = vmatpush2.msra.mxu0 0.0
    %256 = vmatprep.subr.mxu0 0.0
    %257 = vmatpush2.msra.mxu0 0.0
    %258 = vmatprep.subr.mxu0 0.0
    %259 = vmatpush2.msra.mxu0 0.0
    %260 = vmatprep.subr.mxu0 0.0
    %261 = vmatpush2.msra.mxu0 0.0
    %262 = vmatprep.subr.mxu0 0.0
    %263 = vmatpush2.msra.mxu0 0.0
    %264 = vmatprep.subr.mxu0 0.0
    %265 = vmatpush2.msra.mxu0 0.0
    %266 = vmatprep.subr.mxu0 0.0
    %267 = vmatpush2.msra.mxu0 0.0
    %268 = vmatprep.subr.mxu0 0.0
    %269 = vmatpush2.msra.mxu0 0.0
    %270 = vmatprep.subr.mxu0 0.0
    %271 = vmatpush2.msra.mxu0 0.0
    %272 = vmatprep.subr.mxu0 0.0
    %273 = vmatpush2.msra.mxu0 0.0
    %274 = vmatprep.subr.mxu0 0.0
    %275 = vmatpush2.msra.mxu0 0.0
    %276 = vmatprep.subr.mxu0 0.0
    %277 = vmatpush2.msra.mxu0 0.0
    %278 = vmatprep.subr.mxu0 0.0
    %279 = vmatpush2.msra.mxu0 0.0
    %280 = vmatprep.mubr.f32.mxu0 0.0
    %281 = vmatmul.mubr.f32.gmra.mxu0 %v214
    %v282 = vpop.f32.mrf.mxu0
    %v283 = vadd.f32 0.0, %v282
    %v284 = vpop.f32.mrf.mxu0
    %285 = vdwg.mxu0
    %v286 = vmul.f32 %v115, 0.35355338
    %288 = vrot.lane.b32.xlu0 %v115, 96
    %v289 = vpop.permute.xlu0 %288
    %v291 = vsel %vm123, %v286, 0
    %v293 = vsel %vm123, %v289, 0
    %295 = vmatprep.subr.mxu0 0.0
    %296 = vmatpush1.xpose.msra.mxu0 0.0
    %297 = vmatprep.subr.mxu0 0.0
    %298 = vmatpush1.xpose.msra.mxu0 0.0
    %299 = vmatprep.subr.mxu0 0.0
    %300 = vmatpush1.xpose.msra.mxu0 0.0
    %301 = vmatprep.subr.mxu0 0.0
    %302 = vmatpush1.xpose.msra.mxu0 0.0
    %303 = vmatprep.subr.mxu0 0.0
    %304 = vmatpush1.xpose.msra.mxu0 0.0
    %305 = vmatprep.subr.mxu0 0.0
    %306 = vmatpush1.xpose.msra.mxu0 0.0
    %307 = vmatprep.subr.mxu0 0.0
    %308 = vmatpush1.xpose.msra.mxu0 0.0
    %309 = vmatprep.subr.mxu0 0.0
    %310 = vmatpush1.xpose.msra.mxu0 0.0
    %311 = vmatprep.subr.mxu0 0.0
    %312 = vmatpush1.xpose.msra.mxu0 0.0
    %313 = vmatprep.subr.mxu0 0.0
    %314 = vmatpush1.xpose.msra.mxu0 0.0
    %315 = vmatprep.subr.mxu0 0.0
    %316 = vmatpush1.xpose.msra.mxu0 0.0
    %317 = vmatprep.subr.mxu0 0.0
    %318 = vmatpush1.xpose.msra.mxu0 0.0
    %319 = vmatprep.subr.mxu0 0.0
    %320 = vmatpush1.xpose.msra.mxu0 0.0
    %321 = vmatprep.subr.mxu0 0.0
    %322 = vmatpush1.xpose.msra.mxu0 0.0
    %323 = vmatprep.subr.mxu0 0.0
    %324 = vmatpush1.xpose.msra.mxu0 0.0
    %325 = vmatprep.subr.mxu0 0.0
    %326 = vmatpush1.xpose.msra.mxu0 %v293
    %327 = vmatprep.subr.mxu0 0.0
    %328 = vmatpush2.xpose.msra.mxu0 0.0
    %329 = vmatprep.subr.mxu0 0.0
    %330 = vmatpush2.xpose.msra.mxu0 0.0
    %331 = vmatprep.subr.mxu0 0.0
    %332 = vmatpush2.xpose.msra.mxu0 0.0
    %333 = vmatprep.subr.mxu0 0.0
    %334 = vmatpush2.xpose.msra.mxu0 0.0
    %335 = vmatprep.subr.mxu0 0.0
    %336 = vmatpush2.xpose.msra.mxu0 0.0
    %337 = vmatprep.subr.mxu0 0.0
    %338 = vmatpush2.xpose.msra.mxu0 0.0
    %339 = vmatprep.subr.mxu0 0.0
    %340 = vmatpush2.xpose.msra.mxu0 0.0
    %341 = vmatprep.subr.mxu0 0.0
    %342 = vmatpush2.xpose.msra.mxu0 0.0
    %343 = vmatprep.subr.mxu0 0.0
    %344 = vmatpush2.xpose.msra.mxu0 0.0
    %345 = vmatprep.subr.mxu0 0.0
    %346 = vmatpush2.xpose.msra.mxu0 0.0
    %347 = vmatprep.subr.mxu0 0.0
    %348 = vmatpush2.xpose.msra.mxu0 0.0
    %349 = vmatprep.subr.mxu0 0.0
    %350 = vmatpush2.xpose.msra.mxu0 0.0
    %351 = vmatprep.subr.mxu0 0.0
    %352 = vmatpush2.xpose.msra.mxu0 0.0
    %353 = vmatprep.subr.mxu0 0.0
    %354 = vmatpush2.xpose.msra.mxu0 0.0
    %355 = vmatprep.subr.mxu0 0.0
    %356 = vmatpush2.xpose.msra.mxu0 0.0
    %357 = vmatprep.subr.mxu0 0.0
    %358 = vmatpush2.xpose.msra.mxu0 0.0
    %359 = vmatprep.mubr.f32.mxu0 0.0
    %360 = vmatmul.mubr.f32.gmra.mxu0 %v291
    %v361 = vpop.f32.mrf.mxu0
    %v362 = vadd.f32 0.0, %v361
    %v363 = vpop.f32.mrf.mxu0
    %364 = vdwg.mxu0
    %v365 = vsel %vm123, %v362, -inf
    %366 = vmax.xlane.f32.xlu0 %v365
    %v367 = vpop.xlane.xlu0 %366
    %v368 = vsub.f32 %v362, %v367
    %v369 = vmul.f32 %v368, 1.442695
    %v370 = vpow.pop %v369
    %v371 = vsel %vm123, %v370, 0.0
    %372 = vadd.xlane.f32.xlu0 %v371
    %v373 = vpop.xlane.xlu0 %372
    %v374 = vrcp.pop %v373
    %v375 = vmul.f32 %v370, %v374
    %376 = vrot.lane.b32.xlu0 %v115, 64
    %v377 = vpop.permute.xlu0 %376
    %v380 = vsel %vm123, %v375, 0
    %382 = vmatprep.subr.mxu0 0.0
    %383 = vmatpush1.msra.mxu0 0.0
    %384 = vmatprep.subr.mxu0 0.0
    %385 = vmatpush1.msra.mxu0 0.0
    %386 = vmatprep.subr.mxu0 0.0
    %387 = vmatpush1.msra.mxu0 0.0
    %388 = vmatprep.subr.mxu0 0.0
    %389 = vmatpush1.msra.mxu0 0.0
    %390 = vmatprep.subr.mxu0 0.0
    %391 = vmatpush1.msra.mxu0 0.0
    %392 = vmatprep.subr.mxu0 0.0
    %393 = vmatpush1.msra.mxu0 0.0
    %394 = vmatprep.subr.mxu0 0.0
    %395 = vmatpush1.msra.mxu0 0.0
    %396 = vmatprep.subr.mxu0 0.0
    %397 = vmatpush1.msra.mxu0 0.0
    %398 = vmatprep.subr.mxu0 0.0
    %399 = vmatpush1.msra.mxu0 0.0
    %400 = vmatprep.subr.mxu0 0.0
    %401 = vmatpush1.msra.mxu0 0.0
    %402 = vmatprep.subr.mxu0 0.0
    %403 = vmatpush1.msra.mxu0 0.0
    %404 = vmatprep.subr.mxu0 0.0
    %405 = vmatpush1.msra.mxu0 0.0
    %406 = vmatprep.subr.mxu0 0.0
    %407 = vmatpush1.msra.mxu0 0.0
    %408 = vmatprep.subr.mxu0 0.0
    %409 = vmatpush1.msra.mxu0 0.0
    %410 = vmatprep.subr.mxu0 0.0
    %411 = vmatpush1.msra.mxu0 0.0
    %412 = vmatprep.subr.mxu0 0.0
    %413 = vmatpush1.msra.mxu0 %v377
    %414 = vmatprep.subr.mxu0 0.0
    %415 = vmatpush2.msra.mxu0 0.0
    %416 = vmatprep.subr.mxu0 0.0
    %417 = vmatpush2.msra.mxu0 0.0
    %418 = vmatprep.subr.mxu0 0.0
    %419 = vmatpush2.msra.mxu0 0.0
    %420 = vmatprep.subr.mxu0 0.0
    %421 = vmatpush2.msra.mxu0 0.0
    %422 = vmatprep.subr.mxu0 0.0
    %423 = vmatpush2.msra.mxu0 0.0
    %424 = vmatprep.subr.mxu0 0.0
    %425 = vmatpush2.msra.mxu0 0.0
    %426 = vmatprep.subr.mxu0 0.0
    %427 = vmatpush2.msra.mxu0 0.0
    %428 = vmatprep.subr.mxu0 0.0
    %429 = vmatpush2.msra.mxu0 0.0
    %430 = vmatprep.subr.mxu0 0.0
    %431 = vmatpush2.msra.mxu0 0.0
    %432 = vmatprep.subr.mxu0 0.0
    %433 = vmatpush2.msra.mxu0 0.0
    %434 = vmatprep.subr.mxu0 0.0
    %435 = vmatpush2.msra.mxu0 0.0
    %436 = vmatprep.subr.mxu0 0.0
    %437 = vmatpush2.msra.mxu0 0.0
    %438 = vmatprep.subr.mxu0 0.0
    %439 = vmatpush2.msra.mxu0 0.0
    %440 = vmatprep.subr.mxu0 0.0
    %441 = vmatpush2.msra.mxu0 0.0
    %442 = vmatprep.subr.mxu0 0.0
    %443 = vmatpush2.msra.mxu0 0.0
    %444 = vmatprep.subr.mxu0 0.0
    %445 = vmatpush2.msra.mxu0 0.0
    %446 = vmatprep.mubr.f32.mxu0 0.0
    %447 = vmatmul.mubr.f32.gmra.mxu0 %v380
    %v448 = vpop.f32.mrf.mxu0
    %v449 = vadd.f32 0.0, %v448
    %v450 = vpop.f32.mrf.mxu0
    %451 = vdwg.mxu0
    %v452 = vld [vmem:[#allocation2 + $0x28] sm:$0xff]
    %453 = vrot.lane.b32.xlu0 %v119, 120
    %v454 = vpop.permute.xlu0 %453
    %455 = vrot.lane.b32.xlu0 %v110, 88
    %v456 = vpop.permute.xlu0 %455
    %v457 = vsel %vm123, %v454, 0
    %v459 = vsel %vm123, %v456, 0
    %461 = vmatprep.subr.mxu0 0.0
    %462 = vmatpush1.xpose.msra.mxu0 0.0
    %463 = vmatprep.subr.mxu0 0.0
    %464 = vmatpush1.xpose.msra.mxu0 0.0
    %465 = vmatprep.subr.mxu0 0.0
    %466 = vmatpush1.xpose.msra.mxu0 0.0
    %467 = vmatprep.subr.mxu0 0.0
    %468 = vmatpush1.xpose.msra.mxu0 0.0
    %469 = vmatprep.subr.mxu0 0.0
    %470 = vmatpush1.xpose.msra.mxu0 0.0
    %471 = vmatprep.subr.mxu0 0.0
    %472 = vmatpush1.xpose.msra.mxu0 0.0
    %473 = vmatprep.subr.mxu0 0.0
    %474 = vmatpush1.xpose.msra.mxu0 0.0
    %475 = vmatprep.subr.mxu0 0.0
    %476 = vmatpush1.xpose.msra.mxu0 0.0
    %477 = vmatprep.subr.mxu0 0.0
    %478 = vmatpush1.xpose.msra.mxu0 0.0
    %479 = vmatprep.subr.mxu0 0.0
    %480 = vmatpush1.xpose.msra.mxu0 0.0
    %481 = vmatprep.subr.mxu0 0.0
    %482 = vmatpush1.xpose.msra.mxu0 0.0
    %483 = vmatprep.subr.mxu0 0.0
    %484 = vmatpush1.xpose.msra.mxu0 0.0
    %485 = vmatprep.subr.mxu0 0.0
    %486 = vmatpush1.xpose.msra.mxu0 0.0
    %487 = vmatprep.subr.mxu0 0.0
    %488 = vmatpush1.xpose.msra.mxu0 0.0
    %489 = vmatprep.subr.mxu0 0.0
    %490 = vmatpush1.xpose.msra.mxu0 0.0
    %491 = vmatprep.subr.mxu0 0.0
    %492 = vmatpush1.xpose.msra.mxu0 %v459
    %493 = vmatprep.subr.mxu0 0.0
    %494 = vmatpush2.xpose.msra.mxu0 0.0
    %495 = vmatprep.subr.mxu0 0.0
    %496 = vmatpush2.xpose.msra.mxu0 0.0
    %497 = vmatprep.subr.mxu0 0.0
    %498 = vmatpush2.xpose.msra.mxu0 0.0
    %499 = vmatprep.subr.mxu0 0.0
    %500 = vmatpush2.xpose.msra.mxu0 0.0
    %501 = vmatprep.subr.mxu0 0.0
    %502 = vmatpush2.xpose.msra.mxu0 0.0
    %503 = vmatprep.subr.mxu0 0.0
    %504 = vmatpush2.xpose.msra.mxu0 0.0
    %505 = vmatprep.subr.mxu0 0.0
    %506 = vmatpush2.xpose.msra.mxu0 0.0
    %507 = vmatprep.subr.mxu0 0.0
    %508 = vmatpush2.xpose.msra.mxu0 0.0
    %509 = vmatprep.subr.mxu0 0.0
    %510 = vmatpush2.xpose.msra.mxu0 0.0
    %511 = vmatprep.subr.mxu0 0.0
    %512 = vmatpush2.xpose.msra.mxu0 0.0
    %513 = vmatprep.subr.mxu0 0.0
    %514 = vmatpush2.xpose.msra.mxu0 0.0
    %515 = vmatprep.subr.mxu0 0.0
    %516 = vmatpush2.xpose.msra.mxu0 0.0
    %517 = vmatprep.subr.mxu0 0.0
    %518 = vmatpush2.xpose.msra.mxu0 0.0
    %519 = vmatprep.subr.mxu0 0.0
    %520 = vmatpush2.xpose.msra.mxu0 0.0
    %521 = vmatprep.subr.mxu0 0.0
    %522 = vmatpush2.xpose.msra.mxu0 0.0
    %523 = vmatprep.subr.mxu0 0.0
    %524 = vmatpush2.xpose.msra.mxu0 0.0
    %525 = vmatprep.mubr.f32.mxu0 0.0
    %526 = vmatmul.mubr.f32.gmra.mxu0 %v457
    %v527 = vpop.f32.mrf.mxu0
    %v528 = vadd.f32 0.0, %v527
    %v529 = vpop.f32.mrf.mxu0
    %530 = vdwg.mxu0
    %v531 = vsel %vm123, %v528, -inf
    %532 = vmax.xlane.f32.xlu0 %v531
    %v533 = vpop.xlane.xlu0 %532
    %v534 = vsub.f32 %v528, %v533
    %v535 = vmul.f32 %v534, 1.442695
    %v536 = vpow.pop %v535
    %v537 = vsel %vm123, %v536, 0.0
    %538 = vadd.xlane.f32.xlu0 %v537
    %v539 = vpop.xlane.xlu0 %538
    %v540 = vrcp.pop %v539
    %v541 = vmul.f32 %v536, %v540
    %542 = vrot.lane.b32.xlu0 %v110, 56
    %v543 = vpop.permute.xlu0 %542
    %v546 = vsel %vm123, %v541, 0
    %548 = vmatprep.subr.mxu0 0.0
    %549 = vmatpush1.msra.mxu0 0.0
    %550 = vmatprep.subr.mxu0 0.0
    %551 = vmatpush1.msra.mxu0 0.0
    %552 = vmatprep.subr.mxu0 0.0
    %553 = vmatpush1.msra.mxu0 0.0
    %554 = vmatprep.subr.mxu0 0.0
    %555 = vmatpush1.msra.mxu0 0.0
    %556 = vmatprep.subr.mxu0 0.0
    %557 = vmatpush1.msra.mxu0 0.0
    %558 = vmatprep.subr.mxu0 0.0
    %559 = vmatpush1.msra.mxu0 0.0
    %560 = vmatprep.subr.mxu0 0.0
    %561 = vmatpush1.msra.mxu0 0.0
    %562 = vmatprep.subr.mxu0 0.0
    %563 = vmatpush1.msra.mxu0 0.0
    %564 = vmatprep.subr.mxu0 0.0
    %565 = vmatpush1.msra.mxu0 0.0
    %566 = vmatprep.subr.mxu0 0.0
    %567 = vmatpush1.msra.mxu0 0.0
    %568 = vmatprep.subr.mxu0 0.0
    %569 = vmatpush1.msra.mxu0 0.0
    %570 = vmatprep.subr.mxu0 0.0
    %571 = vmatpush1.msra.mxu0 0.0
    %572 = vmatprep.subr.mxu0 0.0
    %573 = vmatpush1.msra.mxu0 0.0
    %574 = vmatprep.subr.mxu0 0.0
    %575 = vmatpush1.msra.mxu0 0.0
    %576 = vmatprep.subr.mxu0 0.0
    %577 = vmatpush1.msra.mxu0 0.0
    %578 = vmatprep.subr.mxu0 0.0
    %579 = vmatpush1.msra.mxu0 %v543
    %580 = vmatprep.subr.mxu0 0.0
    %581 = vmatpush2.msra.mxu0 0.0
    %582 = vmatprep.subr.mxu0 0.0
    %583 = vmatpush2.msra.mxu0 0.0
    %584 = vmatprep.subr.mxu0 0.0
    %585 = vmatpush2.msra.mxu0 0.0
    %586 = vmatprep.subr.mxu0 0.0
    %587 = vmatpush2.msra.mxu0 0.0
    %588 = vmatprep.subr.mxu0 0.0
    %589 = vmatpush2.msra.mxu0 0.0
    %590 = vmatprep.subr.mxu0 0.0
    %591 = vmatpush2.msra.mxu0 0.0
    %592 = vmatprep.subr.mxu0 0.0
    %593 = vmatpush2.msra.mxu0 0.0
    %594 = vmatprep.subr.mxu0 0.0
    %595 = vmatpush2.msra.mxu0 0.0
    %596 = vmatprep.subr.mxu0 0.0
    %597 = vmatpush2.msra.mxu0 0.0
    %598 = vmatprep.subr.mxu0 0.0
    %599 = vmatpush2.msra.mxu0 0.0
    %600 = vmatprep.subr.mxu0 0.0
    %601 = vmatpush2.msra.mxu0 0.0
    %602 = vmatprep.subr.mxu0 0.0
    %603 = vmatpush2.msra.mxu0 0.0
    %604 = vmatprep.subr.mxu0 0.0
    %605 = vmatpush2.msra.mxu0 0.0
    %606 = vmatprep.subr.mxu0 0.0
    %607 = vmatpush2.msra.mxu0 0.0
    %608 = vmatprep.subr.mxu0 0.0
    %609 = vmatpush2.msra.mxu0 0.0
    %610 = vmatprep.subr.mxu0 0.0
    %611 = vmatpush2.msra.mxu0 0.0
    %612 = vmatprep.mubr.f32.mxu0 0.0
    %613 = vmatmul.mubr.f32.gmra.mxu0 %v546
    %v614 = vpop.f32.mrf.mxu0
    %v615 = vadd.f32 0.0, %v614
    %v616 = vpop.f32.mrf.mxu0
    %617 = vdwg.mxu0
    %618 = vrot.lane.b32.xlu0 %v286, 120
    %v619 = vpop.permute.xlu0 %618
    %620 = vrot.lane.b32.xlu0 %v115, 88
    %v621 = vpop.permute.xlu0 %620
    %v622 = vsel %vm123, %v619, 0
    %v624 = vsel %vm123, %v621, 0
    %626 = vmatprep.subr.mxu0 0.0
    %627 = vmatpush1.xpose.msra.mxu0 0.0
    %628 = vmatprep.subr.mxu0 0.0
    %629 = vmatpush1.xpose.msra.mxu0 0.0
    %630 = vmatprep.subr.mxu0 0.0
    %631 = vmatpush1.xpose.msra.mxu0 0.0
    %632 = vmatprep.subr.mxu0 0.0
    %633 = vmatpush1.xpose.msra.mxu0 0.0
    %634 = vmatprep.subr.mxu0 0.0
    %635 = vmatpush1.xpose.msra.mxu0 0.0
    %636 = vmatprep.subr.mxu0 0.0
    %637 = vmatpush1.xpose.msra.mxu0 0.0
    %638 = vmatprep.subr.mxu0 0.0
    %639 = vmatpush1.xpose.msra.mxu0 0.0
    %640 = vmatprep.subr.mxu0 0.0
    %641 = vmatpush1.xpose.msra.mxu0 0.0
    %642 = vmatprep.subr.mxu0 0.0
    %643 = vmatpush1.xpose.msra.mxu0 0.0
    %644 = vmatprep.subr.mxu0 0.0
    %645 = vmatpush1.xpose.msra.mxu0 0.0
    %646 = vmatprep.subr.mxu0 0.0
    %647 = vmatpush1.xpose.msra.mxu0 0.0
    %648 = vmatprep.subr.mxu0 0.0
    %649 = vmatpush1.xpose.msra.mxu0 0.0
    %650 = vmatprep.subr.mxu0 0.0
    %651 = vmatpush1.xpose.msra.mxu0 0.0
    %652 = vmatprep.subr.mxu0 0.0
    %653 = vmatpush1.xpose.msra.mxu0 0.0
    %654 = vmatprep.subr.mxu0 0.0
    %655 = vmatpush1.xpose.msra.mxu0 0.0
    %656 = vmatprep.subr.mxu0 0.0
    %657 = vmatpush1.xpose.msra.mxu0 %v624
    %658 = vmatprep.subr.mxu0 0.0
    %659 = vmatpush2.xpose.msra.mxu0 0.0
    %660 = vmatprep.subr.mxu0 0.0
    %661 = vmatpush2.xpose.msra.mxu0 0.0
    %662 = vmatprep.subr.mxu0 0.0
    %663 = vmatpush2.xpose.msra.mxu0 0.0
    %664 = vmatprep.subr.mxu0 0.0
    %665 = vmatpush2.xpose.msra.mxu0 0.0
    %666 = vmatprep.subr.mxu0 0.0
    %667 = vmatpush2.xpose.msra.mxu0 0.0
    %668 = vmatprep.subr.mxu0 0.0
    %669 = vmatpush2.xpose.msra.mxu0 0.0
    %670 = vmatprep.subr.mxu0 0.0
    %671 = vmatpush2.xpose.msra.mxu0 0.0
    %672 = vmatprep.subr.mxu0 0.0
    %673 = vmatpush2.xpose.msra.mxu0 0.0
    %674 = vmatprep.subr.mxu0 0.0
    %675 = vmatpush2.xpose.msra.mxu0 0.0
    %676 = vmatprep.subr.mxu0 0.0
    %677 = vmatpush2.xpose.msra.mxu0 0.0
    %678 = vmatprep.subr.mxu0 0.0
    %679 = vmatpush2.xpose.msra.mxu0 0.0
    %680 = vmatprep.subr.mxu0 0.0
    %681 = vmatpush2.xpose.msra.mxu0 0.0
    %682 = vmatprep.subr.mxu0 0.0
    %683 = vmatpush2.xpose.msra.mxu0 0.0
    %684 = vmatprep.subr.mxu0 0.0
    %685 = vmatpush2.xpose.msra.mxu0 0.0
    %686 = vmatprep.subr.mxu0 0.0
    %687 = vmatpush2.xpose.msra.mxu0 0.0
    %688 = vmatprep.subr.mxu0 0.0
    %689 = vmatpush2.xpose.msra.mxu0 0.0
    %690 = vmatprep.mubr.f32.mxu0 0.0
    %691 = vmatmul.mubr.f32.gmra.mxu0 %v622
    %v692 = vpop.f32.mrf.mxu0
    %v693 = vadd.f32 0.0, %v692
    %v694 = vpop.f32.mrf.mxu0
    %695 = vdwg.mxu0
    %v696 = vsel %vm123, %v693, -inf
    %697 = vmax.xlane.f32.xlu0 %v696
    %v698 = vpop.xlane.xlu0 %697
    %v699 = vsub.f32 %v693, %v698
    %v700 = vmul.f32 %v699, 1.442695
    %v701 = vpow.pop %v700
    %v702 = vsel %vm123, %v701, 0.0
    %703 = vadd.xlane.f32.xlu0 %v702
    %v704 = vpop.xlane.xlu0 %703
    %v705 = vrcp.pop %v704
    %v706 = vmul.f32 %v701, %v705
    %707 = vrot.lane.b32.xlu0 %v115, 56
    %v708 = vpop.permute.xlu0 %707
    %v711 = vsel %vm123, %v706, 0
    %713 = vmatprep.subr.mxu0 0.0
    %714 = vmatpush1.msra.mxu0 0.0
    %715 = vmatprep.subr.mxu0 0.0
    %716 = vmatpush1.msra.mxu0 0.0
    %717 = vmatprep.subr.mxu0 0.0
    %718 = vmatpush1.msra.mxu0 0.0
    %719 = vmatprep.subr.mxu0 0.0
    %720 = vmatpush1.msra.mxu0 0.0
    %721 = vmatprep.subr.mxu0 0.0
    %722 = vmatpush1.msra.mxu0 0.0
    %723 = vmatprep.subr.mxu0 0.0
    %724 = vmatpush1.msra.mxu0 0.0
    %725 = vmatprep.subr.mxu0 0.0
    %726 = vmatpush1.msra.mxu0 0.0
    %727 = vmatprep.subr.mxu0 0.0
    %728 = vmatpush1.msra.mxu0 0.0
    %729 = vmatprep.subr.mxu0 0.0
    %730 = vmatpush1.msra.mxu0 0.0
    %731 = vmatprep.subr.mxu0 0.0
    %732 = vmatpush1.msra.mxu0 0.0
    %733 = vmatprep.subr.mxu0 0.0
    %734 = vmatpush1.msra.mxu0 0.0
    %735 = vmatprep.subr.mxu0 0.0
    %736 = vmatpush1.msra.mxu0 0.0
    %737 = vmatprep.subr.mxu0 0.0
    %738 = vmatpush1.msra.mxu0 0.0
    %739 = vmatprep.subr.mxu0 0.0
    %740 = vmatpush1.msra.mxu0 0.0
    %741 = vmatprep.subr.mxu0 0.0
    %742 = vmatpush1.msra.mxu0 0.0
    %743 = vmatprep.subr.mxu0 0.0
    %744 = vmatpush1.msra.mxu0 %v708
    %745 = vmatprep.subr.mxu0 0.0
    %746 = vmatpush2.msra.mxu0 0.0
    %747 = vmatprep.subr.mxu0 0.0
    %748 = vmatpush2.msra.mxu0 0.0
    %749 = vmatprep.subr.mxu0 0.0
    %750 = vmatpush2.msra.mxu0 0.0
    %751 = vmatprep.subr.mxu0 0.0
    %752 = vmatpush2.msra.mxu0 0.0
    %753 = vmatprep.subr.mxu0 0.0
    %754 = vmatpush2.msra.mxu0 0.0
    %755 = vmatprep.subr.mxu0 0.0
    %756 = vmatpush2.msra.mxu0 0.0
    %757 = vmatprep.subr.mxu0 0.0
    %758 = vmatpush2.msra.mxu0 0.0
    %759 = vmatprep.subr.mxu0 0.0
    %760 = vmatpush2.msra.mxu0 0.0
    %761 = vmatprep.subr.mxu0 0.0
    %762 = vmatpush2.msra.mxu0 0.0
    %763 = vmatprep.subr.mxu0 0.0
    %764 = vmatpush2.msra.mxu0 0.0
    %765 = vmatprep.subr.mxu0 0.0
    %766 = vmatpush2.msra.mxu0 0.0
    %767 = vmatprep.subr.mxu0 0.0
    %768 = vmatpush2.msra.mxu0 0.0
    %769 = vmatprep.subr.mxu0 0.0
    %770 = vmatpush2.msra.mxu0 0.0
    %771 = vmatprep.subr.mxu0 0.0
    %772 = vmatpush2.msra.mxu0 0.0
    %773 = vmatprep.subr.mxu0 0.0
    %774 = vmatpush2.msra.mxu0 0.0
    %775 = vmatprep.subr.mxu0 0.0
    %776 = vmatpush2.msra.mxu0 0.0
    %777 = vmatprep.mubr.f32.mxu0 0.0
    %778 = vmatmul.mubr.f32.gmra.mxu0 %v711
    %v779 = vpop.f32.mrf.mxu0
    %v780 = vadd.f32 0.0, %v779
    %v781 = vpop.f32.mrf.mxu0
    %782 = vdwg.mxu0
    %v784 = vsel %vm123, %v615, 0
    %v787 = vsel %vm123, %v780, 0
    %789 = vmatprep.subr.mxu0 0.0
    %790 = vmatpush1.msra.mxu0 0.0
    %791 = vmatprep.subr.mxu0 0.0
    %792 = vmatpush1.msra.mxu0 0.0
    %793 = vmatprep.subr.mxu0 0.0
    %794 = vmatpush1.msra.mxu0 0.0
    %795 = vmatprep.subr.mxu0 0.0
    %796 = vmatpush1.msra.mxu0 0.0
    %797 = vmatprep.subr.mxu0 0.0
    %798 = vmatpush1.msra.mxu0 0.0
    %799 = vmatprep.subr.mxu0 0.0
    %800 = vmatpush1.msra.mxu0 0.0
    %801 = vmatprep.subr.mxu0 0.0
    %802 = vmatpush1.msra.mxu0 0.0
    %803 = vmatprep.subr.mxu0 0.0
    %804 = vmatpush1.msra.mxu0 0.0
    %805 = vmatprep.subr.mxu0 0.0
    %806 = vmatpush1.msra.mxu0 0.0
    %807 = vmatprep.subr.mxu0 0.0
    %808 = vmatpush1.msra.mxu0 0.0
    %809 = vmatprep.subr.mxu0 0.0
    %810 = vmatpush1.msra.mxu0 0.0
    %811 = vmatprep.subr.mxu0 0.0
    %812 = vmatpush1.msra.mxu0 0.0
    %813 = vmatprep.subr.mxu0 0.0
    %814 = vmatpush1.msra.mxu0 0.0
    %815 = vmatprep.subr.mxu0 0.0
    %816 = vmatpush1.msra.mxu0 0.0
    %817 = vmatprep.subr.mxu0 0.0
    %818 = vmatpush1.msra.mxu0 0.0
    %819 = vmatprep.subr.mxu0 0.0
    %820 = vmatpush1.msra.mxu0 %v452
    %821 = vmatprep.subr.mxu0 0.0
    %822 = vmatpush2.msra.mxu0 0.0
    %823 = vmatprep.subr.mxu0 0.0
    %824 = vmatpush2.msra.mxu0 0.0
    %825 = vmatprep.subr.mxu0 0.0
    %826 = vmatpush2.msra.mxu0 0.0
    %827 = vmatprep.subr.mxu0 0.0
    %828 = vmatpush2.msra.mxu0 0.0
    %829 = vmatprep.subr.mxu0 0.0
    %830 = vmatpush2.msra.mxu0 0.0
    %831 = vmatprep.subr.mxu0 0.0
    %832 = vmatpush2.msra.mxu0 0.0
    %833 = vmatprep.subr.mxu0 0.0
    %834 = vmatpush2.msra.mxu0 0.0
    %835 = vmatprep.subr.mxu0 0.0
    %836 = vmatpush2.msra.mxu0 0.0
    %837 = vmatprep.subr.mxu0 0.0
    %838 = vmatpush2.msra.mxu0 0.0
    %839 = vmatprep.subr.mxu0 0.0
    %840 = vmatpush2.msra.mxu0 0.0
    %841 = vmatprep.subr.mxu0 0.0
    %842 = vmatpush2.msra.mxu0 0.0
    %843 = vmatprep.subr.mxu0 0.0
    %844 = vmatpush2.msra.mxu0 0.0
    %845 = vmatprep.subr.mxu0 0.0
    %846 = vmatpush2.msra.mxu0 0.0
    %847 = vmatprep.subr.mxu0 0.0
    %848 = vmatpush2.msra.mxu0 0.0
    %849 = vmatprep.subr.mxu0 0.0
    %850 = vmatpush2.msra.mxu0 0.0
    %851 = vmatprep.subr.mxu0 0.0
    %852 = vmatpush2.msra.mxu0 0.0
    %853 = vmatprep.mubr.f32.mxu0 0.0
    %854 = vmatmul.mubr.f32.gmra.mxu0 %v784
    %v855 = vpop.f32.mrf.mxu0
    %v856 = vadd.f32 0.0, %v855
    %v857 = vpop.f32.mrf.mxu0
    %858 = vmatprep.mubr.f32.mxu0 0.0
    %859 = vmatmul.mubr.f32.gmra.mxu0 %v787
    %v860 = vpop.f32.mrf.mxu0
    %v861 = vadd.f32 0.0, %v860
    %v862 = vpop.f32.mrf.mxu0
    %863 = vdwg.mxu0
    %v865 = vsel %vm123, %v283, 0
    %v868 = vsel %vm123, %v449, 0
    %870 = vmatprep.subr.mxu0 0.0
    %871 = vmatpush1.msra.mxu0 0.0
    %872 = vmatprep.subr.mxu0 0.0
    %873 = vmatpush1.msra.mxu0 0.0
    %874 = vmatprep.subr.mxu0 0.0
    %875 = vmatpush1.msra.mxu0 0.0
    %876 = vmatprep.subr.mxu0 0.0
    %877 = vmatpush1.msra.mxu0 0.0
    %878 = vmatprep.subr.mxu0 0.0
    %879 = vmatpush1.msra.mxu0 0.0
    %880 = vmatprep.subr.mxu0 0.0
    %881 = vmatpush1.msra.mxu0 0.0
    %882 = vmatprep.subr.mxu0 0.0
    %883 = vmatpush1.msra.mxu0 0.0
    %884 = vmatprep.subr.mxu0 0.0
    %885 = vmatpush1.msra.mxu0 0.0
    %886 = vmatprep.subr.mxu0 0.0
    %887 = vmatpush1.msra.mxu0 0.0
    %888 = vmatprep.subr.mxu0 0.0
    %889 = vmatpush1.msra.mxu0 0.0
    %890 = vmatprep.subr.mxu0 0.0
    %891 = vmatpush1.msra.mxu0 0.0
    %892 = vmatprep.subr.mxu0 0.0
    %893 = vmatpush1.msra.mxu0 0.0
    %894 = vmatprep.subr.mxu0 0.0
    %895 = vmatpush1.msra.mxu0 0.0
    %896 = vmatprep.subr.mxu0 0.0
    %897 = vmatpush1.msra.mxu0 0.0
    %898 = vmatprep.subr.mxu0 0.0
    %899 = vmatpush1.msra.mxu0 0.0
    %900 = vmatprep.subr.mxu0 0.0
    %901 = vmatpush1.msra.mxu0 %v118
    %902 = vmatprep.subr.mxu0 0.0
    %903 = vmatpush2.msra.mxu0 0.0
    %904 = vmatprep.subr.mxu0 0.0
    %905 = vmatpush2.msra.mxu0 0.0
    %906 = vmatprep.subr.mxu0 0.0
    %907 = vmatpush2.msra.mxu0 0.0
    %908 = vmatprep.subr.mxu0 0.0
    %909 = vmatpush2.msra.mxu0 0.0
    %910 = vmatprep.subr.mxu0 0.0
    %911 = vmatpush2.msra.mxu0 0.0
    %912 = vmatprep.subr.mxu0 0.0
    %913 = vmatpush2.msra.mxu0 0.0
    %914 = vmatprep.subr.mxu0 0.0
    %915 = vmatpush2.msra.mxu0 0.0
    %916 = vmatprep.subr.mxu0 0.0
    %917 = vmatpush2.msra.mxu0 0.0
    %918 = vmatprep.subr.mxu0 0.0
    %919 = vmatpush2.msra.mxu0 0.0
    %920 = vmatprep.subr.mxu0 0.0
    %921 = vmatpush2.msra.mxu0 0.0
    %922 = vmatprep.subr.mxu0 0.0
    %923 = vmatpush2.msra.mxu0 0.0
    %924 = vmatprep.subr.mxu0 0.0
    %925 = vmatpush2.msra.mxu0 0.0
    %926 = vmatprep.subr.mxu0 0.0
    %927 = vmatpush2.msra.mxu0 0.0
    %928 = vmatprep.subr.mxu0 0.0
    %929 = vmatpush2.msra.mxu0 0.0
    %930 = vmatprep.subr.mxu0 0.0
    %931 = vmatpush2.msra.mxu0 0.0
    %932 = vmatprep.subr.mxu0 0.0
    %933 = vmatpush2.msra.mxu0 0.0
    %934 = vmatprep.mubr.f32.mxu0 0.0
    %935 = vmatmul.mubr.f32.gmra.mxu0 %v865
    %v936 = vpop.f32.mrf.mxu0
    %v937 = vadd.f32 %v856, %v936
    %v938 = vpop.f32.mrf.mxu0
    %939 = vmatprep.mubr.f32.mxu0 0.0
    %940 = vmatmul.mubr.f32.gmra.mxu0 %v868
    %v941 = vpop.f32.mrf.mxu0
    %v942 = vadd.f32 %v861, %v941
    %v943 = vpop.f32.mrf.mxu0
    %944 = vdwg.mxu0
    %v945 = vld [vmem:[#allocation2 + $0x30] sm:$0xff]
    %946 = vrot.lane.b32.xlu0 %v119, 112
    %v947 = vpop.permute.xlu0 %946
    %948 = vrot.lane.b32.xlu0 %v110, 80
    %v949 = vpop.permute.xlu0 %948
    %v950 = vsel %vm123, %v947, 0
    %v952 = vsel %vm123, %v949, 0
    %954 = vmatprep.subr.mxu0 0.0
    %955 = vmatpush1.xpose.msra.mxu0 0.0
    %956 = vmatprep.subr.mxu0 0.0
    %957 = vmatpush1.xpose.msra.mxu0 0.0
    %958 = vmatprep.subr.mxu0 0.0
    %959 = vmatpush1.xpose.msra.mxu0 0.0
    %960 = vmatprep.subr.mxu0 0.0
    %961 = vmatpush1.xpose.msra.mxu0 0.0
    %962 = vmatprep.subr.mxu0 0.0
    %963 = vmatpush1.xpose.msra.mxu0 0.0
    %964 = vmatprep.subr.mxu0 0.0
    %965 = vmatpush1.xpose.msra.mxu0 0.0
    %966 = vmatprep.subr.mxu0 0.0
    %967 = vmatpush1.xpose.msra.mxu0 0.0
    %968 = vmatprep.subr.mxu0 0.0
    %969 = vmatpush1.xpose.msra.mxu0 0.0
    %970 = vmatprep.subr.mxu0 0.0
    %971 = vmatpush1.xpose.msra.mxu0 0.0
    %972 = vmatprep.subr.mxu0 0.0
    %973 = vmatpush1.xpose.msra.mxu0 0.0
    %974 = vmatprep.subr.mxu0 0.0
    %975 = vmatpush1.xpose.msra.mxu0 0.0
    %976 = vmatprep.subr.mxu0 0.0
    %977 = vmatpush1.xpose.msra.mxu0 0.0
    %978 = vmatprep.subr.mxu0 0.0
    %979 = vmatpush1.xpose.msra.mxu0 0.0
    %980 = vmatprep.subr.mxu0 0.0
    %981 = vmatpush1.xpose.msra.mxu0 0.0
    %982 = vmatprep.subr.mxu0 0.0
    %983 = vmatpush1.xpose.msra.mxu0 0.0
    %984 = vmatprep.subr.mxu0 0.0
    %985 = vmatpush1.xpose.msra.mxu0 %v952
    %986 = vmatprep.subr.mxu0 0.0
    %987 = vmatpush2.xpose.msra.mxu0 0.0
    %988 = vmatprep.subr.mxu0 0.0
    %989 = vmatpush2.xpose.msra.mxu0 0.0
    %990 = vmatprep.subr.mxu0 0.0
    %991 = vmatpush2.xpose.msra.mxu0 0.0
    %992 = vmatprep.subr.mxu0 0.0
    %993 = vmatpush2.xpose.msra.mxu0 0.0
    %994 = vmatprep.subr.mxu0 0.0
    %995 = vmatpush2.xpose.msra.mxu0 0.0
    %996 = vmatprep.subr.mxu0 0.0
    %997 = vmatpush2.xpose.msra.mxu0 0.0
    %998 = vmatprep.subr.mxu0 0.0
    %999 = vmatpush2.xpose.msra.mxu0 0.0
    %1000 = vmatprep.subr.mxu0 0.0
    %1001 = vmatpush2.xpose.msra.mxu0 0.0
    %1002 = vmatprep.subr.mxu0 0.0
    %1003 = vmatpush2.xpose.msra.mxu0 0.0
    %1004 = vmatprep.subr.mxu0 0.0
    %1005 = vmatpush2.xpose.msra.mxu0 0.0
    %1006 = vmatprep.subr.mxu0 0.0
    %1007 = vmatpush2.xpose.msra.mxu0 0.0
    %1008 = vmatprep.subr.mxu0 0.0
    %1009 = vmatpush2.xpose.msra.mxu0 0.0
    %1010 = vmatprep.subr.mxu0 0.0
    %1011 = vmatpush2.xpose.msra.mxu0 0.0
    %1012 = vmatprep.subr.mxu0 0.0
    %1013 = vmatpush2.xpose.msra.mxu0 0.0
    %1014 = vmatprep.subr.mxu0 0.0
    %1015 = vmatpush2.xpose.msra.mxu0 0.0
    %1016 = vmatprep.subr.mxu0 0.0
    %1017 = vmatpush2.xpose.msra.mxu0 0.0
    %1018 = vmatprep.mubr.f32.mxu0 0.0
    %1019 = vmatmul.mubr.f32.gmra.mxu0 %v950
    %v1020 = vpop.f32.mrf.mxu0
    %v1021 = vadd.f32 0.0, %v1020
    %v1022 = vpop.f32.mrf.mxu0
    %1023 = vdwg.mxu0
    %v1024 = vsel %vm123, %v1021, -inf
    %1025 = vmax.xlane.f32.xlu0 %v1024
    %v1026 = vpop.xlane.xlu0 %1025
    %v1027 = vsub.f32 %v1021, %v1026
    %v1028 = vmul.f32 %v1027, 1.442695
    %v1029 = vpow.pop %v1028
    %v1030 = vsel %vm123, %v1029, 0.0
    %1031 = vadd.xlane.f32.xlu0 %v1030
    %v1032 = vpop.xlane.xlu0 %1031
    %v1033 = vrcp.pop %v1032
    %v1034 = vmul.f32 %v1029, %v1033
    %1035 = vrot.lane.b32.xlu0 %v110, 48
    %v1036 = vpop.permute.xlu0 %1035
    %v1039 = vsel %vm123, %v1034, 0
    %1041 = vmatprep.subr.mxu0 0.0
    %1042 = vmatpush1.msra.mxu0 0.0
    %1043 = vmatprep.subr.mxu0 0.0
    %1044 = vmatpush1.msra.mxu0 0.0
    %1045 = vmatprep.subr.mxu0 0.0
    %1046 = vmatpush1.msra.mxu0 0.0
    %1047 = vmatprep.subr.mxu0 0.0
    %1048 = vmatpush1.msra.mxu0 0.0
    %1049 = vmatprep.subr.mxu0 0.0
    %1050 = vmatpush1.msra.mxu0 0.0
    %1051 = vmatprep.subr.mxu0 0.0
    %1052 = vmatpush1.msra.mxu0 0.0
    %1053 = vmatprep.subr.mxu0 0.0
    %1054 = vmatpush1.msra.mxu0 0.0
    %1055 = vmatprep.subr.mxu0 0.0
    %1056 = vmatpush1.msra.mxu0 0.0
    %1057 = vmatprep.subr.mxu0 0.0
    %1058 = vmatpush1.msra.mxu0 0.0
    %1059 = vmatprep.subr.mxu0 0.0
    %1060 = vmatpush1.msra.mxu0 0.0
    %1061 = vmatprep.subr.mxu0 0.0
    %1062 = vmatpush1.msra.mxu0 0.0
    %1063 = vmatprep.subr.mxu0 0.0
    %1064 = vmatpush1.msra.mxu0 0.0
    %1065 = vmatprep.subr.mxu0 0.0
    %1066 = vmatpush1.msra.mxu0 0.0
    %1067 = vmatprep.subr.mxu0 0.0
    %1068 = vmatpush1.msra.mxu0 0.0
    %1069 = vmatprep.subr.mxu0 0.0
    %1070 = vmatpush1.msra.mxu0 0.0
    %1071 = vmatprep.subr.mxu0 0.0
    %1072 = vmatpush1.msra.mxu0 %v1036
    %1073 = vmatprep.subr.mxu0 0.0
    %1074 = vmatpush2.msra.mxu0 0.0
    %1075 = vmatprep.subr.mxu0 0.0
    %1076 = vmatpush2.msra.mxu0 0.0
    %1077 = vmatprep.subr.mxu0 0.0
    %1078 = vmatpush2.msra.mxu0 0.0
    %1079 = vmatprep.subr.mxu0 0.0
    %1080 = vmatpush2.msra.mxu0 0.0
    %1081 = vmatprep.subr.mxu0 0.0
    %1082 = vmatpush2.msra.mxu0 0.0
    %1083 = vmatprep.subr.mxu0 0.0
    %1084 = vmatpush2.msra.mxu0 0.0
    %1085 = vmatprep.subr.mxu0 0.0
    %1086 = vmatpush2.msra.mxu0 0.0
    %1087 = vmatprep.subr.mxu0 0.0
    %1088 = vmatpush2.msra.mxu0 0.0
    %1089 = vmatprep.subr.mxu0 0.0
    %1090 = vmatpush2.msra.mxu0 0.0
    %1091 = vmatprep.subr.mxu0 0.0
    %1092 = vmatpush2.msra.mxu0 0.0
    %1093 = vmatprep.subr.mxu0 0.0
    %1094 = vmatpush2.msra.mxu0 0.0
    %1095 = vmatprep.subr.mxu0 0.0
    %1096 = vmatpush2.msra.mxu0 0.0
    %1097 = vmatprep.subr.mxu0 0.0
    %1098 = vmatpush2.msra.mxu0 0.0
    %1099 = vmatprep.subr.mxu0 0.0
    %1100 = vmatpush2.msra.mxu0 0.0
    %1101 = vmatprep.subr.mxu0 0.0
    %1102 = vmatpush2.msra.mxu0 0.0
    %1103 = vmatprep.subr.mxu0 0.0
    %1104 = vmatpush2.msra.mxu0 0.0
    %1105 = vmatprep.mubr.f32.mxu0 0.0
    %1106 = vmatmul.mubr.f32.gmra.mxu0 %v1039
    %v1107 = vpop.f32.mrf.mxu0
    %v1108 = vadd.f32 0.0, %v1107
    %v1109 = vpop.f32.mrf.mxu0
    %1110 = vdwg.mxu0
    %1111 = vrot.lane.b32.xlu0 %v286, 112
    %v1112 = vpop.permute.xlu0 %1111
    %1113 = vrot.lane.b32.xlu0 %v115, 80
    %v1114 = vpop.permute.xlu0 %1113
    %v1115 = vsel %vm123, %v1112, 0
    %v1117 = vsel %vm123, %v1114, 0
    %1119 = vmatprep.subr.mxu0 0.0
    %1120 = vmatpush1.xpose.msra.mxu0 0.0
    %1121 = vmatprep.subr.mxu0 0.0
    %1122 = vmatpush1.xpose.msra.mxu0 0.0
    %1123 = vmatprep.subr.mxu0 0.0
    %1124 = vmatpush1.xpose.msra.mxu0 0.0
    %1125 = vmatprep.subr.mxu0 0.0
    %1126 = vmatpush1.xpose.msra.mxu0 0.0
    %1127 = vmatprep.subr.mxu0 0.0
    %1128 = vmatpush1.xpose.msra.mxu0 0.0
    %1129 = vmatprep.subr.mxu0 0.0
    %1130 = vmatpush1.xpose.msra.mxu0 0.0
    %1131 = vmatprep.subr.mxu0 0.0
    %1132 = vmatpush1.xpose.msra.mxu0 0.0
    %1133 = vmatprep.subr.mxu0 0.0
    %1134 = vmatpush1.xpose.msra.mxu0 0.0
    %1135 = vmatprep.subr.mxu0 0.0
    %1136 = vmatpush1.xpose.msra.mxu0 0.0
    %1137 = vmatprep.subr.mxu0 0.0
    %1138 = vmatpush1.xpose.msra.mxu0 0.0
    %1139 = vmatprep.subr.mxu0 0.0
    %1140 = vmatpush1.xpose.msra.mxu0 0.0
    %1141 = vmatprep.subr.mxu0 0.0
    %1142 = vmatpush1.xpose.msra.mxu0 0.0
    %1143 = vmatprep.subr.mxu0 0.0
    %1144 = vmatpush1.xpose.msra.mxu0 0.0
    %1145 = vmatprep.subr.mxu0 0.0
    %1146 = vmatpush1.xpose.msra.mxu0 0.0
    %1147 = vmatprep.subr.mxu0 0.0
    %1148 = vmatpush1.xpose.msra.mxu0 0.0
    %1149 = vmatprep.subr.mxu0 0.0
    %1150 = vmatpush1.xpose.msra.mxu0 %v1117
    %1151 = vmatprep.subr.mxu0 0.0
    %1152 = vmatpush2.xpose.msra.mxu0 0.0
    %1153 = vmatprep.subr.mxu0 0.0
    %1154 = vmatpush2.xpose.msra.mxu0 0.0
    %1155 = vmatprep.subr.mxu0 0.0
    %1156 = vmatpush2.xpose.msra.mxu0 0.0
    %1157 = vmatprep.subr.mxu0 0.0
    %1158 = vmatpush2.xpose.msra.mxu0 0.0
    %1159 = vmatprep.subr.mxu0 0.0
    %1160 = vmatpush2.xpose.msra.mxu0 0.0
    %1161 = vmatprep.subr.mxu0 0.0
    %1162 = vmatpush2.xpose.msra.mxu0 0.0
    %1163 = vmatprep.subr.mxu0 0.0
    %1164 = vmatpush2.xpose.msra.mxu0 0.0
    %1165 = vmatprep.subr.mxu0 0.0
    %1166 = vmatpush2.xpose.msra.mxu0 0.0
    %1167 = vmatprep.subr.mxu0 0.0
    %1168 = vmatpush2.xpose.msra.mxu0 0.0
    %1169 = vmatprep.subr.mxu0 0.0
    %1170 = vmatpush2.xpose.msra.mxu0 0.0
    %1171 = vmatprep.subr.mxu0 0.0
    %1172 = vmatpush2.xpose.msra.mxu0 0.0
    %1173 = vmatprep.subr.mxu0 0.0
    %1174 = vmatpush2.xpose.msra.mxu0 0.0
    %1175 = vmatprep.subr.mxu0 0.0
    %1176 = vmatpush2.xpose.msra.mxu0 0.0
    %1177 = vmatprep.subr.mxu0 0.0
    %1178 = vmatpush2.xpose.msra.mxu0 0.0
    %1179 = vmatprep.subr.mxu0 0.0
    %1180 = vmatpush2.xpose.msra.mxu0 0.0
    %1181 = vmatprep.subr.mxu0 0.0
    %1182 = vmatpush2.xpose.msra.mxu0 0.0
    %1183 = vmatprep.mubr.f32.mxu0 0.0
    %1184 = vmatmul.mubr.f32.gmra.mxu0 %v1115
    %v1185 = vpop.f32.mrf.mxu0
    %v1186 = vadd.f32 0.0, %v1185
    %v1187 = vpop.f32.mrf.mxu0
    %1188 = vdwg.mxu0
    %v1189 = vsel %vm123, %v1186, -inf
    %1190 = vmax.xlane.f32.xlu0 %v1189
    %v1191 = vpop.xlane.xlu0 %1190
    %v1192 = vsub.f32 %v1186, %v1191
    %v1193 = vmul.f32 %v1192, 1.442695
    %v1194 = vpow.pop %v1193
    %v1195 = vsel %vm123, %v1194, 0.0
    %1196 = vadd.xlane.f32.xlu0 %v1195
    %v1197 = vpop.xlane.xlu0 %1196
    %v1198 = vrcp.pop %v1197
    %v1199 = vmul.f32 %v1194, %v1198
    %1200 = vrot.lane.b32.xlu0 %v115, 48
    %v1201 = vpop.permute.xlu0 %1200
    %v1204 = vsel %vm123, %v1199, 0
    %1206 = vmatprep.subr.mxu0 0.0
    %1207 = vmatpush1.msra.mxu0 0.0
    %1208 = vmatprep.subr.mxu0 0.0
    %1209 = vmatpush1.msra.mxu0 0.0
    %1210 = vmatprep.subr.mxu0 0.0
    %1211 = vmatpush1.msra.mxu0 0.0
    %1212 = vmatprep.subr.mxu0 0.0
    %1213 = vmatpush1.msra.mxu0 0.0
    %1214 = vmatprep.subr.mxu0 0.0
    %1215 = vmatpush1.msra.mxu0 0.0
    %1216 = vmatprep.subr.mxu0 0.0
    %1217 = vmatpush1.msra.mxu0 0.0
    %1218 = vmatprep.subr.mxu0 0.0
    %1219 = vmatpush1.msra.mxu0 0.0
    %1220 = vmatprep.subr.mxu0 0.0
    %1221 = vmatpush1.msra.mxu0 0.0
    %1222 = vmatprep.subr.mxu0 0.0
    %1223 = vmatpush1.msra.mxu0 0.0
    %1224 = vmatprep.subr.mxu0 0.0
    %1225 = vmatpush1.msra.mxu0 0.0
    %1226 = vmatprep.subr.mxu0 0.0
    %1227 = vmatpush1.msra.mxu0 0.0
    %1228 = vmatprep.subr.mxu0 0.0
    %1229 = vmatpush1.msra.mxu0 0.0
    %1230 = vmatprep.subr.mxu0 0.0
    %1231 = vmatpush1.msra.mxu0 0.0
    %1232 = vmatprep.subr.mxu0 0.0
    %1233 = vmatpush1.msra.mxu0 0.0
    %1234 = vmatprep.subr.mxu0 0.0
    %1235 = vmatpush1.msra.mxu0 0.0
    %1236 = vmatprep.subr.mxu0 0.0
    %1237 = vmatpush1.msra.mxu0 %v1201
    %1238 = vmatprep.subr.mxu0 0.0
    %1239 = vmatpush2.msra.mxu0 0.0
    %1240 = vmatprep.subr.mxu0 0.0
    %1241 = vmatpush2.msra.mxu0 0.0
    %1242 = vmatprep.subr.mxu0 0.0
    %1243 = vmatpush2.msra.mxu0 0.0
    %1244 = vmatprep.subr.mxu0 0.0
    %1245 = vmatpush2.msra.mxu0 0.0
    %1246 = vmatprep.subr.mxu0 0.0
    %1247 = vmatpush2.msra.mxu0 0.0
    %1248 = vmatprep.subr.mxu0 0.0
    %1249 = vmatpush2.msra.mxu0 0.0
    %1250 = vmatprep.subr.mxu0 0.0
    %1251 = vmatpush2.msra.mxu0 0.0
    %1252 = vmatprep.subr.mxu0 0.0
    %1253 = vmatpush2.msra.mxu0 0.0
    %1254 = vmatprep.subr.mxu0 0.0
    %1255 = vmatpush2.msra.mxu0 0.0
    %1256 = vmatprep.subr.mxu0 0.0
    %1257 = vmatpush2.msra.mxu0 0.0
    %1258 = vmatprep.subr.mxu0 0.0
    %1259 = vmatpush2.msra.mxu0 0.0
    %1260 = vmatprep.subr.mxu0 0.0
    %1261 = vmatpush2.msra.mxu0 0.0
    %1262 = vmatprep.subr.mxu0 0.0
    %1263 = vmatpush2.msra.mxu0 0.0
    %1264 = vmatprep.subr.mxu0 0.0
    %1265 = vmatpush2.msra.mxu0 0.0
    %1266 = vmatprep.subr.mxu0 0.0
    %1267 = vmatpush2.msra.mxu0 0.0
    %1268 = vmatprep.subr.mxu0 0.0
    %1269 = vmatpush2.msra.mxu0 0.0
    %1270 = vmatprep.mubr.f32.mxu0 0.0
    %1271 = vmatmul.mubr.f32.gmra.mxu0 %v1204
    %v1272 = vpop.f32.mrf.mxu0
    %v1273 = vadd.f32 0.0, %v1272
    %v1274 = vpop.f32.mrf.mxu0
    %1275 = vdwg.mxu0
    %v1277 = vsel %vm123, %v1108, 0
    %v1280 = vsel %vm123, %v1273, 0
    %1282 = vmatprep.subr.mxu0 0.0
    %1283 = vmatpush1.msra.mxu0 0.0
    %1284 = vmatprep.subr.mxu0 0.0
    %1285 = vmatpush1.msra.mxu0 0.0
    %1286 = vmatprep.subr.mxu0 0.0
    %1287 = vmatpush1.msra.mxu0 0.0
    %1288 = vmatprep.subr.mxu0 0.0
    %1289 = vmatpush1.msra.mxu0 0.0
    %1290 = vmatprep.subr.mxu0 0.0
    %1291 = vmatpush1.msra.mxu0 0.0
    %1292 = vmatprep.subr.mxu0 0.0
    %1293 = vmatpush1.msra.mxu0 0.0
    %1294 = vmatprep.subr.mxu0 0.0
    %1295 = vmatpush1.msra.mxu0 0.0
    %1296 = vmatprep.subr.mxu0 0.0
    %1297 = vmatpush1.msra.mxu0 0.0
    %1298 = vmatprep.subr.mxu0 0.0
    %1299 = vmatpush1.msra.mxu0 0.0
    %1300 = vmatprep.subr.mxu0 0.0
    %1301 = vmatpush1.msra.mxu0 0.0
    %1302 = vmatprep.subr.mxu0 0.0
    %1303 = vmatpush1.msra.mxu0 0.0
    %1304 = vmatprep.subr.mxu0 0.0
    %1305 = vmatpush1.msra.mxu0 0.0
    %1306 = vmatprep.subr.mxu0 0.0
    %1307 = vmatpush1.msra.mxu0 0.0
    %1308 = vmatprep.subr.mxu0 0.0
    %1309 = vmatpush1.msra.mxu0 0.0
    %1310 = vmatprep.subr.mxu0 0.0
    %1311 = vmatpush1.msra.mxu0 0.0
    %1312 = vmatprep.subr.mxu0 0.0
    %1313 = vmatpush1.msra.mxu0 %v945
    %1314 = vmatprep.subr.mxu0 0.0
    %1315 = vmatpush2.msra.mxu0 0.0
    %1316 = vmatprep.subr.mxu0 0.0
    %1317 = vmatpush2.msra.mxu0 0.0
    %1318 = vmatprep.subr.mxu0 0.0
    %1319 = vmatpush2.msra.mxu0 0.0
    %1320 = vmatprep.subr.mxu0 0.0
    %1321 = vmatpush2.msra.mxu0 0.0
    %1322 = vmatprep.subr.mxu0 0.0
    %1323 = vmatpush2.msra.mxu0 0.0
    %1324 = vmatprep.subr.mxu0 0.0
    %1325 = vmatpush2.msra.mxu0 0.0
    %1326 = vmatprep.subr.mxu0 0.0
    %1327 = vmatpush2.msra.mxu0 0.0
    %1328 = vmatprep.subr.mxu0 0.0
    %1329 = vmatpush2.msra.mxu0 0.0
    %1330 = vmatprep.subr.mxu0 0.0
    %1331 = vmatpush2.msra.mxu0 0.0
    %1332 = vmatprep.subr.mxu0 0.0
    %1333 = vmatpush2.msra.mxu0 0.0
    %1334 = vmatprep.subr.mxu0 0.0
    %1335 = vmatpush2.msra.mxu0 0.0
    %1336 = vmatprep.subr.mxu0 0.0
    %1337 = vmatpush2.msra.mxu0 0.0
    %1338 = vmatprep.subr.mxu0 0.0
    %1339 = vmatpush2.msra.mxu0 0.0
    %1340 = vmatprep.subr.mxu0 0.0
    %1341 = vmatpush2.msra.mxu0 0.0
    %1342 = vmatprep.subr.mxu0 0.0
    %1343 = vmatpush2.msra.mxu0 0.0
    %1344 = vmatprep.subr.mxu0 0.0
    %1345 = vmatpush2.msra.mxu0 0.0
    %1346 = vmatprep.mubr.f32.mxu0 0.0
    %1347 = vmatmul.mubr.f32.gmra.mxu0 %v1277
    %v1348 = vpop.f32.mrf.mxu0
    %v1349 = vadd.f32 0.0, %v1348
    %v1350 = vpop.f32.mrf.mxu0
    %1351 = vmatprep.mubr.f32.mxu0 0.0
    %1352 = vmatmul.mubr.f32.gmra.mxu0 %v1280
    %v1353 = vpop.f32.mrf.mxu0
    %v1354 = vadd.f32 0.0, %v1353
    %v1355 = vpop.f32.mrf.mxu0
    %1356 = vdwg.mxu0
    %v1357 = vadd.f32 %v937, %v1349
    %v1358 = vadd.f32 %v942, %v1354
    %v1359 = vld [vmem:[#allocation2 + $0x38] sm:$0xff]
    %1360 = vrot.lane.b32.xlu0 %v119, 104
    %v1361 = vpop.permute.xlu0 %1360
    %1362 = vrot.lane.b32.xlu0 %v110, 72
    %v1363 = vpop.permute.xlu0 %1362
    %v1364 = vsel %vm123, %v1361, 0
    %v1366 = vsel %vm123, %v1363, 0
    %1368 = vmatprep.subr.mxu0 0.0
    %1369 = vmatpush1.xpose.msra.mxu0 0.0
    %1370 = vmatprep.subr.mxu0 0.0
    %1371 = vmatpush1.xpose.msra.mxu0 0.0
    %1372 = vmatprep.subr.mxu0 0.0
    %1373 = vmatpush1.xpose.msra.mxu0 0.0
    %1374 = vmatprep.subr.mxu0 0.0
    %1375 = vmatpush1.xpose.msra.mxu0 0.0
    %1376 = vmatprep.subr.mxu0 0.0
    %1377 = vmatpush1.xpose.msra.mxu0 0.0
    %1378 = vmatprep.subr.mxu0 0.0
    %1379 = vmatpush1.xpose.msra.mxu0 0.0
    %1380 = vmatprep.subr.mxu0 0.0
    %1381 = vmatpush1.xpose.msra.mxu0 0.0
    %1382 = vmatprep.subr.mxu0 0.0
    %1383 = vmatpush1.xpose.msra.mxu0 0.0
    %1384 = vmatprep.subr.mxu0 0.0
    %1385 = vmatpush1.xpose.msra.mxu0 0.0
    %1386 = vmatprep.subr.mxu0 0.0
    %1387 = vmatpush1.xpose.msra.mxu0 0.0
    %1388 = vmatprep.subr.mxu0 0.0
    %1389 = vmatpush1.xpose.msra.mxu0 0.0
    %1390 = vmatprep.subr.mxu0 0.0
    %1391 = vmatpush1.xpose.msra.mxu0 0.0
    %1392 = vmatprep.subr.mxu0 0.0
    %1393 = vmatpush1.xpose.msra.mxu0 0.0
    %1394 = vmatprep.subr.mxu0 0.0
    %1395 = vmatpush1.xpose.msra.mxu0 0.0
    %1396 = vmatprep.subr.mxu0 0.0
    %1397 = vmatpush1.xpose.msra.mxu0 0.0
    %1398 = vmatprep.subr.mxu0 0.0
    %1399 = vmatpush1.xpose.msra.mxu0 %v1366
    %1400 = vmatprep.subr.mxu0 0.0
    %1401 = vmatpush2.xpose.msra.mxu0 0.0
    %1402 = vmatprep.subr.mxu0 0.0
    %1403 = vmatpush2.xpose.msra.mxu0 0.0
    %1404 = vmatprep.subr.mxu0 0.0
    %1405 = vmatpush2.xpose.msra.mxu0 0.0
    %1406 = vmatprep.subr.mxu0 0.0
    %1407 = vmatpush2.xpose.msra.mxu0 0.0
    %1408 = vmatprep.subr.mxu0 0.0
    %1409 = vmatpush2.xpose.msra.mxu0 0.0
    %1410 = vmatprep.subr.mxu0 0.0
    %1411 = vmatpush2.xpose.msra.mxu0 0.0
    %1412 = vmatprep.subr.mxu0 0.0
    %1413 = vmatpush2.xpose.msra.mxu0 0.0
    %1414 = vmatprep.subr.mxu0 0.0
    %1415 = vmatpush2.xpose.msra.mxu0 0.0
    %1416 = vmatprep.subr.mxu0 0.0
    %1417 = vmatpush2.xpose.msra.mxu0 0.0
    %1418 = vmatprep.subr.mxu0 0.0
    %1419 = vmatpush2.xpose.msra.mxu0 0.0
    %1420 = vmatprep.subr.mxu0 0.0
    %1421 = vmatpush2.xpose.msra.mxu0 0.0
    %1422 = vmatprep.subr.mxu0 0.0
    %1423 = vmatpush2.xpose.msra.mxu0 0.0
    %1424 = vmatprep.subr.mxu0 0.0
    %1425 = vmatpush2.xpose.msra.mxu0 0.0
    %1426 = vmatprep.subr.mxu0 0.0
    %1427 = vmatpush2.xpose.msra.mxu0 0.0
    %1428 = vmatprep.subr.mxu0 0.0
    %1429 = vmatpush2.xpose.msra.mxu0 0.0
    %1430 = vmatprep.subr.mxu0 0.0
    %1431 = vmatpush2.xpose.msra.mxu0 0.0
    %1432 = vmatprep.mubr.f32.mxu0 0.0
    %1433 = vmatmul.mubr.f32.gmra.mxu0 %v1364
    %v1434 = vpop.f32.mrf.mxu0
    %v1435 = vadd.f32 0.0, %v1434
    %v1436 = vpop.f32.mrf.mxu0
    %1437 = vdwg.mxu0
    %v1438 = vsel %vm123, %v1435, -inf
    %1439 = vmax.xlane.f32.xlu0 %v1438
    %v1440 = vpop.xlane.xlu0 %1439
    %v1441 = vsub.f32 %v1435, %v1440
    %v1442 = vmul.f32 %v1441, 1.442695
    %v1443 = vpow.pop %v1442
    %v1444 = vsel %vm123, %v1443, 0.0
    %1445 = vadd.xlane.f32.xlu0 %v1444
    %v1446 = vpop.xlane.xlu0 %1445
    %v1447 = vrcp.pop %v1446
    %v1448 = vmul.f32 %v1443, %v1447
    %1449 = vrot.lane.b32.xlu0 %v110, 40
    %v1450 = vpop.permute.xlu0 %1449
    %v1453 = vsel %vm123, %v1448, 0
    %1455 = vmatprep.subr.mxu0 0.0
    %1456 = vmatpush1.msra.mxu0 0.0
    %1457 = vmatprep.subr.mxu0 0.0
    %1458 = vmatpush1.msra.mxu0 0.0
    %1459 = vmatprep.subr.mxu0 0.0
    %1460 = vmatpush1.msra.mxu0 0.0
    %1461 = vmatprep.subr.mxu0 0.0
    %1462 = vmatpush1.msra.mxu0 0.0
    %1463 = vmatprep.subr.mxu0 0.0
    %1464 = vmatpush1.msra.mxu0 0.0
    %1465 = vmatprep.subr.mxu0 0.0
    %1466 = vmatpush1.msra.mxu0 0.0
    %1467 = vmatprep.subr.mxu0 0.0
    %1468 = vmatpush1.msra.mxu0 0.0
    %1469 = vmatprep.subr.mxu0 0.0
    %1470 = vmatpush1.msra.mxu0 0.0
    %1471 = vmatprep.subr.mxu0 0.0
    %1472 = vmatpush1.msra.mxu0 0.0
    %1473 = vmatprep.subr.mxu0 0.0
    %1474 = vmatpush1.msra.mxu0 0.0
    %1475 = vmatprep.subr.mxu0 0.0
    %1476 = vmatpush1.msra.mxu0 0.0
    %1477 = vmatprep.subr.mxu0 0.0
    %1478 = vmatpush1.msra.mxu0 0.0
    %1479 = vmatprep.subr.mxu0 0.0
    %1480 = vmatpush1.msra.mxu0 0.0
    %1481 = vmatprep.subr.mxu0 0.0
    %1482 = vmatpush1.msra.mxu0 0.0
    %1483 = vmatprep.subr.mxu0 0.0
    %1484 = vmatpush1.msra.mxu0 0.0
    %1485 = vmatprep.subr.mxu0 0.0
    %1486 = vmatpush1.msra.mxu0 %v1450
    %1487 = vmatprep.subr.mxu0 0.0
    %1488 = vmatpush2.msra.mxu0 0.0
    %1489 = vmatprep.subr.mxu0 0.0
    %1490 = vmatpush2.msra.mxu0 0.0
    %1491 = vmatprep.subr.mxu0 0.0
    %1492 = vmatpush2.msra.mxu0 0.0
    %1493 = vmatprep.subr.mxu0 0.0
    %1494 = vmatpush2.msra.mxu0 0.0
    %1495 = vmatprep.subr.mxu0 0.0
    %1496 = vmatpush2.msra.mxu0 0.0
    %1497 = vmatprep.subr.mxu0 0.0
    %1498 = vmatpush2.msra.mxu0 0.0
    %1499 = vmatprep.subr.mxu0 0.0
    %1500 = vmatpush2.msra.mxu0 0.0
    %1501 = vmatprep.subr.mxu0 0.0
    %1502 = vmatpush2.msra.mxu0 0.0
    %1503 = vmatprep.subr.mxu0 0.0
    %1504 = vmatpush2.msra.mxu0 0.0
    %1505 = vmatprep.subr.mxu0 0.0
    %1506 = vmatpush2.msra.mxu0 0.0
    %1507 = vmatprep.subr.mxu0 0.0
    %1508 = vmatpush2.msra.mxu0 0.0
    %1509 = vmatprep.subr.mxu0 0.0
    %1510 = vmatpush2.msra.mxu0 0.0
    %1511 = vmatprep.subr.mxu0 0.0
    %1512 = vmatpush2.msra.mxu0 0.0
    %1513 = vmatprep.subr.mxu0 0.0
    %1514 = vmatpush2.msra.mxu0 0.0
    %1515 = vmatprep.subr.mxu0 0.0
    %1516 = vmatpush2.msra.mxu0 0.0
    %1517 = vmatprep.subr.mxu0 0.0
    %1518 = vmatpush2.msra.mxu0 0.0
    %1519 = vmatprep.mubr.f32.mxu0 0.0
    %1520 = vmatmul.mubr.f32.gmra.mxu0 %v1453
    %v1521 = vpop.f32.mrf.mxu0
    %v1522 = vadd.f32 0.0, %v1521
    %v1523 = vpop.f32.mrf.mxu0
    %1524 = vdwg.mxu0
    %1525 = vrot.lane.b32.xlu0 %v286, 104
    %v1526 = vpop.permute.xlu0 %1525
    %1527 = vrot.lane.b32.xlu0 %v115, 72
    %v1528 = vpop.permute.xlu0 %1527
    %v1529 = vsel %vm123, %v1526, 0
    %v1531 = vsel %vm123, %v1528, 0
    %1533 = vmatprep.subr.mxu0 0.0
    %1534 = vmatpush1.xpose.msra.mxu0 0.0
    %1535 = vmatprep.subr.mxu0 0.0
    %1536 = vmatpush1.xpose.msra.mxu0 0.0
    %1537 = vmatprep.subr.mxu0 0.0
    %1538 = vmatpush1.xpose.msra.mxu0 0.0
    %1539 = vmatprep.subr.mxu0 0.0
    %1540 = vmatpush1.xpose.msra.mxu0 0.0
    %1541 = vmatprep.subr.mxu0 0.0
    %1542 = vmatpush1.xpose.msra.mxu0 0.0
    %1543 = vmatprep.subr.mxu0 0.0
    %1544 = vmatpush1.xpose.msra.mxu0 0.0
    %1545 = vmatprep.subr.mxu0 0.0
    %1546 = vmatpush1.xpose.msra.mxu0 0.0
    %1547 = vmatprep.subr.mxu0 0.0
    %1548 = vmatpush1.xpose.msra.mxu0 0.0
    %1549 = vmatprep.subr.mxu0 0.0
    %1550 = vmatpush1.xpose.msra.mxu0 0.0
    %1551 = vmatprep.subr.mxu0 0.0
    %1552 = vmatpush1.xpose.msra.mxu0 0.0
    %1553 = vmatprep.subr.mxu0 0.0
    %1554 = vmatpush1.xpose.msra.mxu0 0.0
    %1555 = vmatprep.subr.mxu0 0.0
    %1556 = vmatpush1.xpose.msra.mxu0 0.0
    %1557 = vmatprep.subr.mxu0 0.0
    %1558 = vmatpush1.xpose.msra.mxu0 0.0
    %1559 = vmatprep.subr.mxu0 0.0
    %1560 = vmatpush1.xpose.msra.mxu0 0.0
    %1561 = vmatprep.subr.mxu0 0.0
    %1562 = vmatpush1.xpose.msra.mxu0 0.0
    %1563 = vmatprep.subr.mxu0 0.0
    %1564 = vmatpush1.xpose.msra.mxu0 %v1531
    %1565 = vmatprep.subr.mxu0 0.0
    %1566 = vmatpush2.xpose.msra.mxu0 0.0
    %1567 = vmatprep.subr.mxu0 0.0
    %1568 = vmatpush2.xpose.msra.mxu0 0.0
    %1569 = vmatprep.subr.mxu0 0.0
    %1570 = vmatpush2.xpose.msra.mxu0 0.0
    %1571 = vmatprep.subr.mxu0 0.0
    %1572 = vmatpush2.xpose.msra.mxu0 0.0
    %1573 = vmatprep.subr.mxu0 0.0
    %1574 = vmatpush2.xpose.msra.mxu0 0.0
    %1575 = vmatprep.subr.mxu0 0.0
    %1576 = vmatpush2.xpose.msra.mxu0 0.0
    %1577 = vmatprep.subr.mxu0 0.0
    %1578 = vmatpush2.xpose.msra.mxu0 0.0
    %1579 = vmatprep.subr.mxu0 0.0
    %1580 = vmatpush2.xpose.msra.mxu0 0.0
    %1581 = vmatprep.subr.mxu0 0.0
    %1582 = vmatpush2.xpose.msra.mxu0 0.0
    %1583 = vmatprep.subr.mxu0 0.0
    %1584 = vmatpush2.xpose.msra.mxu0 0.0
    %1585 = vmatprep.subr.mxu0 0.0
    %1586 = vmatpush2.xpose.msra.mxu0 0.0
    %1587 = vmatprep.subr.mxu0 0.0
    %1588 = vmatpush2.xpose.msra.mxu0 0.0
    %1589 = vmatprep.subr.mxu0 0.0
    %1590 = vmatpush2.xpose.msra.mxu0 0.0
    %1591 = vmatprep.subr.mxu0 0.0
    %1592 = vmatpush2.xpose.msra.mxu0 0.0
    %1593 = vmatprep.subr.mxu0 0.0
    %1594 = vmatpush2.xpose.msra.mxu0 0.0
    %1595 = vmatprep.subr.mxu0 0.0
    %1596 = vmatpush2.xpose.msra.mxu0 0.0
    %1597 = vmatprep.mubr.f32.mxu0 0.0
    %1598 = vmatmul.mubr.f32.gmra.mxu0 %v1529
    %v1599 = vpop.f32.mrf.mxu0
    %v1600 = vadd.f32 0.0, %v1599
    %v1601 = vpop.f32.mrf.mxu0
    %1602 = vdwg.mxu0
    %v1603 = vsel %vm123, %v1600, -inf
    %1604 = vmax.xlane.f32.xlu0 %v1603
    %v1605 = vpop.xlane.xlu0 %1604
    %v1606 = vsub.f32 %v1600, %v1605
    %v1607 = vmul.f32 %v1606, 1.442695
    %v1608 = vpow.pop %v1607
    %v1609 = vsel %vm123, %v1608, 0.0
    %1610 = vadd.xlane.f32.xlu0 %v1609
    %v1611 = vpop.xlane.xlu0 %1610
    %v1612 = vrcp.pop %v1611
    %v1613 = vmul.f32 %v1608, %v1612
    %1614 = vrot.lane.b32.xlu0 %v115, 40
    %v1615 = vpop.permute.xlu0 %1614
    %v1618 = vsel %vm123, %v1613, 0
    %1620 = vmatprep.subr.mxu0 0.0
    %1621 = vmatpush1.msra.mxu0 0.0
    %1622 = vmatprep.subr.mxu0 0.0
    %1623 = vmatpush1.msra.mxu0 0.0
    %1624 = vmatprep.subr.mxu0 0.0
    %1625 = vmatpush1.msra.mxu0 0.0
    %1626 = vmatprep.subr.mxu0 0.0
    %1627 = vmatpush1.msra.mxu0 0.0
    %1628 = vmatprep.subr.mxu0 0.0
    %1629 = vmatpush1.msra.mxu0 0.0
    %1630 = vmatprep.subr.mxu0 0.0
    %1631 = vmatpush1.msra.mxu0 0.0
    %1632 = vmatprep.subr.mxu0 0.0
    %1633 = vmatpush1.msra.mxu0 0.0
    %1634 = vmatprep.subr.mxu0 0.0
    %1635 = vmatpush1.msra.mxu0 0.0
    %1636 = vmatprep.subr.mxu0 0.0
    %1637 = vmatpush1.msra.mxu0 0.0
    %1638 = vmatprep.subr.mxu0 0.0
    %1639 = vmatpush1.msra.mxu0 0.0
    %1640 = vmatprep.subr.mxu0 0.0
    %1641 = vmatpush1.msra.mxu0 0.0
    %1642 = vmatprep.subr.mxu0 0.0
    %1643 = vmatpush1.msra.mxu0 0.0
    %1644 = vmatprep.subr.mxu0 0.0
    %1645 = vmatpush1.msra.mxu0 0.0
    %1646 = vmatprep.subr.mxu0 0.0
    %1647 = vmatpush1.msra.mxu0 0.0
    %1648 = vmatprep.subr.mxu0 0.0
    %1649 = vmatpush1.msra.mxu0 0.0
    %1650 = vmatprep.subr.mxu0 0.0
    %1651 = vmatpush1.msra.mxu0 %v1615
    %1652 = vmatprep.subr.mxu0 0.0
    %1653 = vmatpush2.msra.mxu0 0.0
    %1654 = vmatprep.subr.mxu0 0.0
    %1655 = vmatpush2.msra.mxu0 0.0
    %1656 = vmatprep.subr.mxu0 0.0
    %1657 = vmatpush2.msra.mxu0 0.0
    %1658 = vmatprep.subr.mxu0 0.0
    %1659 = vmatpush2.msra.mxu0 0.0
    %1660 = vmatprep.subr.mxu0 0.0
    %1661 = vmatpush2.msra.mxu0 0.0
    %1662 = vmatprep.subr.mxu0 0.0
    %1663 = vmatpush2.msra.mxu0 0.0
    %1664 = vmatprep.subr.mxu0 0.0
    %1665 = vmatpush2.msra.mxu0 0.0
    %1666 = vmatprep.subr.mxu0 0.0
    %1667 = vmatpush2.msra.mxu0 0.0
    %1668 = vmatprep.subr.mxu0 0.0
    %1669 = vmatpush2.msra.mxu0 0.0
    %1670 = vmatprep.subr.mxu0 0.0
    %1671 = vmatpush2.msra.mxu0 0.0
    %1672 = vmatprep.subr.mxu0 0.0
    %1673 = vmatpush2.msra.mxu0 0.0
    %1674 = vmatprep.subr.mxu0 0.0
    %1675 = vmatpush2.msra.mxu0 0.0
    %1676 = vmatprep.subr.mxu0 0.0
    %1677 = vmatpush2.msra.mxu0 0.0
    %1678 = vmatprep.subr.mxu0 0.0
    %1679 = vmatpush2.msra.mxu0 0.0
    %1680 = vmatprep.subr.mxu0 0.0
    %1681 = vmatpush2.msra.mxu0 0.0
    %1682 = vmatprep.subr.mxu0 0.0
    %1683 = vmatpush2.msra.mxu0 0.0
    %1684 = vmatprep.mubr.f32.mxu0 0.0
    %1685 = vmatmul.mubr.f32.gmra.mxu0 %v1618
    %v1686 = vpop.f32.mrf.mxu0
    %v1687 = vadd.f32 0.0, %v1686
    %v1688 = vpop.f32.mrf.mxu0
    %1689 = vdwg.mxu0
    %v1691 = vsel %vm123, %v1522, 0
    %v1694 = vsel %vm123, %v1687, 0
    %1696 = vmatprep.subr.mxu0 0.0
    %1697 = vmatpush1.msra.mxu0 0.0
    %1698 = vmatprep.subr.mxu0 0.0
    %1699 = vmatpush1.msra.mxu0 0.0
    %1700 = vmatprep.subr.mxu0 0.0
    %1701 = vmatpush1.msra.mxu0 0.0
    %1702 = vmatprep.subr.mxu0 0.0
    %1703 = vmatpush1.msra.mxu0 0.0
    %1704 = vmatprep.subr.mxu0 0.0
    %1705 = vmatpush1.msra.mxu0 0.0
    %1706 = vmatprep.subr.mxu0 0.0
    %1707 = vmatpush1.msra.mxu0 0.0
    %1708 = vmatprep.subr.mxu0 0.0
    %1709 = vmatpush1.msra.mxu0 0.0
    %1710 = vmatprep.subr.mxu0 0.0
    %1711 = vmatpush1.msra.mxu0 0.0
    %1712 = vmatprep.subr.mxu0 0.0
    %1713 = vmatpush1.msra.mxu0 0.0
    %1714 = vmatprep.subr.mxu0 0.0
    %1715 = vmatpush1.msra.mxu0 0.0
    %1716 = vmatprep.subr.mxu0 0.0
    %1717 = vmatpush1.msra.mxu0 0.0
    %1718 = vmatprep.subr.mxu0 0.0
    %1719 = vmatpush1.msra.mxu0 0.0
    %1720 = vmatprep.subr.mxu0 0.0
    %1721 = vmatpush1.msra.mxu0 0.0
    %1722 = vmatprep.subr.mxu0 0.0
    %1723 = vmatpush1.msra.mxu0 0.0
    %1724 = vmatprep.subr.mxu0 0.0
    %1725 = vmatpush1.msra.mxu0 0.0
    %1726 = vmatprep.subr.mxu0 0.0
    %1727 = vmatpush1.msra.mxu0 %v1359
    %1728 = vmatprep.subr.mxu0 0.0
    %1729 = vmatpush2.msra.mxu0 0.0
    %1730 = vmatprep.subr.mxu0 0.0
    %1731 = vmatpush2.msra.mxu0 0.0
    %1732 = vmatprep.subr.mxu0 0.0
    %1733 = vmatpush2.msra.mxu0 0.0
    %1734 = vmatprep.subr.mxu0 0.0
    %1735 = vmatpush2.msra.mxu0 0.0
    %1736 = vmatprep.subr.mxu0 0.0
    %1737 = vmatpush2.msra.mxu0 0.0
    %1738 = vmatprep.subr.mxu0 0.0
    %1739 = vmatpush2.msra.mxu0 0.0
    %1740 = vmatprep.subr.mxu0 0.0
    %1741 = vmatpush2.msra.mxu0 0.0
    %1742 = vmatprep.subr.mxu0 0.0
    %1743 = vmatpush2.msra.mxu0 0.0
    %1744 = vmatprep.subr.mxu0 0.0
    %1745 = vmatpush2.msra.mxu0 0.0
    %1746 = vmatprep.subr.mxu0 0.0
    %1747 = vmatpush2.msra.mxu0 0.0
    %1748 = vmatprep.subr.mxu0 0.0
    %1749 = vmatpush2.msra.mxu0 0.0
    %1750 = vmatprep.subr.mxu0 0.0
    %1751 = vmatpush2.msra.mxu0 0.0
    %1752 = vmatprep.subr.mxu0 0.0
    %1753 = vmatpush2.msra.mxu0 0.0
    %1754 = vmatprep.subr.mxu0 0.0
    %1755 = vmatpush2.msra.mxu0 0.0
    %1756 = vmatprep.subr.mxu0 0.0
    %1757 = vmatpush2.msra.mxu0 0.0
    %1758 = vmatprep.subr.mxu0 0.0
    %1759 = vmatpush2.msra.mxu0 0.0
    %1760 = vmatprep.mubr.f32.mxu0 0.0
    %1761 = vmatmul.mubr.f32.gmra.mxu0 %v1691
    %v1762 = vpop.f32.mrf.mxu0
    %v1763 = vadd.f32 0.0, %v1762
    %v1764 = vpop.f32.mrf.mxu0
    %1765 = vmatprep.mubr.f32.mxu0 0.0
    %1766 = vmatmul.mubr.f32.gmra.mxu0 %v1694
    %v1767 = vpop.f32.mrf.mxu0
    %v1768 = vadd.f32 0.0, %v1767
    %v1769 = vpop.f32.mrf.mxu0
    %1770 = vdwg.mxu0
    %v1771 = vadd.f32 %v1357, %v1763
    %v1772 = vadd.f32 %v1358, %v1768
    %v1773 = vld [vmem:[#allocation2 + $0xa1] sm:$0x1]
    %v1774 = vlaneseq
    %v1775 = vshrl.u32 %v1774, 7
    %v1776 = vsub.s32 0, %v1775
    %v1777 = vrot.slane %v1773, %v1776
    %v1778 = vadd.f32 %v1771, %v1777
    %v1779 = vadd.f32 %v1772, %v1777
    %v1780 = vld [vmem:[#allocation2 + $0xa4] sm:$0x1]
    %v1781 = vld [vmem:[#allocation2 + $0xa5] sm:$0x1]
    %v1782 = vadd.f32 %v25, %v1778
    %v1783 = vadd.f32 %v26, %v1779
    %v1784 = vsel %vm36, %v1782, 0.0
    %1785 = vadd.xlane.f32.xlu0 %v1784
    %v1786 = vpop.xlane.xlu0 %1785
    %v1787 = vsel %vm36, %v1783, 0.0
    %1788 = vadd.xlane.f32.xlu0 %v1787
    %v1789 = vpop.xlane.xlu0 %1788
    %v1790 = vrcp.pop 32.0
    %v1791 = vmul.f32 %v1786, %v1790
    %v1792 = vmul.f32 %v1789, %v1790
    %v1793 = vsub.f32 %v1782, %v1791
    %v1794 = vsub.f32 %v1783, %v1792
    %v1795 = vmul.f32 %v1793, %v1793
    %v1796 = vmul.f32 %v1794, %v1794
    %v1797 = vsel %vm36, %v1795, 0.0
    %1798 = vadd.xlane.f32.xlu0 %v1797
    %v1799 = vpop.xlane.xlu0 %1798
    %v1800 = vsel %vm36, %v1796, 0.0
    %1801 = vadd.xlane.f32.xlu0 %v1800
    %v1802 = vpop.xlane.xlu0 %1801
    %v1803 = vmul.f32 %v1799, %v1790
    %v1804 = vmul.f32 %v1802, %v1790
    %v1805 = vadd.f32 %v1803, 1e-05
    %v1806 = vadd.f32 %v1804, 1e-05
    %v1807 = vrsqrt.pop %v1805
    %v1808 = vrsqrt.pop %v1806
    %v1809 = vmul.f32 %v1793, %v1807
    %v1810 = vmul.f32 %v1794, %v1808
    %v1811 = vlaneseq
    %v1812 = vshrl.u32 %v1811, 7
    %v1813 = vsub.s32 0, %v1812
    %v1814 = vrot.slane %v1780, %v1813
    %v1815 = vmul.f32 %v1809, %v1814
    %v1816 = vmul.f32 %v1810, %v1814
    %v1817 = vlaneseq
    %v1818 = vshrl.u32 %v1817, 7
    %v1819 = vsub.s32 0, %v1818
    %v1820 = vrot.slane %v1781, %v1819
    %v1821 = vadd.f32 %v1815, %v1820
    %v1822 = vadd.f32 %v1816, %v1820
    %v1823 = vld [vmem:[#allocation2 + $0x40] sm:$0xff]
    %v1824 = vld [vmem:[#allocation2 + $0x48] sm:$0xff]
    %v1825 = vld [vmem:[#allocation2 + $0x50] sm:$0xff]
    %v1826 = vld [vmem:[#allocation2 + $0x58] sm:$0xff]
    %v1827 = vld [vmem:[#allocation2 + $0xa2] sm:$0x1]
    %v1828 = vld [vmem:[#allocation2 + $0x60] sm:$0xff]
    %v1829 = vld [vmem:[#allocation2 + $0x68] sm:$0xff]
    %v1830 = vld [vmem:[#allocation2 + $0x70] sm:$0xff]
    %v1831 = vld [vmem:[#allocation2 + $0x78] sm:$0xff]
    %v1832 = vld [vmem:[#allocation2 + $0x80] sm:$0xff]
    %v1833 = vld [vmem:[#allocation2 + $0x88] sm:$0xff]
    %v1834 = vld [vmem:[#allocation2 + $0x90] sm:$0xff]
    %v1835 = vld [vmem:[#allocation2 + $0x98] sm:$0xff]
    %v1836 = vld [vmem:[#allocation2 + $0xa3] sm:$0x1]
    %v1837 = vlaneseq
    %v1838 = vshrl.u32 %v1837, 7
    %v1839 = vsub.s32 0, %v1838
    %v1840 = vrot.slane %v1827, %v1839
    %v1842 = vsel %vm36, %v1821, 0
    %v1845 = vsel %vm36, %v1822, 0
    %1847 = vmatprep.subr.mxu0 0.0
    %1848 = vmatpush1.msra.mxu0 0.0
    %1849 = vmatprep.subr.mxu0 0.0
    %1850 = vmatpush1.msra.mxu0 0.0
    %1851 = vmatprep.subr.mxu0 0.0
    %1852 = vmatpush1.msra.mxu0 0.0
    %1853 = vmatprep.subr.mxu0 0.0
    %1854 = vmatpush1.msra.mxu0 0.0
    %1855 = vmatprep.subr.mxu0 0.0
    %1856 = vmatpush1.msra.mxu0 0.0
    %1857 = vmatprep.subr.mxu0 0.0
    %1858 = vmatpush1.msra.mxu0 0.0
    %1859 = vmatprep.subr.mxu0 0.0
    %1860 = vmatpush1.msra.mxu0 0.0
    %1861 = vmatprep.subr.mxu0 0.0
    %1862 = vmatpush1.msra.mxu0 0.0
    %1863 = vmatprep.subr.mxu0 0.0
    %1864 = vmatpush1.msra.mxu0 0.0
    %1865 = vmatprep.subr.mxu0 0.0
    %1866 = vmatpush1.msra.mxu0 0.0
    %1867 = vmatprep.subr.mxu0 0.0
    %1868 = vmatpush1.msra.mxu0 0.0
    %1869 = vmatprep.subr.mxu0 0.0
    %1870 = vmatpush1.msra.mxu0 0.0
    %1871 = vmatprep.subr.mxu0 0.0
    %1872 = vmatpush1.msra.mxu0 %v1826
    %1873 = vmatprep.subr.mxu0 0.0
    %1874 = vmatpush1.msra.mxu0 %v1825
    %1875 = vmatprep.subr.mxu0 0.0
    %1876 = vmatpush1.msra.mxu0 %v1824
    %1877 = vmatprep.subr.mxu0 0.0
    %1878 = vmatpush1.msra.mxu0 %v1823
    %1879 = vmatprep.subr.mxu0 0.0
    %1880 = vmatpush2.msra.mxu0 0.0
    %1881 = vmatprep.subr.mxu0 0.0
    %1882 = vmatpush2.msra.mxu0 0.0
    %1883 = vmatprep.subr.mxu0 0.0
    %1884 = vmatpush2.msra.mxu0 0.0
    %1885 = vmatprep.subr.mxu0 0.0
    %1886 = vmatpush2.msra.mxu0 0.0
    %1887 = vmatprep.subr.mxu0 0.0
    %1888 = vmatpush2.msra.mxu0 0.0
    %1889 = vmatprep.subr.mxu0 0.0
    %1890 = vmatpush2.msra.mxu0 0.0
    %1891 = vmatprep.subr.mxu0 0.0
    %1892 = vmatpush2.msra.mxu0 0.0
    %1893 = vmatprep.subr.mxu0 0.0
    %1894 = vmatpush2.msra.mxu0 0.0
    %1895 = vmatprep.subr.mxu0 0.0
    %1896 = vmatpush2.msra.mxu0 0.0
    %1897 = vmatprep.subr.mxu0 0.0
    %1898 = vmatpush2.msra.mxu0 0.0
    %1899 = vmatprep.subr.mxu0 0.0
    %1900 = vmatpush2.msra.mxu0 0.0
    %1901 = vmatprep.subr.mxu0 0.0
    %1902 = vmatpush2.msra.mxu0 0.0
    %1903 = vmatprep.subr.mxu0 0.0
    %1904 = vmatpush2.msra.mxu0 0.0
    %1905 = vmatprep.subr.mxu0 0.0
    %1906 = vmatpush2.msra.mxu0 0.0
    %1907 = vmatprep.subr.mxu0 0.0
    %1908 = vmatpush2.msra.mxu0 0.0
    %1909 = vmatprep.subr.mxu0 0.0
    %1910 = vmatpush2.msra.mxu0 0.0
    %1911 = vmatprep.mubr.f32.mxu0 0.0
    %1912 = vmatmul.mubr.f32.gmra.mxu0 %v1842
    %v1913 = vpop.f32.mrf.mxu0
    %v1914 = vadd.f32 %v1840, %v1913
    %v1915 = vpop.f32.mrf.mxu0
    %1916 = vmatprep.mubr.f32.mxu0 0.0
    %1917 = vmatmul.mubr.f32.gmra.mxu0 %v1845
    %v1918 = vpop.f32.mrf.mxu0
    %v1919 = vadd.f32 %v1840, %v1918
    %v1920 = vpop.f32.mrf.mxu0
    %1921 = vdwg.mxu0
    %v1922 = vmax.f32 %v1914, 0.0
    %v1923 = vmax.f32 %v1919, 0.0
    %v1924 = vlaneseq
    %v1925 = vshrl.u32 %v1924, 7
    %v1926 = vsub.s32 0, %v1925
    %v1927 = vrot.slane %v1836, %v1926
    %vm1928 = vcmask 523264
    %v1930 = vsel %vm1928, %v1922, 0
    %v1933 = vsel %vm1928, %v1923, 0
    %1935 = vmatprep.subr.mxu0 0.0
    %1936 = vmatpush1.msra.mxu0 0.0
    %1937 = vmatprep.subr.mxu0 0.0
    %1938 = vmatpush1.msra.mxu0 0.0
    %1939 = vmatprep.subr.mxu0 0.0
    %1940 = vmatpush1.msra.mxu0 0.0
    %1941 = vmatprep.subr.mxu0 0.0
    %1942 = vmatpush1.msra.mxu0 0.0
    %1943 = vmatprep.subr.mxu0 0.0
    %1944 = vmatpush1.msra.mxu0 0.0
    %1945 = vmatprep.subr.mxu0 0.0
    %1946 = vmatpush1.msra.mxu0 0.0
    %1947 = vmatprep.subr.mxu0 0.0
    %1948 = vmatpush1.msra.mxu0 0.0
    %1949 = vmatprep.subr.mxu0 0.0
    %1950 = vmatpush1.msra.mxu0 0.0
    %1951 = vmatprep.subr.mxu0 0.0
    %1952 = vmatpush1.msra.mxu0 %v1835
    %1953 = vmatprep.subr.mxu0 0.0
    %1954 = vmatpush1.msra.mxu0 %v1834
    %1955 = vmatprep.subr.mxu0 0.0
    %1956 = vmatpush1.msra.mxu0 %v1833
    %1957 = vmatprep.subr.mxu0 0.0
    %1958 = vmatpush1.msra.mxu0 %v1832
    %1959 = vmatprep.subr.mxu0 0.0
    %1960 = vmatpush1.msra.mxu0 %v1831
    %1961 = vmatprep.subr.mxu0 0.0
    %1962 = vmatpush1.msra.mxu0 %v1830
    %1963 = vmatprep.subr.mxu0 0.0
    %1964 = vmatpush1.msra.mxu0 %v1829
    %1965 = vmatprep.subr.mxu0 0.0
    %1966 = vmatpush1.msra.mxu0 %v1828
    %1967 = vmatprep.subr.mxu0 0.0
    %1968 = vmatpush2.msra.mxu0 0.0
    %1969 = vmatprep.subr.mxu0 0.0
    %1970 = vmatpush2.msra.mxu0 0.0
    %1971 = vmatprep.subr.mxu0 0.0
    %1972 = vmatpush2.msra.mxu0 0.0
    %1973 = vmatprep.subr.mxu0 0.0
    %1974 = vmatpush2.msra.mxu0 0.0
    %1975 = vmatprep.subr.mxu0 0.0
    %1976 = vmatpush2.msra.mxu0 0.0
    %1977 = vmatprep.subr.mxu0 0.0
    %1978 = vmatpush2.msra.mxu0 0.0
    %1979 = vmatprep.subr.mxu0 0.0
    %1980 = vmatpush2.msra.mxu0 0.0
    %1981 = vmatprep.subr.mxu0 0.0
    %1982 = vmatpush2.msra.mxu0 0.0
    %1983 = vmatprep.subr.mxu0 0.0
    %1984 = vmatpush2.msra.mxu0 0.0
    %1985 = vmatprep.subr.mxu0 0.0
    %1986 = vmatpush2.msra.mxu0 0.0
    %1987 = vmatprep.subr.mxu0 0.0
    %1988 = vmatpush2.msra.mxu0 0.0
    %1989 = vmatprep.subr.mxu0 0.0
    %1990 = vmatpush2.msra.mxu0 0.0
    %1991 = vmatprep.subr.mxu0 0.0
    %1992 = vmatpush2.msra.mxu0 0.0
    %1993 = vmatprep.subr.mxu0 0.0
    %1994 = vmatpush2.msra.mxu0 0.0
    %1995 = vmatprep.subr.mxu0 0.0
    %1996 = vmatpush2.msra.mxu0 0.0
    %1997 = vmatprep.subr.mxu0 0.0
    %1998 = vmatpush2.msra.mxu0 0.0
    %1999 = vmatprep.mubr.f32.mxu0 0.0
    %2000 = vmatmul.mubr.f32.gmra.mxu0 %v1930
    %v2001 = vpop.f32.mrf.mxu0
    %v2002 = vadd.f32 %v1927, %v2001
    %v2003 = vpop.f32.mrf.mxu0
    %2004 = vmatprep.mubr.f32.mxu0 0.0
    %2005 = vmatmul.mubr.f32.gmra.mxu0 %v1933
    %v2006 = vpop.f32.mrf.mxu0
    %v2007 = vadd.f32 %v1927, %v2006
    %v2008 = vpop.f32.mrf.mxu0
    %2009 = vdwg.mxu0
    %v2010 = vld [vmem:[#allocation2 + $0xa6] sm:$0x1]
    %v2011 = vld [vmem:[#allocation2 + $0xa7] sm:$0x1]
    %v2012 = vadd.f32 %v1821, %v2002
    %v2013 = vadd.f32 %v1822, %v2007
    %v2014 = vsel %vm36, %v2012, 0.0
    %2015 = vadd.xlane.f32.xlu0 %v2014
    %v2016 = vpop.xlane.xlu0 %2015
    %v2017 = vsel %vm36, %v2013, 0.0
    %2018 = vadd.xlane.f32.xlu0 %v2017
    %v2019 = vpop.xlane.xlu0 %2018
    %v2020 = vmul.f32 %v2016, %v1790
    %v2021 = vmul.f32 %v2019, %v1790
    %v2022 = vsub.f32 %v2012, %v2020
    %v2023 = vsub.f32 %v2013, %v2021
    %v2024 = vmul.f32 %v2022, %v2022
    %v2025 = vmul.f32 %v2023, %v2023
    %v2026 = vsel %vm36, %v2024, 0.0
    %2027 = vadd.xlane.f32.xlu0 %v2026
    %v2028 = vpop.xlane.xlu0 %2027
    %v2029 = vsel %vm36, %v2025, 0.0
    %2030 = vadd.xlane.f32.xlu0 %v2029
    %v2031 = vpop.xlane.xlu0 %2030
    %v2032 = vmul.f32 %v2028, %v1790
    %v2033 = vmul.f32 %v2031, %v1790
    %v2034 = vadd.f32 %v2032, 1e-05
    %v2035 = vadd.f32 %v2033, 1e-05
    %v2036 = vrsqrt.pop %v2034
    %v2037 = vrsqrt.pop %v2035
    %v2038 = vmul.f32 %v2022, %v2036
    %v2039 = vmul.f32 %v2023, %v2037
    %v2040 = vlaneseq
    %v2041 = vshrl.u32 %v2040, 7
    %v2042 = vsub.s32 0, %v2041
    %v2043 = vrot.slane %v2010, %v2042
    %v2044 = vmul.f32 %v2038, %v2043
    %v2045 = vmul.f32 %v2039, %v2043
    %v2046 = vlaneseq
    %v2047 = vshrl.u32 %v2046, 7
    %v2048 = vsub.s32 0, %v2047
    %v2049 = vrot.slane %v2011, %v2048
    %v2050 = vadd.f32 %v2044, %v2049
    %v2051 = vadd.f32 %v2045, %v2049
    %v2052 = vld [vmem:[#allocation2 + $0xa8] sm:$0xff]
    %v2053 = vld [vmem:[#allocation2 + $0xb0] sm:$0xff]
    %v2054 = vld [vmem:[#allocation2 + $0xb8] sm:$0xff]
    %v2055 = vld [vmem:[#allocation2 + $0xc0] sm:$0xff]
    %v2056 = vld [vmem:[#allocation2 + $0x148] sm:$0x1]
    %v2057 = vlaneseq
    %v2058 = vshrl.u32 %v2057, 7
    %v2059 = vsub.s32 0, %v2058
    %v2060 = vrot.slane %v2056, %v2059
    %v2062 = vsel %vm36, %v2050, 0
    %v2065 = vsel %vm36, %v2051, 0
    %2067 = vmatprep.subr.mxu0 0.0
    %2068 = vmatpush1.msra.mxu0 0.0
    %2069 = vmatprep.subr.mxu0 0.0
    %2070 = vmatpush1.msra.mxu0 0.0
    %2071 = vmatprep.subr.mxu0 0.0
    %2072 = vmatpush1.msra.mxu0 0.0
    %2073 = vmatprep.subr.mxu0 0.0
    %2074 = vmatpush1.msra.mxu0 0.0
    %2075 = vmatprep.subr.mxu0 0.0
    %2076 = vmatpush1.msra.mxu0 0.0
    %2077 = vmatprep.subr.mxu0 0.0
    %2078 = vmatpush1.msra.mxu0 0.0
    %2079 = vmatprep.subr.mxu0 0.0
    %2080 = vmatpush1.msra.mxu0 0.0
    %2081 = vmatprep.subr.mxu0 0.0
    %2082 = vmatpush1.msra.mxu0 0.0
    %2083 = vmatprep.subr.mxu0 0.0
    %2084 = vmatpush1.msra.mxu0 0.0
    %2085 = vmatprep.subr.mxu0 0.0
    %2086 = vmatpush1.msra.mxu0 0.0
    %2087 = vmatprep.subr.mxu0 0.0
    %2088 = vmatpush1.msra.mxu0 0.0
    %2089 = vmatprep.subr.mxu0 0.0
    %2090 = vmatpush1.msra.mxu0 0.0
    %2091 = vmatprep.subr.mxu0 0.0
    %2092 = vmatpush1.msra.mxu0 %v2055
    %2093 = vmatprep.subr.mxu0 0.0
    %2094 = vmatpush1.msra.mxu0 %v2054
    %2095 = vmatprep.subr.mxu0 0.0
    %2096 = vmatpush1.msra.mxu0 %v2053
    %2097 = vmatprep.subr.mxu0 0.0
    %2098 = vmatpush1.msra.mxu0 %v2052
    %2099 = vmatprep.subr.mxu0 0.0
    %2100 = vmatpush2.msra.mxu0 0.0
    %2101 = vmatprep.subr.mxu0 0.0
    %2102 = vmatpush2.msra.mxu0 0.0
    %2103 = vmatprep.subr.mxu0 0.0
    %2104 = vmatpush2.msra.mxu0 0.0
    %2105 = vmatprep.subr.mxu0 0.0
    %2106 = vmatpush2.msra.mxu0 0.0
    %2107 = vmatprep.subr.mxu0 0.0
    %2108 = vmatpush2.msra.mxu0 0.0
    %2109 = vmatprep.subr.mxu0 0.0
    %2110 = vmatpush2.msra.mxu0 0.0
    %2111 = vmatprep.subr.mxu0 0.0
    %2112 = vmatpush2.msra.mxu0 0.0
    %2113 = vmatprep.subr.mxu0 0.0
    %2114 = vmatpush2.msra.mxu0 0.0
    %2115 = vmatprep.subr.mxu0 0.0
    %2116 = vmatpush2.msra.mxu0 0.0
    %2117 = vmatprep.subr.mxu0 0.0
    %2118 = vmatpush2.msra.mxu0 0.0
    %2119 = vmatprep.subr.mxu0 0.0
    %2120 = vmatpush2.msra.mxu0 0.0
    %2121 = vmatprep.subr.mxu0 0.0
    %2122 = vmatpush2.msra.mxu0 0.0
    %2123 = vmatprep.subr.mxu0 0.0
    %2124 = vmatpush2.msra.mxu0 0.0
    %2125 = vmatprep.subr.mxu0 0.0
    %2126 = vmatpush2.msra.mxu0 0.0
    %2127 = vmatprep.subr.mxu0 0.0
    %2128 = vmatpush2.msra.mxu0 0.0
    %2129 = vmatprep.subr.mxu0 0.0
    %2130 = vmatpush2.msra.mxu0 0.0
    %2131 = vmatprep.mubr.f32.mxu0 0.0
    %2132 = vmatmul.mubr.f32.gmra.mxu0 %v2062
    %v2133 = vpop.f32.mrf.mxu0
    %v2134 = vadd.f32 %v2060, %v2133
    %v2135 = vpop.f32.mrf.mxu0
    %2136 = vmatprep.mubr.f32.mxu0 0.0
    %2137 = vmatmul.mubr.f32.gmra.mxu0 %v2065
    %v2138 = vpop.f32.mrf.mxu0
    %v2139 = vadd.f32 %v2060, %v2138
    %v2140 = vpop.f32.mrf.mxu0
    %2141 = vdwg.mxu0
    %v2142 = vld [vmem:[#allocation2 + $0xc8] sm:$0xff]
    %v2143 = vmul.f32 %v2134, 0.35355338
    %2145 = vrot.lane.b32.xlu0 %v2134, 96
    %v2146 = vpop.permute.xlu0 %2145
    %v2148 = vsel %vm123, %v2143, 0
    %v2150 = vsel %vm123, %v2146, 0
    %2152 = vmatprep.subr.mxu0 0.0
    %2153 = vmatpush1.xpose.msra.mxu0 0.0
    %2154 = vmatprep.subr.mxu0 0.0
    %2155 = vmatpush1.xpose.msra.mxu0 0.0
    %2156 = vmatprep.subr.mxu0 0.0
    %2157 = vmatpush1.xpose.msra.mxu0 0.0
    %2158 = vmatprep.subr.mxu0 0.0
    %2159 = vmatpush1.xpose.msra.mxu0 0.0
    %2160 = vmatprep.subr.mxu0 0.0
    %2161 = vmatpush1.xpose.msra.mxu0 0.0
    %2162 = vmatprep.subr.mxu0 0.0
    %2163 = vmatpush1.xpose.msra.mxu0 0.0
    %2164 = vmatprep.subr.mxu0 0.0
    %2165 = vmatpush1.xpose.msra.mxu0 0.0
    %2166 = vmatprep.subr.mxu0 0.0
    %2167 = vmatpush1.xpose.msra.mxu0 0.0
    %2168 = vmatprep.subr.mxu0 0.0
    %2169 = vmatpush1.xpose.msra.mxu0 0.0
    %2170 = vmatprep.subr.mxu0 0.0
    %2171 = vmatpush1.xpose.msra.mxu0 0.0
    %2172 = vmatprep.subr.mxu0 0.0
    %2173 = vmatpush1.xpose.msra.mxu0 0.0
    %2174 = vmatprep.subr.mxu0 0.0
    %2175 = vmatpush1.xpose.msra.mxu0 0.0
    %2176 = vmatprep.subr.mxu0 0.0
    %2177 = vmatpush1.xpose.msra.mxu0 0.0
    %2178 = vmatprep.subr.mxu0 0.0
    %2179 = vmatpush1.xpose.msra.mxu0 0.0
    %2180 = vmatprep.subr.mxu0 0.0
    %2181 = vmatpush1.xpose.msra.mxu0 0.0
    %2182 = vmatprep.subr.mxu0 0.0
    %2183 = vmatpush1.xpose.msra.mxu0 %v2150
    %2184 = vmatprep.subr.mxu0 0.0
    %2185 = vmatpush2.xpose.msra.mxu0 0.0
    %2186 = vmatprep.subr.mxu0 0.0
    %2187 = vmatpush2.xpose.msra.mxu0 0.0
    %2188 = vmatprep.subr.mxu0 0.0
    %2189 = vmatpush2.xpose.msra.mxu0 0.0
    %2190 = vmatprep.subr.mxu0 0.0
    %2191 = vmatpush2.xpose.msra.mxu0 0.0
    %2192 = vmatprep.subr.mxu0 0.0
    %2193 = vmatpush2.xpose.msra.mxu0 0.0
    %2194 = vmatprep.subr.mxu0 0.0
    %2195 = vmatpush2.xpose.msra.mxu0 0.0
    %2196 = vmatprep.subr.mxu0 0.0
    %2197 = vmatpush2.xpose.msra.mxu0 0.0
    %2198 = vmatprep.subr.mxu0 0.0
    %2199 = vmatpush2.xpose.msra.mxu0 0.0
    %2200 = vmatprep.subr.mxu0 0.0
    %2201 = vmatpush2.xpose.msra.mxu0 0.0
    %2202 = vmatprep.subr.mxu0 0.0
    %2203 = vmatpush2.xpose.msra.mxu0 0.0
    %2204 = vmatprep.subr.mxu0 0.0
    %2205 = vmatpush2.xpose.msra.mxu0 0.0
    %2206 = vmatprep.subr.mxu0 0.0
    %2207 = vmatpush2.xpose.msra.mxu0 0.0
    %2208 = vmatprep.subr.mxu0 0.0
    %2209 = vmatpush2.xpose.msra.mxu0 0.0
    %2210 = vmatprep.subr.mxu0 0.0
    %2211 = vmatpush2.xpose.msra.mxu0 0.0
    %2212 = vmatprep.subr.mxu0 0.0
    %2213 = vmatpush2.xpose.msra.mxu0 0.0
    %2214 = vmatprep.subr.mxu0 0.0
    %2215 = vmatpush2.xpose.msra.mxu0 0.0
    %2216 = vmatprep.mubr.f32.mxu0 0.0
    %2217 = vmatmul.mubr.f32.gmra.mxu0 %v2148
    %v2218 = vpop.f32.mrf.mxu0
    %v2219 = vadd.f32 0.0, %v2218
    %v2220 = vpop.f32.mrf.mxu0
    %2221 = vdwg.mxu0
    %v2222 = vsel %vm123, %v2219, -inf
    %2223 = vmax.xlane.f32.xlu0 %v2222
    %v2224 = vpop.xlane.xlu0 %2223
    %v2225 = vsub.f32 %v2219, %v2224
    %v2226 = vmul.f32 %v2225, 1.442695
    %v2227 = vpow.pop %v2226
    %v2228 = vsel %vm123, %v2227, 0.0
    %2229 = vadd.xlane.f32.xlu0 %v2228
    %v2230 = vpop.xlane.xlu0 %2229
    %v2231 = vrcp.pop %v2230
    %v2232 = vmul.f32 %v2227, %v2231
    %2233 = vrot.lane.b32.xlu0 %v2134, 64
    %v2234 = vpop.permute.xlu0 %2233
    %v2237 = vsel %vm123, %v2232, 0
    %2239 = vmatprep.subr.mxu0 0.0
    %2240 = vmatpush1.msra.mxu0 0.0
    %2241 = vmatprep.subr.mxu0 0.0
    %2242 = vmatpush1.msra.mxu0 0.0
    %2243 = vmatprep.subr.mxu0 0.0
    %2244 = vmatpush1.msra.mxu0 0.0
    %2245 = vmatprep.subr.mxu0 0.0
    %2246 = vmatpush1.msra.mxu0 0.0
    %2247 = vmatprep.subr.mxu0 0.0
    %2248 = vmatpush1.msra.mxu0 0.0
    %2249 = vmatprep.subr.mxu0 0.0
    %2250 = vmatpush1.msra.mxu0 0.0
    %2251 = vmatprep.subr.mxu0 0.0
    %2252 = vmatpush1.msra.mxu0 0.0
    %2253 = vmatprep.subr.mxu0 0.0
    %2254 = vmatpush1.msra.mxu0 0.0
    %2255 = vmatprep.subr.mxu0 0.0
    %2256 = vmatpush1.msra.mxu0 0.0
    %2257 = vmatprep.subr.mxu0 0.0
    %2258 = vmatpush1.msra.mxu0 0.0
    %2259 = vmatprep.subr.mxu0 0.0
    %2260 = vmatpush1.msra.mxu0 0.0
    %2261 = vmatprep.subr.mxu0 0.0
    %2262 = vmatpush1.msra.mxu0 0.0
    %2263 = vmatprep.subr.mxu0 0.0
    %2264 = vmatpush1.msra.mxu0 0.0
    %2265 = vmatprep.subr.mxu0 0.0
    %2266 = vmatpush1.msra.mxu0 0.0
    %2267 = vmatprep.subr.mxu0 0.0
    %2268 = vmatpush1.msra.mxu0 0.0
    %2269 = vmatprep.subr.mxu0 0.0
    %2270 = vmatpush1.msra.mxu0 %v2234
    %2271 = vmatprep.subr.mxu0 0.0
    %2272 = vmatpush2.msra.mxu0 0.0
    %2273 = vmatprep.subr.mxu0 0.0
    %2274 = vmatpush2.msra.mxu0 0.0
    %2275 = vmatprep.subr.mxu0 0.0
    %2276 = vmatpush2.msra.mxu0 0.0
    %2277 = vmatprep.subr.mxu0 0.0
    %2278 = vmatpush2.msra.mxu0 0.0
    %2279 = vmatprep.subr.mxu0 0.0
    %2280 = vmatpush2.msra.mxu0 0.0
    %2281 = vmatprep.subr.mxu0 0.0
    %2282 = vmatpush2.msra.mxu0 0.0
    %2283 = vmatprep.subr.mxu0 0.0
    %2284 = vmatpush2.msra.mxu0 0.0
    %2285 = vmatprep.subr.mxu0 0.0
    %2286 = vmatpush2.msra.mxu0 0.0
    %2287 = vmatprep.subr.mxu0 0.0
    %2288 = vmatpush2.msra.mxu0 0.0
    %2289 = vmatprep.subr.mxu0 0.0
    %2290 = vmatpush2.msra.mxu0 0.0
    %2291 = vmatprep.subr.mxu0 0.0
    %2292 = vmatpush2.msra.mxu0 0.0
    %2293 = vmatprep.subr.mxu0 0.0
    %2294 = vmatpush2.msra.mxu0 0.0
    %2295 = vmatprep.subr.mxu0 0.0
    %2296 = vmatpush2.msra.mxu0 0.0
    %2297 = vmatprep.subr.mxu0 0.0
    %2298 = vmatpush2.msra.mxu0 0.0
    %2299 = vmatprep.subr.mxu0 0.0
    %2300 = vmatpush2.msra.mxu0 0.0
    %2301 = vmatprep.subr.mxu0 0.0
    %2302 = vmatpush2.msra.mxu0 0.0
    %2303 = vmatprep.mubr.f32.mxu0 0.0
    %2304 = vmatmul.mubr.f32.gmra.mxu0 %v2237
    %v2305 = vpop.f32.mrf.mxu0
    %v2306 = vadd.f32 0.0, %v2305
    %v2307 = vpop.f32.mrf.mxu0
    %2308 = vdwg.mxu0
    %v2309 = vmul.f32 %v2139, 0.35355338
    %2311 = vrot.lane.b32.xlu0 %v2139, 96
    %v2312 = vpop.permute.xlu0 %2311
    %v2314 = vsel %vm123, %v2309, 0
    %v2316 = vsel %vm123, %v2312, 0
    %2318 = vmatprep.subr.mxu0 0.0
    %2319 = vmatpush1.xpose.msra.mxu0 0.0
    %2320 = vmatprep.subr.mxu0 0.0
    %2321 = vmatpush1.xpose.msra.mxu0 0.0
    %2322 = vmatprep.subr.mxu0 0.0
    %2323 = vmatpush1.xpose.msra.mxu0 0.0
    %2324 = vmatprep.subr.mxu0 0.0
    %2325 = vmatpush1.xpose.msra.mxu0 0.0
    %2326 = vmatprep.subr.mxu0 0.0
    %2327 = vmatpush1.xpose.msra.mxu0 0.0
    %2328 = vmatprep.subr.mxu0 0.0
    %2329 = vmatpush1.xpose.msra.mxu0 0.0
    %2330 = vmatprep.subr.mxu0 0.0
    %2331 = vmatpush1.xpose.msra.mxu0 0.0
    %2332 = vmatprep.subr.mxu0 0.0
    %2333 = vmatpush1.xpose.msra.mxu0 0.0
    %2334 = vmatprep.subr.mxu0 0.0
    %2335 = vmatpush1.xpose.msra.mxu0 0.0
    %2336 = vmatprep.subr.mxu0 0.0
    %2337 = vmatpush1.xpose.msra.mxu0 0.0
    %2338 = vmatprep.subr.mxu0 0.0
    %2339 = vmatpush1.xpose.msra.mxu0 0.0
    %2340 = vmatprep.subr.mxu0 0.0
    %2341 = vmatpush1.xpose.msra.mxu0 0.0
    %2342 = vmatprep.subr.mxu0 0.0
    %2343 = vmatpush1.xpose.msra.mxu0 0.0
    %2344 = vmatprep.subr.mxu0 0.0
    %2345 = vmatpush1.xpose.msra.mxu0 0.0
    %2346 = vmatprep.subr.mxu0 0.0
    %2347 = vmatpush1.xpose.msra.mxu0 0.0
    %2348 = vmatprep.subr.mxu0 0.0
    %2349 = vmatpush1.xpose.msra.mxu0 %v2316
    %2350 = vmatprep.subr.mxu0 0.0
    %2351 = vmatpush2.xpose.msra.mxu0 0.0
    %2352 = vmatprep.subr.mxu0 0.0
    %2353 = vmatpush2.xpose.msra.mxu0 0.0
    %2354 = vmatprep.subr.mxu0 0.0
    %2355 = vmatpush2.xpose.msra.mxu0 0.0
    %2356 = vmatprep.subr.mxu0 0.0
    %2357 = vmatpush2.xpose.msra.mxu0 0.0
    %2358 = vmatprep.subr.mxu0 0.0
    %2359 = vmatpush2.xpose.msra.mxu0 0.0
    %2360 = vmatprep.subr.mxu0 0.0
    %2361 = vmatpush2.xpose.msra.mxu0 0.0
    %2362 = vmatprep.subr.mxu0 0.0
    %2363 = vmatpush2.xpose.msra.mxu0 0.0
    %2364 = vmatprep.subr.mxu0 0.0
    %2365 = vmatpush2.xpose.msra.mxu0 0.0
    %2366 = vmatprep.subr.mxu0 0.0
    %2367 = vmatpush2.xpose.msra.mxu0 0.0
    %2368 = vmatprep.subr.mxu0 0.0
    %2369 = vmatpush2.xpose.msra.mxu0 0.0
    %2370 = vmatprep.subr.mxu0 0.0
    %2371 = vmatpush2.xpose.msra.mxu0 0.0
    %2372 = vmatprep.subr.mxu0 0.0
    %2373 = vmatpush2.xpose.msra.mxu0 0.0
    %2374 = vmatprep.subr.mxu0 0.0
    %2375 = vmatpush2.xpose.msra.mxu0 0.0
    %2376 = vmatprep.subr.mxu0 0.0
    %2377 = vmatpush2.xpose.msra.mxu0 0.0
    %2378 = vmatprep.subr.mxu0 0.0
    %2379 = vmatpush2.xpose.msra.mxu0 0.0
    %2380 = vmatprep.subr.mxu0 0.0
    %2381 = vmatpush2.xpose.msra.mxu0 0.0
    %2382 = vmatprep.mubr.f32.mxu0 0.0
    %2383 = vmatmul.mubr.f32.gmra.mxu0 %v2314
    %v2384 = vpop.f32.mrf.mxu0
    %v2385 = vadd.f32 0.0, %v2384
    %v2386 = vpop.f32.mrf.mxu0
    %2387 = vdwg.mxu0
    %v2388 = vsel %vm123, %v2385, -inf
    %2389 = vmax.xlane.f32.xlu0 %v2388
    %v2390 = vpop.xlane.xlu0 %2389
    %v2391 = vsub.f32 %v2385, %v2390
    %v2392 = vmul.f32 %v2391, 1.442695
    %v2393 = vpow.pop %v2392
    %v2394 = vsel %vm123, %v2393, 0.0
    %2395 = vadd.xlane.f32.xlu0 %v2394
    %v2396 = vpop.xlane.xlu0 %2395
    %v2397 = vrcp.pop %v2396
    %v2398 = vmul.f32 %v2393, %v2397
    %2399 = vrot.lane.b32.xlu0 %v2139, 64
    %v2400 = vpop.permute.xlu0 %2399
    %v2403 = vsel %vm123, %v2398, 0
    %2405 = vmatprep.subr.mxu0 0.0
    %2406 = vmatpush1.msra.mxu0 0.0
    %2407 = vmatprep.subr.mxu0 0.0
    %2408 = vmatpush1.msra.mxu0 0.0
    %2409 = vmatprep.subr.mxu0 0.0
    %2410 = vmatpush1.msra.mxu0 0.0
    %2411 = vmatprep.subr.mxu0 0.0
    %2412 = vmatpush1.msra.mxu0 0.0
    %2413 = vmatprep.subr.mxu0 0.0
    %2414 = vmatpush1.msra.mxu0 0.0
    %2415 = vmatprep.subr.mxu0 0.0
    %2416 = vmatpush1.msra.mxu0 0.0
    %2417 = vmatprep.subr.mxu0 0.0
    %2418 = vmatpush1.msra.mxu0 0.0
    %2419 = vmatprep.subr.mxu0 0.0
    %2420 = vmatpush1.msra.mxu0 0.0
    %2421 = vmatprep.subr.mxu0 0.0
    %2422 = vmatpush1.msra.mxu0 0.0
    %2423 = vmatprep.subr.mxu0 0.0
    %2424 = vmatpush1.msra.mxu0 0.0
    %2425 = vmatprep.subr.mxu0 0.0
    %2426 = vmatpush1.msra.mxu0 0.0
    %2427 = vmatprep.subr.mxu0 0.0
    %2428 = vmatpush1.msra.mxu0 0.0
    %2429 = vmatprep.subr.mxu0 0.0
    %2430 = vmatpush1.msra.mxu0 0.0
    %2431 = vmatprep.subr.mxu0 0.0
    %2432 = vmatpush1.msra.mxu0 0.0
    %2433 = vmatprep.subr.mxu0 0.0
    %2434 = vmatpush1.msra.mxu0 0.0
    %2435 = vmatprep.subr.mxu0 0.0
    %2436 = vmatpush1.msra.mxu0 %v2400
    %2437 = vmatprep.subr.mxu0 0.0
    %2438 = vmatpush2.msra.mxu0 0.0
    %2439 = vmatprep.subr.mxu0 0.0
    %2440 = vmatpush2.msra.mxu0 0.0
    %2441 = vmatprep.subr.mxu0 0.0
    %2442 = vmatpush2.msra.mxu0 0.0
    %2443 = vmatprep.subr.mxu0 0.0
    %2444 = vmatpush2.msra.mxu0 0.0
    %2445 = vmatprep.subr.mxu0 0.0
    %2446 = vmatpush2.msra.mxu0 0.0
    %2447 = vmatprep.subr.mxu0 0.0
    %2448 = vmatpush2.msra.mxu0 0.0
    %2449 = vmatprep.subr.mxu0 0.0
    %2450 = vmatpush2.msra.mxu0 0.0
    %2451 = vmatprep.subr.mxu0 0.0
    %2452 = vmatpush2.msra.mxu0 0.0
    %2453 = vmatprep.subr.mxu0 0.0
    %2454 = vmatpush2.msra.mxu0 0.0
    %2455 = vmatprep.subr.mxu0 0.0
    %2456 = vmatpush2.msra.mxu0 0.0
    %2457 = vmatprep.subr.mxu0 0.0
    %2458 = vmatpush2.msra.mxu0 0.0
    %2459 = vmatprep.subr.mxu0 0.0
    %2460 = vmatpush2.msra.mxu0 0.0
    %2461 = vmatprep.subr.mxu0 0.0
    %2462 = vmatpush2.msra.mxu0 0.0
    %2463 = vmatprep.subr.mxu0 0.0
    %2464 = vmatpush2.msra.mxu0 0.0
    %2465 = vmatprep.subr.mxu0 0.0
    %2466 = vmatpush2.msra.mxu0 0.0
    %2467 = vmatprep.subr.mxu0 0.0
    %2468 = vmatpush2.msra.mxu0 0.0
    %2469 = vmatprep.mubr.f32.mxu0 0.0
    %2470 = vmatmul.mubr.f32.gmra.mxu0 %v2403
    %v2471 = vpop.f32.mrf.mxu0
    %v2472 = vadd.f32 0.0, %v2471
    %v2473 = vpop.f32.mrf.mxu0
    %2474 = vdwg.mxu0
    %v2475 = vld [vmem:[#allocation2 + $0xd0] sm:$0xff]
    %2476 = vrot.lane.b32.xlu0 %v2143, 120
    %v2477 = vpop.permute.xlu0 %2476
    %2478 = vrot.lane.b32.xlu0 %v2134, 88
    %v2479 = vpop.permute.xlu0 %2478
    %v2480 = vsel %vm123, %v2477, 0
    %v2482 = vsel %vm123, %v2479, 0
    %2484 = vmatprep.subr.mxu0 0.0
    %2485 = vmatpush1.xpose.msra.mxu0 0.0
    %2486 = vmatprep.subr.mxu0 0.0
    %2487 = vmatpush1.xpose.msra.mxu0 0.0
    %2488 = vmatprep.subr.mxu0 0.0
    %2489 = vmatpush1.xpose.msra.mxu0 0.0
    %2490 = vmatprep.subr.mxu0 0.0
    %2491 = vmatpush1.xpose.msra.mxu0 0.0
    %2492 = vmatprep.subr.mxu0 0.0
    %2493 = vmatpush1.xpose.msra.mxu0 0.0
    %2494 = vmatprep.subr.mxu0 0.0
    %2495 = vmatpush1.xpose.msra.mxu0 0.0
    %2496 = vmatprep.subr.mxu0 0.0
    %2497 = vmatpush1.xpose.msra.mxu0 0.0
    %2498 = vmatprep.subr.mxu0 0.0
    %2499 = vmatpush1.xpose.msra.mxu0 0.0
    %2500 = vmatprep.subr.mxu0 0.0
    %2501 = vmatpush1.xpose.msra.mxu0 0.0
    %2502 = vmatprep.subr.mxu0 0.0
    %2503 = vmatpush1.xpose.msra.mxu0 0.0
    %2504 = vmatprep.subr.mxu0 0.0
    %2505 = vmatpush1.xpose.msra.mxu0 0.0
    %2506 = vmatprep.subr.mxu0 0.0
    %2507 = vmatpush1.xpose.msra.mxu0 0.0
    %2508 = vmatprep.subr.mxu0 0.0
    %2509 = vmatpush1.xpose.msra.mxu0 0.0
    %2510 = vmatprep.subr.mxu0 0.0
    %2511 = vmatpush1.xpose.msra.mxu0 0.0
    %2512 = vmatprep.subr.mxu0 0.0
    %2513 = vmatpush1.xpose.msra.mxu0 0.0
    %2514 = vmatprep.subr.mxu0 0.0
    %2515 = vmatpush1.xpose.msra.mxu0 %v2482
    %2516 = vmatprep.subr.mxu0 0.0
    %2517 = vmatpush2.xpose.msra.mxu0 0.0
    %2518 = vmatprep.subr.mxu0 0.0
    %2519 = vmatpush2.xpose.msra.mxu0 0.0
    %2520 = vmatprep.subr.mxu0 0.0
    %2521 = vmatpush2.xpose.msra.mxu0 0.0
    %2522 = vmatprep.subr.mxu0 0.0
    %2523 = vmatpush2.xpose.msra.mxu0 0.0
    %2524 = vmatprep.subr.mxu0 0.0
    %2525 = vmatpush2.xpose.msra.mxu0 0.0
    %2526 = vmatprep.subr.mxu0 0.0
    %2527 = vmatpush2.xpose.msra.mxu0 0.0
    %2528 = vmatprep.subr.mxu0 0.0
    %2529 = vmatpush2.xpose.msra.mxu0 0.0
    %2530 = vmatprep.subr.mxu0 0.0
    %2531 = vmatpush2.xpose.msra.mxu0 0.0
    %2532 = vmatprep.subr.mxu0 0.0
    %2533 = vmatpush2.xpose.msra.mxu0 0.0
    %2534 = vmatprep.subr.mxu0 0.0
    %2535 = vmatpush2.xpose.msra.mxu0 0.0
    %2536 = vmatprep.subr.mxu0 0.0
    %2537 = vmatpush2.xpose.msra.mxu0 0.0
    %2538 = vmatprep.subr.mxu0 0.0
    %2539 = vmatpush2.xpose.msra.mxu0 0.0
    %2540 = vmatprep.subr.mxu0 0.0
    %2541 = vmatpush2.xpose.msra.mxu0 0.0
    %2542 = vmatprep.subr.mxu0 0.0
    %2543 = vmatpush2.xpose.msra.mxu0 0.0
    %2544 = vmatprep.subr.mxu0 0.0
    %2545 = vmatpush2.xpose.msra.mxu0 0.0
    %2546 = vmatprep.subr.mxu0 0.0
    %2547 = vmatpush2.xpose.msra.mxu0 0.0
    %2548 = vmatprep.mubr.f32.mxu0 0.0
    %2549 = vmatmul.mubr.f32.gmra.mxu0 %v2480
    %v2550 = vpop.f32.mrf.mxu0
    %v2551 = vadd.f32 0.0, %v2550
    %v2552 = vpop.f32.mrf.mxu0
    %2553 = vdwg.mxu0
    %v2554 = vsel %vm123, %v2551, -inf
    %2555 = vmax.xlane.f32.xlu0 %v2554
    %v2556 = vpop.xlane.xlu0 %2555
    %v2557 = vsub.f32 %v2551, %v2556
    %v2558 = vmul.f32 %v2557, 1.442695
    %v2559 = vpow.pop %v2558
    %v2560 = vsel %vm123, %v2559, 0.0
    %2561 = vadd.xlane.f32.xlu0 %v2560
    %v2562 = vpop.xlane.xlu0 %2561
    %v2563 = vrcp.pop %v2562
    %v2564 = vmul.f32 %v2559, %v2563
    %2565 = vrot.lane.b32.xlu0 %v2134, 56
    %v2566 = vpop.permute.xlu0 %2565
    %v2569 = vsel %vm123, %v2564, 0
    %2571 = vmatprep.subr.mxu0 0.0
    %2572 = vmatpush1.msra.mxu0 0.0
    %2573 = vmatprep.subr.mxu0 0.0
    %2574 = vmatpush1.msra.mxu0 0.0
    %2575 = vmatprep.subr.mxu0 0.0
    %2576 = vmatpush1.msra.mxu0 0.0
    %2577 = vmatprep.subr.mxu0 0.0
    %2578 = vmatpush1.msra.mxu0 0.0
    %2579 = vmatprep.subr.mxu0 0.0
    %2580 = vmatpush1.msra.mxu0 0.0
    %2581 = vmatprep.subr.mxu0 0.0
    %2582 = vmatpush1.msra.mxu0 0.0
    %2583 = vmatprep.subr.mxu0 0.0
    %2584 = vmatpush1.msra.mxu0 0.0
    %2585 = vmatprep.subr.mxu0 0.0
    %2586 = vmatpush1.msra.mxu0 0.0
    %2587 = vmatprep.subr.mxu0 0.0
    %2588 = vmatpush1.msra.mxu0 0.0
    %2589 = vmatprep.subr.mxu0 0.0
    %2590 = vmatpush1.msra.mxu0 0.0
    %2591 = vmatprep.subr.mxu0 0.0
    %2592 = vmatpush1.msra.mxu0 0.0
    %2593 = vmatprep.subr.mxu0 0.0
    %2594 = vmatpush1.msra.mxu0 0.0
    %2595 = vmatprep.subr.mxu0 0.0
    %2596 = vmatpush1.msra.mxu0 0.0
    %2597 = vmatprep.subr.mxu0 0.0
    %2598 = vmatpush1.msra.mxu0 0.0
    %2599 = vmatprep.subr.mxu0 0.0
    %2600 = vmatpush1.msra.mxu0 0.0
    %2601 = vmatprep.subr.mxu0 0.0
    %2602 = vmatpush1.msra.mxu0 %v2566
    %2603 = vmatprep.subr.mxu0 0.0
    %2604 = vmatpush2.msra.mxu0 0.0
    %2605 = vmatprep.subr.mxu0 0.0
    %2606 = vmatpush2.msra.mxu0 0.0
    %2607 = vmatprep.subr.mxu0 0.0
    %2608 = vmatpush2.msra.mxu0 0.0
    %2609 = vmatprep.subr.mxu0 0.0
    %2610 = vmatpush2.msra.mxu0 0.0
    %2611 = vmatprep.subr.mxu0 0.0
    %2612 = vmatpush2.msra.mxu0 0.0
    %2613 = vmatprep.subr.mxu0 0.0
    %2614 = vmatpush2.msra.mxu0 0.0
    %2615 = vmatprep.subr.mxu0 0.0
    %2616 = vmatpush2.msra.mxu0 0.0
    %2617 = vmatprep.subr.mxu0 0.0
    %2618 = vmatpush2.msra.mxu0 0.0
    %2619 = vmatprep.subr.mxu0 0.0
    %2620 = vmatpush2.msra.mxu0 0.0
    %2621 = vmatprep.subr.mxu0 0.0
    %2622 = vmatpush2.msra.mxu0 0.0
    %2623 = vmatprep.subr.mxu0 0.0
    %2624 = vmatpush2.msra.mxu0 0.0
    %2625 = vmatprep.subr.mxu0 0.0
    %2626 = vmatpush2.msra.mxu0 0.0
    %2627 = vmatprep.subr.mxu0 0.0
    %2628 = vmatpush2.msra.mxu0 0.0
    %2629 = vmatprep.subr.mxu0 0.0
    %2630 = vmatpush2.msra.mxu0 0.0
    %2631 = vmatprep.subr.mxu0 0.0
    %2632 = vmatpush2.msra.mxu0 0.0
    %2633 = vmatprep.subr.mxu0 0.0
    %2634 = vmatpush2.msra.mxu0 0.0
    %2635 = vmatprep.mubr.f32.mxu0 0.0
    %2636 = vmatmul.mubr.f32.gmra.mxu0 %v2569
    %v2637 = vpop.f32.mrf.mxu0
    %v2638 = vadd.f32 0.0, %v2637
    %v2639 = vpop.f32.mrf.mxu0
    %2640 = vdwg.mxu0
    %2641 = vrot.lane.b32.xlu0 %v2309, 120
    %v2642 = vpop.permute.xlu0 %2641
    %2643 = vrot.lane.b32.xlu0 %v2139, 88
    %v2644 = vpop.permute.xlu0 %2643
    %v2645 = vsel %vm123, %v2642, 0
    %v2647 = vsel %vm123, %v2644, 0
    %2649 = vmatprep.subr.mxu0 0.0
    %2650 = vmatpush1.xpose.msra.mxu0 0.0
    %2651 = vmatprep.subr.mxu0 0.0
    %2652 = vmatpush1.xpose.msra.mxu0 0.0
    %2653 = vmatprep.subr.mxu0 0.0
    %2654 = vmatpush1.xpose.msra.mxu0 0.0
    %2655 = vmatprep.subr.mxu0 0.0
    %2656 = vmatpush1.xpose.msra.mxu0 0.0
    %2657 = vmatprep.subr.mxu0 0.0
    %2658 = vmatpush1.xpose.msra.mxu0 0.0
    %2659 = vmatprep.subr.mxu0 0.0
    %2660 = vmatpush1.xpose.msra.mxu0 0.0
    %2661 = vmatprep.subr.mxu0 0.0
    %2662 = vmatpush1.xpose.msra.mxu0 0.0
    %2663 = vmatprep.subr.mxu0 0.0
    %2664 = vmatpush1.xpose.msra.mxu0 0.0
    %2665 = vmatprep.subr.mxu0 0.0
    %2666 = vmatpush1.xpose.msra.mxu0 0.0
    %2667 = vmatprep.subr.mxu0 0.0
    %2668 = vmatpush1.xpose.msra.mxu0 0.0
    %2669 = vmatprep.subr.mxu0 0.0
    %2670 = vmatpush1.xpose.msra.mxu0 0.0
    %2671 = vmatprep.subr.mxu0 0.0
    %2672 = vmatpush1.xpose.msra.mxu0 0.0
    %2673 = vmatprep.subr.mxu0 0.0
    %2674 = vmatpush1.xpose.msra.mxu0 0.0
    %2675 = vmatprep.subr.mxu0 0.0
    %2676 = vmatpush1.xpose.msra.mxu0 0.0
    %2677 = vmatprep.subr.mxu0 0.0
    %2678 = vmatpush1.xpose.msra.mxu0 0.0
    %2679 = vmatprep.subr.mxu0 0.0
    %2680 = vmatpush1.xpose.msra.mxu0 %v2647
    %2681 = vmatprep.subr.mxu0 0.0
    %2682 = vmatpush2.xpose.msra.mxu0 0.0
    %2683 = vmatprep.subr.mxu0 0.0
    %2684 = vmatpush2.xpose.msra.mxu0 0.0
    %2685 = vmatprep.subr.mxu0 0.0
    %2686 = vmatpush2.xpose.msra.mxu0 0.0
    %2687 = vmatprep.subr.mxu0 0.0
    %2688 = vmatpush2.xpose.msra.mxu0 0.0
    %2689 = vmatprep.subr.mxu0 0.0
    %2690 = vmatpush2.xpose.msra.mxu0 0.0
    %2691 = vmatprep.subr.mxu0 0.0
    %2692 = vmatpush2.xpose.msra.mxu0 0.0
    %2693 = vmatprep.subr.mxu0 0.0
    %2694 = vmatpush2.xpose.msra.mxu0 0.0
    %2695 = vmatprep.subr.mxu0 0.0
    %2696 = vmatpush2.xpose.msra.mxu0 0.0
    %2697 = vmatprep.subr.mxu0 0.0
    %2698 = vmatpush2.xpose.msra.mxu0 0.0
    %2699 = vmatprep.subr.mxu0 0.0
    %2700 = vmatpush2.xpose.msra.mxu0 0.0
    %2701 = vmatprep.subr.mxu0 0.0
    %2702 = vmatpush2.xpose.msra.mxu0 0.0
    %2703 = vmatprep.subr.mxu0 0.0
    %2704 = vmatpush2.xpose.msra.mxu0 0.0
    %2705 = vmatprep.subr.mxu0 0.0
    %2706 = vmatpush2.xpose.msra.mxu0 0.0
    %2707 = vmatprep.subr.mxu0 0.0
    %2708 = vmatpush2.xpose.msra.mxu0 0.0
    %2709 = vmatprep.subr.mxu0 0.0
    %2710 = vmatpush2.xpose.msra.mxu0 0.0
    %2711 = vmatprep.subr.mxu0 0.0
    %2712 = vmatpush2.xpose.msra.mxu0 0.0
    %2713 = vmatprep.mubr.f32.mxu0 0.0
    %2714 = vmatmul.mubr.f32.gmra.mxu0 %v2645
    %v2715 = vpop.f32.mrf.mxu0
    %v2716 = vadd.f32 0.0, %v2715
    %v2717 = vpop.f32.mrf.mxu0
    %2718 = vdwg.mxu0
    %v2719 = vsel %vm123, %v2716, -inf
    %2720 = vmax.xlane.f32.xlu0 %v2719
    %v2721 = vpop.xlane.xlu0 %2720
    %v2722 = vsub.f32 %v2716, %v2721
    %v2723 = vmul.f32 %v2722, 1.442695
    %v2724 = vpow.pop %v2723
    %v2725 = vsel %vm123, %v2724, 0.0
    %2726 = vadd.xlane.f32.xlu0 %v2725
    %v2727 = vpop.xlane.xlu0 %2726
    %v2728 = vrcp.pop %v2727
    %v2729 = vmul.f32 %v2724, %v2728
    %2730 = vrot.lane.b32.xlu0 %v2139, 56
    %v2731 = vpop.permute.xlu0 %2730
    %v2734 = vsel %vm123, %v2729, 0
    %2736 = vmatprep.subr.mxu0 0.0
    %2737 = vmatpush1.msra.mxu0 0.0
    %2738 = vmatprep.subr.mxu0 0.0
    %2739 = vmatpush1.msra.mxu0 0.0
    %2740 = vmatprep.subr.mxu0 0.0
    %2741 = vmatpush1.msra.mxu0 0.0
    %2742 = vmatprep.subr.mxu0 0.0
    %2743 = vmatpush1.msra.mxu0 0.0
    %2744 = vmatprep.subr.mxu0 0.0
    %2745 = vmatpush1.msra.mxu0 0.0
    %2746 = vmatprep.subr.mxu0 0.0
    %2747 = vmatpush1.msra.mxu0 0.0
    %2748 = vmatprep.subr.mxu0 0.0
    %2749 = vmatpush1.msra.mxu0 0.0
    %2750 = vmatprep.subr.mxu0 0.0
    %2751 = vmatpush1.msra.mxu0 0.0
    %2752 = vmatprep.subr.mxu0 0.0
    %2753 = vmatpush1.msra.mxu0 0.0
    %2754 = vmatprep.subr.mxu0 0.0
    %2755 = vmatpush1.msra.mxu0 0.0
    %2756 = vmatprep.subr.mxu0 0.0
    %2757 = vmatpush1.msra.mxu0 0.0
    %2758 = vmatprep.subr.mxu0 0.0
    %2759 = vmatpush1.msra.mxu0 0.0
    %2760 = vmatprep.subr.mxu0 0.0
    %2761 = vmatpush1.msra.mxu0 0.0
    %2762 = vmatprep.subr.mxu0 0.0
    %2763 = vmatpush1.msra.mxu0 0.0
    %2764 = vmatprep.subr.mxu0 0.0
    %2765 = vmatpush1.msra.mxu0 0.0
    %2766 = vmatprep.subr.mxu0 0.0
    %2767 = vmatpush1.msra.mxu0 %v2731
    %2768 = vmatprep.subr.mxu0 0.0
    %2769 = vmatpush2.msra.mxu0 0.0
    %2770 = vmatprep.subr.mxu0 0.0
    %2771 = vmatpush2.msra.mxu0 0.0
    %2772 = vmatprep.subr.mxu0 0.0
    %2773 = vmatpush2.msra.mxu0 0.0
    %2774 = vmatprep.subr.mxu0 0.0
    %2775 = vmatpush2.msra.mxu0 0.0
    %2776 = vmatprep.subr.mxu0 0.0
    %2777 = vmatpush2.msra.mxu0 0.0
    %2778 = vmatprep.subr.mxu0 0.0
    %2779 = vmatpush2.msra.mxu0 0.0
    %2780 = vmatprep.subr.mxu0 0.0
    %2781 = vmatpush2.msra.mxu0 0.0
    %2782 = vmatprep.subr.mxu0 0.0
    %2783 = vmatpush2.msra.mxu0 0.0
    %2784 = vmatprep.subr.mxu0 0.0
    %2785 = vmatpush2.msra.mxu0 0.0
    %2786 = vmatprep.subr.mxu0 0.0
    %2787 = vmatpush2.msra.mxu0 0.0
    %2788 = vmatprep.subr.mxu0 0.0
    %2789 = vmatpush2.msra.mxu0 0.0
    %2790 = vmatprep.subr.mxu0 0.0
    %2791 = vmatpush2.msra.mxu0 0.0
    %2792 = vmatprep.subr.mxu0 0.0
    %2793 = vmatpush2.msra.mxu0 0.0
    %2794 = vmatprep.subr.mxu0 0.0
    %2795 = vmatpush2.msra.mxu0 0.0
    %2796 = vmatprep.subr.mxu0 0.0
    %2797 = vmatpush2.msra.mxu0 0.0
    %2798 = vmatprep.subr.mxu0 0.0
    %2799 = vmatpush2.msra.mxu0 0.0
    %2800 = vmatprep.mubr.f32.mxu0 0.0
    %2801 = vmatmul.mubr.f32.gmra.mxu0 %v2734
    %v2802 = vpop.f32.mrf.mxu0
    %v2803 = vadd.f32 0.0, %v2802
    %v2804 = vpop.f32.mrf.mxu0
    %2805 = vdwg.mxu0
    %v2807 = vsel %vm123, %v2638, 0
    %v2810 = vsel %vm123, %v2803, 0
    %2812 = vmatprep.subr.mxu0 0.0
    %2813 = vmatpush1.msra.mxu0 0.0
    %2814 = vmatprep.subr.mxu0 0.0
    %2815 = vmatpush1.msra.mxu0 0.0
    %2816 = vmatprep.subr.mxu0 0.0
    %2817 = vmatpush1.msra.mxu0 0.0
    %2818 = vmatprep.subr.mxu0 0.0
    %2819 = vmatpush1.msra.mxu0 0.0
    %2820 = vmatprep.subr.mxu0 0.0
    %2821 = vmatpush1.msra.mxu0 0.0
    %2822 = vmatprep.subr.mxu0 0.0
    %2823 = vmatpush1.msra.mxu0 0.0
    %2824 = vmatprep.subr.mxu0 0.0
    %2825 = vmatpush1.msra.mxu0 0.0
    %2826 = vmatprep.subr.mxu0 0.0
    %2827 = vmatpush1.msra.mxu0 0.0
    %2828 = vmatprep.subr.mxu0 0.0
    %2829 = vmatpush1.msra.mxu0 0.0
    %2830 = vmatprep.subr.mxu0 0.0
    %2831 = vmatpush1.msra.mxu0 0.0
    %2832 = vmatprep.subr.mxu0 0.0
    %2833 = vmatpush1.msra.mxu0 0.0
    %2834 = vmatprep.subr.mxu0 0.0
    %2835 = vmatpush1.msra.mxu0 0.0
    %2836 = vmatprep.subr.mxu0 0.0
    %2837 = vmatpush1.msra.mxu0 0.0
    %2838 = vmatprep.subr.mxu0 0.0
    %2839 = vmatpush1.msra.mxu0 0.0
    %2840 = vmatprep.subr.mxu0 0.0
    %2841 = vmatpush1.msra.mxu0 0.0
    %2842 = vmatprep.subr.mxu0 0.0
    %2843 = vmatpush1.msra.mxu0 %v2475
    %2844 = vmatprep.subr.mxu0 0.0
    %2845 = vmatpush2.msra.mxu0 0.0
    %2846 = vmatprep.subr.mxu0 0.0
    %2847 = vmatpush2.msra.mxu0 0.0
    %2848 = vmatprep.subr.mxu0 0.0
    %2849 = vmatpush2.msra.mxu0 0.0
    %2850 = vmatprep.subr.mxu0 0.0
    %2851 = vmatpush2.msra.mxu0 0.0
    %2852 = vmatprep.subr.mxu0 0.0
    %2853 = vmatpush2.msra.mxu0 0.0
    %2854 = vmatprep.subr.mxu0 0.0
    %2855 = vmatpush2.msra.mxu0 0.0
    %2856 = vmatprep.subr.mxu0 0.0
    %2857 = vmatpush2.msra.mxu0 0.0
    %2858 = vmatprep.subr.mxu0 0.0
    %2859 = vmatpush2.msra.mxu0 0.0
    %2860 = vmatprep.subr.mxu0 0.0
    %2861 = vmatpush2.msra.mxu0 0.0
    %2862 = vmatprep.subr.mxu0 0.0
    %2863 = vmatpush2.msra.mxu0 0.0
    %2864 = vmatprep.subr.mxu0 0.0
    %2865 = vmatpush2.msra.mxu0 0.0
    %2866 = vmatprep.subr.mxu0 0.0
    %2867 = vmatpush2.msra.mxu0 0.0
    %2868 = vmatprep.subr.mxu0 0.0
    %2869 = vmatpush2.msra.mxu0 0.0
    %2870 = vmatprep.subr.mxu0 0.0
    %2871 = vmatpush2.msra.mxu0 0.0
    %2872 = vmatprep.subr.mxu0 0.0
    %2873 = vmatpush2.msra.mxu0 0.0
    %2874 = vmatprep.subr.mxu0 0.0
    %2875 = vmatpush2.msra.mxu0 0.0
    %2876 = vmatprep.mubr.f32.mxu0 0.0
    %2877 = vmatmul.mubr.f32.gmra.mxu0 %v2807
    %v2878 = vpop.f32.mrf.mxu0
    %v2879 = vadd.f32 0.0, %v2878
    %v2880 = vpop.f32.mrf.mxu0
    %2881 = vmatprep.mubr.f32.mxu0 0.0
    %2882 = vmatmul.mubr.f32.gmra.mxu0 %v2810
    %v2883 = vpop.f32.mrf.mxu0
    %v2884 = vadd.f32 0.0, %v2883
    %v2885 = vpop.f32.mrf.mxu0
    %2886 = vdwg.mxu0
    %v2888 = vsel %vm123, %v2306, 0
    %v2891 = vsel %vm123, %v2472, 0
    %2893 = vmatprep.subr.mxu0 0.0
    %2894 = vmatpush1.msra.mxu0 0.0
    %2895 = vmatprep.subr.mxu0 0.0
    %2896 = vmatpush1.msra.mxu0 0.0
    %2897 = vmatprep.subr.mxu0 0.0
    %2898 = vmatpush1.msra.mxu0 0.0
    %2899 = vmatprep.subr.mxu0 0.0
    %2900 = vmatpush1.msra.mxu0 0.0
    %2901 = vmatprep.subr.mxu0 0.0
    %2902 = vmatpush1.msra.mxu0 0.0
    %2903 = vmatprep.subr.mxu0 0.0
    %2904 = vmatpush1.msra.mxu0 0.0
    %2905 = vmatprep.subr.mxu0 0.0
    %2906 = vmatpush1.msra.mxu0 0.0
    %2907 = vmatprep.subr.mxu0 0.0
    %2908 = vmatpush1.msra.mxu0 0.0
    %2909 = vmatprep.subr.mxu0 0.0
    %2910 = vmatpush1.msra.mxu0 0.0
    %2911 = vmatprep.subr.mxu0 0.0
    %2912 = vmatpush1.msra.mxu0 0.0
    %2913 = vmatprep.subr.mxu0 0.0
    %2914 = vmatpush1.msra.mxu0 0.0
    %2915 = vmatprep.subr.mxu0 0.0
    %2916 = vmatpush1.msra.mxu0 0.0
    %2917 = vmatprep.subr.mxu0 0.0
    %2918 = vmatpush1.msra.mxu0 0.0
    %2919 = vmatprep.subr.mxu0 0.0
    %2920 = vmatpush1.msra.mxu0 0.0
    %2921 = vmatprep.subr.mxu0 0.0
    %2922 = vmatpush1.msra.mxu0 0.0
    %2923 = vmatprep.subr.mxu0 0.0
    %2924 = vmatpush1.msra.mxu0 %v2142
    %2925 = vmatprep.subr.mxu0 0.0
    %2926 = vmatpush2.msra.mxu0 0.0
    %2927 = vmatprep.subr.mxu0 0.0
    %2928 = vmatpush2.msra.mxu0 0.0
    %2929 = vmatprep.subr.mxu0 0.0
    %2930 = vmatpush2.msra.mxu0 0.0
    %2931 = vmatprep.subr.mxu0 0.0
    %2932 = vmatpush2.msra.mxu0 0.0
    %2933 = vmatprep.subr.mxu0 0.0
    %2934 = vmatpush2.msra.mxu0 0.0
    %2935 = vmatprep.subr.mxu0 0.0
    %2936 = vmatpush2.msra.mxu0 0.0
    %2937 = vmatprep.subr.mxu0 0.0
    %2938 = vmatpush2.msra.mxu0 0.0
    %2939 = vmatprep.subr.mxu0 0.0
    %2940 = vmatpush2.msra.mxu0 0.0
    %2941 = vmatprep.subr.mxu0 0.0
    %2942 = vmatpush2.msra.mxu0 0.0
    %2943 = vmatprep.subr.mxu0 0.0
    %2944 = vmatpush2.msra.mxu0 0.0
    %2945 = vmatprep.subr.mxu0 0.0
    %2946 = vmatpush2.msra.mxu0 0.0
    %2947 = vmatprep.subr.mxu0 0.0
    %2948 = vmatpush2.msra.mxu0 0.0
    %2949 = vmatprep.subr.mxu0 0.0
    %2950 = vmatpush2.msra.mxu0 0.0
    %2951 = vmatprep.subr.mxu0 0.0
    %2952 = vmatpush2.msra.mxu0 0.0
    %2953 = vmatprep.subr.mxu0 0.0
    %2954 = vmatpush2.msra.mxu0 0.0
    %2955 = vmatprep.subr.mxu0 0.0
    %2956 = vmatpush2.msra.mxu0 0.0
    %2957 = vmatprep.mubr.f32.mxu0 0.0
    %2958 = vmatmul.mubr.f32.gmra.mxu0 %v2888
    %v2959 = vpop.f32.mrf.mxu0
    %v2960 = vadd.f32 %v2879, %v2959
    %v2961 = vpop.f32.mrf.mxu0
    %2962 = vmatprep.mubr.f32.mxu0 0.0
    %2963 = vmatmul.mubr.f32.gmra.mxu0 %v2891
    %v2964 = vpop.f32.mrf.mxu0
    %v2965 = vadd.f32 %v2884, %v2964
    %v2966 = vpop.f32.mrf.mxu0
    %2967 = vdwg.mxu0
    %v2968 = vld [vmem:[#allocation2 + $0xd8] sm:$0xff]
    %2969 = vrot.lane.b32.xlu0 %v2143, 112
    %v2970 = vpop.permute.xlu0 %2969
    %2971 = vrot.lane.b32.xlu0 %v2134, 80
    %v2972 = vpop.permute.xlu0 %2971
    %v2973 = vsel %vm123, %v2970, 0
    %v2975 = vsel %vm123, %v2972, 0
    %2977 = vmatprep.subr.mxu0 0.0
    %2978 = vmatpush1.xpose.msra.mxu0 0.0
    %2979 = vmatprep.subr.mxu0 0.0
    %2980 = vmatpush1.xpose.msra.mxu0 0.0
    %2981 = vmatprep.subr.mxu0 0.0
    %2982 = vmatpush1.xpose.msra.mxu0 0.0
    %2983 = vmatprep.subr.mxu0 0.0
    %2984 = vmatpush1.xpose.msra.mxu0 0.0
    %2985 = vmatprep.subr.mxu0 0.0
    %2986 = vmatpush1.xpose.msra.mxu0 0.0
    %2987 = vmatprep.subr.mxu0 0.0
    %2988 = vmatpush1.xpose.msra.mxu0 0.0
    %2989 = vmatprep.subr.mxu0 0.0
    %2990 = vmatpush1.xpose.msra.mxu0 0.0
    %2991 = vmatprep.subr.mxu0 0.0
    %2992 = vmatpush1.xpose.msra.mxu0 0.0
    %2993 = vmatprep.subr.mxu0 0.0
    %2994 = vmatpush1.xpose.msra.mxu0 0.0
    %2995 = vmatprep.subr.mxu0 0.0
    %2996 = vmatpush1.xpose.msra.mxu0 0.0
    %2997 = vmatprep.subr.mxu0 0.0
    %2998 = vmatpush1.xpose.msra.mxu0 0.0
    %2999 = vmatprep.subr.mxu0 0.0
    %3000 = vmatpush1.xpose.msra.mxu0 0.0
    %3001 = vmatprep.subr.mxu0 0.0
    %3002 = vmatpush1.xpose.msra.mxu0 0.0
    %3003 = vmatprep.subr.mxu0 0.0
    %3004 = vmatpush1.xpose.msra.mxu0 0.0
    %3005 = vmatprep.subr.mxu0 0.0
    %3006 = vmatpush1.xpose.msra.mxu0 0.0
    %3007 = vmatprep.subr.mxu0 0.0
    %3008 = vmatpush1.xpose.msra.mxu0 %v2975
    %3009 = vmatprep.subr.mxu0 0.0
    %3010 = vmatpush2.xpose.msra.mxu0 0.0
    %3011 = vmatprep.subr.mxu0 0.0
    %3012 = vmatpush2.xpose.msra.mxu0 0.0
    %3013 = vmatprep.subr.mxu0 0.0
    %3014 = vmatpush2.xpose.msra.mxu0 0.0
    %3015 = vmatprep.subr.mxu0 0.0
    %3016 = vmatpush2.xpose.msra.mxu0 0.0
    %3017 = vmatprep.subr.mxu0 0.0
    %3018 = vmatpush2.xpose.msra.mxu0 0.0
    %3019 = vmatprep.subr.mxu0 0.0
    %3020 = vmatpush2.xpose.msra.mxu0 0.0
    %3021 = vmatprep.subr.mxu0 0.0
    %3022 = vmatpush2.xpose.msra.mxu0 0.0
    %3023 = vmatprep.subr.mxu0 0.0
    %3024 = vmatpush2.xpose.msra.mxu0 0.0
    %3025 = vmatprep.subr.mxu0 0.0
    %3026 = vmatpush2.xpose.msra.mxu0 0.0
    %3027 = vmatprep.subr.mxu0 0.0
    %3028 = vmatpush2.xpose.msra.mxu0 0.0
    %3029 = vmatprep.subr.mxu0 0.0
    %3030 = vmatpush2.xpose.msra.mxu0 0.0
    %3031 = vmatprep.subr.mxu0 0.0
    %3032 = vmatpush2.xpose.msra.mxu0 0.0
    %3033 = vmatprep.subr.mxu0 0.0
    %3034 = vmatpush2.xpose.msra.mxu0 0.0
    %3035 = vmatprep.subr.mxu0 0.0
    %3036 = vmatpush2.xpose.msra.mxu0 0.0
    %3037 = vmatprep.subr.mxu0 0.0
    %3038 = vmatpush2.xpose.msra.mxu0 0.0
    %3039 = vmatprep.subr.mxu0 0.0
    %3040 = vmatpush2.xpose.msra.mxu0 0.0
    %3041 = vmatprep.mubr.f32.mxu0 0.0
    %3042 = vmatmul.mubr.f32.gmra.mxu0 %v2973
    %v3043 = vpop.f32.mrf.mxu0
    %v3044 = vadd.f32 0.0, %v3043
    %v3045 = vpop.f32.mrf.mxu0
    %3046 = vdwg.mxu0
    %v3047 = vsel %vm123, %v3044, -inf
    %3048 = vmax.xlane.f32.xlu0 %v3047
    %v3049 = vpop.xlane.xlu0 %3048
    %v3050 = vsub.f32 %v3044, %v3049
    %v3051 = vmul.f32 %v3050, 1.442695
    %v3052 = vpow.pop %v3051
    %v3053 = vsel %vm123, %v3052, 0.0
    %3054 = vadd.xlane.f32.xlu0 %v3053
    %v3055 = vpop.xlane.xlu0 %3054
    %v3056 = vrcp.pop %v3055
    %v3057 = vmul.f32 %v3052, %v3056
    %3058 = vrot.lane.b32.xlu0 %v2134, 48
    %v3059 = vpop.permute.xlu0 %3058
    %v3062 = vsel %vm123, %v3057, 0
    %3064 = vmatprep.subr.mxu0 0.0
    %3065 = vmatpush1.msra.mxu0 0.0
    %3066 = vmatprep.subr.mxu0 0.0
    %3067 = vmatpush1.msra.mxu0 0.0
    %3068 = vmatprep.subr.mxu0 0.0
    %3069 = vmatpush1.msra.mxu0 0.0
    %3070 = vmatprep.subr.mxu0 0.0
    %3071 = vmatpush1.msra.mxu0 0.0
    %3072 = vmatprep.subr.mxu0 0.0
    %3073 = vmatpush1.msra.mxu0 0.0
    %3074 = vmatprep.subr.mxu0 0.0
    %3075 = vmatpush1.msra.mxu0 0.0
    %3076 = vmatprep.subr.mxu0 0.0
    %3077 = vmatpush1.msra.mxu0 0.0
    %3078 = vmatprep.subr.mxu0 0.0
    %3079 = vmatpush1.msra.mxu0 0.0
    %3080 = vmatprep.subr.mxu0 0.0
    %3081 = vmatpush1.msra.mxu0 0.0
    %3082 = vmatprep.subr.mxu0 0.0
    %3083 = vmatpush1.msra.mxu0 0.0
    %3084 = vmatprep.subr.mxu0 0.0
    %3085 = vmatpush1.msra.mxu0 0.0
    %3086 = vmatprep.subr.mxu0 0.0
    %3087 = vmatpush1.msra.mxu0 0.0
    %3088 = vmatprep.subr.mxu0 0.0
    %3089 = vmatpush1.msra.mxu0 0.0
    %3090 = vmatprep.subr.mxu0 0.0
    %3091 = vmatpush1.msra.mxu0 0.0
    %3092 = vmatprep.subr.mxu0 0.0
    %3093 = vmatpush1.msra.mxu0 0.0
    %3094 = vmatprep.subr.mxu0 0.0
    %3095 = vmatpush1.msra.mxu0 %v3059
    %3096 = vmatprep.subr.mxu0 0.0
    %3097 = vmatpush2.msra.mxu0 0.0
    %3098 = vmatprep.subr.mxu0 0.0
    %3099 = vmatpush2.msra.mxu0 0.0
    %3100 = vmatprep.subr.mxu0 0.0
    %3101 = vmatpush2.msra.mxu0 0.0
    %3102 = vmatprep.subr.mxu0 0.0
    %3103 = vmatpush2.msra.mxu0 0.0
    %3104 = vmatprep.subr.mxu0 0.0
    %3105 = vmatpush2.msra.mxu0 0.0
    %3106 = vmatprep.subr.mxu0 0.0
    %3107 = vmatpush2.msra.mxu0 0.0
    %3108 = vmatprep.subr.mxu0 0.0
    %3109 = vmatpush2.msra.mxu0 0.0
    %3110 = vmatprep.subr.mxu0 0.0
    %3111 = vmatpush2.msra.mxu0 0.0
    %3112 = vmatprep.subr.mxu0 0.0
    %3113 = vmatpush2.msra.mxu0 0.0
    %3114 = vmatprep.subr.mxu0 0.0
    %3115 = vmatpush2.msra.mxu0 0.0
    %3116 = vmatprep.subr.mxu0 0.0
    %3117 = vmatpush2.msra.mxu0 0.0
    %3118 = vmatprep.subr.mxu0 0.0
    %3119 = vmatpush2.msra.mxu0 0.0
    %3120 = vmatprep.subr.mxu0 0.0
    %3121 = vmatpush2.msra.mxu0 0.0
    %3122 = vmatprep.subr.mxu0 0.0
    %3123 = vmatpush2.msra.mxu0 0.0
    %3124 = vmatprep.subr.mxu0 0.0
    %3125 = vmatpush2.msra.mxu0 0.0
    %3126 = vmatprep.subr.mxu0 0.0
    %3127 = vmatpush2.msra.mxu0 0.0
    %3128 = vmatprep.mubr.f32.mxu0 0.0
    %3129 = vmatmul.mubr.f32.gmra.mxu0 %v3062
    %v3130 = vpop.f32.mrf.mxu0
    %v3131 = vadd.f32 0.0, %v3130
    %v3132 = vpop.f32.mrf.mxu0
    %3133 = vdwg.mxu0
    %3134 = vrot.lane.b32.xlu0 %v2309, 112
    %v3135 = vpop.permute.xlu0 %3134
    %3136 = vrot.lane.b32.xlu0 %v2139, 80
    %v3137 = vpop.permute.xlu0 %3136
    %v3138 = vsel %vm123, %v3135, 0
    %v3140 = vsel %vm123, %v3137, 0
    %3142 = vmatprep.subr.mxu0 0.0
    %3143 = vmatpush1.xpose.msra.mxu0 0.0
    %3144 = vmatprep.subr.mxu0 0.0
    %3145 = vmatpush1.xpose.msra.mxu0 0.0
    %3146 = vmatprep.subr.mxu0 0.0
    %3147 = vmatpush1.xpose.msra.mxu0 0.0
    %3148 = vmatprep.subr.mxu0 0.0
    %3149 = vmatpush1.xpose.msra.mxu0 0.0
    %3150 = vmatprep.subr.mxu0 0.0
    %3151 = vmatpush1.xpose.msra.mxu0 0.0
    %3152 = vmatprep.subr.mxu0 0.0
    %3153 = vmatpush1.xpose.msra.mxu0 0.0
    %3154 = vmatprep.subr.mxu0 0.0
    %3155 = vmatpush1.xpose.msra.mxu0 0.0
    %3156 = vmatprep.subr.mxu0 0.0
    %3157 = vmatpush1.xpose.msra.mxu0 0.0
    %3158 = vmatprep.subr.mxu0 0.0
    %3159 = vmatpush1.xpose.msra.mxu0 0.0
    %3160 = vmatprep.subr.mxu0 0.0
    %3161 = vmatpush1.xpose.msra.mxu0 0.0
    %3162 = vmatprep.subr.mxu0 0.0
    %3163 = vmatpush1.xpose.msra.mxu0 0.0
    %3164 = vmatprep.subr.mxu0 0.0
    %3165 = vmatpush1.xpose.msra.mxu0 0.0
    %3166 = vmatprep.subr.mxu0 0.0
    %3167 = vmatpush1.xpose.msra.mxu0 0.0
    %3168 = vmatprep.subr.mxu0 0.0
    %3169 = vmatpush1.xpose.msra.mxu0 0.0
    %3170 = vmatprep.subr.mxu0 0.0
    %3171 = vmatpush1.xpose.msra.mxu0 0.0
    %3172 = vmatprep.subr.mxu0 0.0
    %3173 = vmatpush1.xpose.msra.mxu0 %v3140
    %3174 = vmatprep.subr.mxu0 0.0
    %3175 = vmatpush2.xpose.msra.mxu0 0.0
    %3176 = vmatprep.subr.mxu0 0.0
    %3177 = vmatpush2.xpose.msra.mxu0 0.0
    %3178 = vmatprep.subr.mxu0 0.0
    %3179 = vmatpush2.xpose.msra.mxu0 0.0
    %3180 = vmatprep.subr.mxu0 0.0
    %3181 = vmatpush2.xpose.msra.mxu0 0.0
    %3182 = vmatprep.subr.mxu0 0.0
    %3183 = vmatpush2.xpose.msra.mxu0 0.0
    %3184 = vmatprep.subr.mxu0 0.0
    %3185 = vmatpush2.xpose.msra.mxu0 0.0
    %3186 = vmatprep.subr.mxu0 0.0
    %3187 = vmatpush2.xpose.msra.mxu0 0.0
    %3188 = vmatprep.subr.mxu0 0.0
    %3189 = vmatpush2.xpose.msra.mxu0 0.0
    %3190 = vmatprep.subr.mxu0 0.0
    %3191 = vmatpush2.xpose.msra.mxu0 0.0
    %3192 = vmatprep.subr.mxu0 0.0
    %3193 = vmatpush2.xpose.msra.mxu0 0.0
    %3194 = vmatprep.subr.mxu0 0.0
    %3195 = vmatpush2.xpose.msra.mxu0 0.0
    %3196 = vmatprep.subr.mxu0 0.0
    %3197 = vmatpush2.xpose.msra.mxu0 0.0
    %3198 = vmatprep.subr.mxu0 0.0
    %3199 = vmatpush2.xpose.msra.mxu0 0.0
    %3200 = vmatprep.subr.mxu0 0.0
    %3201 = vmatpush2.xpose.msra.mxu0 0.0
    %3202 = vmatprep.subr.mxu0 0.0
    %3203 = vmatpush2.xpose.msra.mxu0 0.0
    %3204 = vmatprep.subr.mxu0 0.0
    %3205 = vmatpush2.xpose.msra.mxu0 0.0
    %3206 = vmatprep.mubr.f32.mxu0 0.0
    %3207 = vmatmul.mubr.f32.gmra.mxu0 %v3138
    %v3208 = vpop.f32.mrf.mxu0
    %v3209 = vadd.f32 0.0, %v3208
    %v3210 = vpop.f32.mrf.mxu0
    %3211 = vdwg.mxu0
    %v3212 = vsel %vm123, %v3209, -inf
    %3213 = vmax.xlane.f32.xlu0 %v3212
    %v3214 = vpop.xlane.xlu0 %3213
    %v3215 = vsub.f32 %v3209, %v3214
    %v3216 = vmul.f32 %v3215, 1.442695
    %v3217 = vpow.pop %v3216
    %v3218 = vsel %vm123, %v3217, 0.0
    %3219 = vadd.xlane.f32.xlu0 %v3218
    %v3220 = vpop.xlane.xlu0 %3219
    %v3221 = vrcp.pop %v3220
    %v3222 = vmul.f32 %v3217, %v3221
    %3223 = vrot.lane.b32.xlu0 %v2139, 48
    %v3224 = vpop.permute.xlu0 %3223
    %v3227 = vsel %vm123, %v3222, 0
    %3229 = vmatprep.subr.mxu0 0.0
    %3230 = vmatpush1.msra.mxu0 0.0
    %3231 = vmatprep.subr.mxu0 0.0
    %3232 = vmatpush1.msra.mxu0 0.0
    %3233 = vmatprep.subr.mxu0 0.0
    %3234 = vmatpush1.msra.mxu0 0.0
    %3235 = vmatprep.subr.mxu0 0.0
    %3236 = vmatpush1.msra.mxu0 0.0
    %3237 = vmatprep.subr.mxu0 0.0
    %3238 = vmatpush1.msra.mxu0 0.0
    %3239 = vmatprep.subr.mxu0 0.0
    %3240 = vmatpush1.msra.mxu0 0.0
    %3241 = vmatprep.subr.mxu0 0.0
    %3242 = vmatpush1.msra.mxu0 0.0
    %3243 = vmatprep.subr.mxu0 0.0
    %3244 = vmatpush1.msra.mxu0 0.0
    %3245 = vmatprep.subr.mxu0 0.0
    %3246 = vmatpush1.msra.mxu0 0.0
    %3247 = vmatprep.subr.mxu0 0.0
    %3248 = vmatpush1.msra.mxu0 0.0
    %3249 = vmatprep.subr.mxu0 0.0
    %3250 = vmatpush1.msra.mxu0 0.0
    %3251 = vmatprep.subr.mxu0 0.0
    %3252 = vmatpush1.msra.mxu0 0.0
    %3253 = vmatprep.subr.mxu0 0.0
    %3254 = vmatpush1.msra.mxu0 0.0
    %3255 = vmatprep.subr.mxu0 0.0
    %3256 = vmatpush1.msra.mxu0 0.0
    %3257 = vmatprep.subr.mxu0 0.0
    %3258 = vmatpush1.msra.mxu0 0.0
    %3259 = vmatprep.subr.mxu0 0.0
    %3260 = vmatpush1.msra.mxu0 %v3224
    %3261 = vmatprep.subr.mxu0 0.0
    %3262 = vmatpush2.msra.mxu0 0.0
    %3263 = vmatprep.subr.mxu0 0.0
    %3264 = vmatpush2.msra.mxu0 0.0
    %3265 = vmatprep.subr.mxu0 0.0
    %3266 = vmatpush2.msra.mxu0 0.0
    %3267 = vmatprep.subr.mxu0 0.0
    %3268 = vmatpush2.msra.mxu0 0.0
    %3269 = vmatprep.subr.mxu0 0.0
    %3270 = vmatpush2.msra.mxu0 0.0
    %3271 = vmatprep.subr.mxu0 0.0
    %3272 = vmatpush2.msra.mxu0 0.0
    %3273 = vmatprep.subr.mxu0 0.0
    %3274 = vmatpush2.msra.mxu0 0.0
    %3275 = vmatprep.subr.mxu0 0.0
    %3276 = vmatpush2.msra.mxu0 0.0
    %3277 = vmatprep.subr.mxu0 0.0
    %3278 = vmatpush2.msra.mxu0 0.0
    %3279 = vmatprep.subr.mxu0 0.0
    %3280 = vmatpush2.msra.mxu0 0.0
    %3281 = vmatprep.subr.mxu0 0.0
    %3282 = vmatpush2.msra.mxu0 0.0
    %3283 = vmatprep.subr.mxu0 0.0
    %3284 = vmatpush2.msra.mxu0 0.0
    %3285 = vmatprep.subr.mxu0 0.0
    %3286 = vmatpush2.msra.mxu0 0.0
    %3287 = vmatprep.subr.mxu0 0.0
    %3288 = vmatpush2.msra.mxu0 0.0
    %3289 = vmatprep.subr.mxu0 0.0
    %3290 = vmatpush2.msra.mxu0 0.0
    %3291 = vmatprep.subr.mxu0 0.0
    %3292 = vmatpush2.msra.mxu0 0.0
    %3293 = vmatprep.mubr.f32.mxu0 0.0
    %3294 = vmatmul.mubr.f32.gmra.mxu0 %v3227
    %v3295 = vpop.f32.mrf.mxu0
    %v3296 = vadd.f32 0.0, %v3295
    %v3297 = vpop.f32.mrf.mxu0
    %3298 = vdwg.mxu0
    %v3300 = vsel %vm123, %v3131, 0
    %v3303 = vsel %vm123, %v3296, 0
    %3305 = vmatprep.subr.mxu0 0.0
    %3306 = vmatpush1.msra.mxu0 0.0
    %3307 = vmatprep.subr.mxu0 0.0
    %3308 = vmatpush1.msra.mxu0 0.0
    %3309 = vmatprep.subr.mxu0 0.0
    %3310 = vmatpush1.msra.mxu0 0.0
    %3311 = vmatprep.subr.mxu0 0.0
    %3312 = vmatpush1.msra.mxu0 0.0
    %3313 = vmatprep.subr.mxu0 0.0
    %3314 = vmatpush1.msra.mxu0 0.0
    %3315 = vmatprep.subr.mxu0 0.0
    %3316 = vmatpush1.msra.mxu0 0.0
    %3317 = vmatprep.subr.mxu0 0.0
    %3318 = vmatpush1.msra.mxu0 0.0
    %3319 = vmatprep.subr.mxu0 0.0
    %3320 = vmatpush1.msra.mxu0 0.0
    %3321 = vmatprep.subr.mxu0 0.0
    %3322 = vmatpush1.msra.mxu0 0.0
    %3323 = vmatprep.subr.mxu0 0.0
    %3324 = vmatpush1.msra.mxu0 0.0
    %3325 = vmatprep.subr.mxu0 0.0
    %3326 = vmatpush1.msra.mxu0 0.0
    %3327 = vmatprep.subr.mxu0 0.0
    %3328 = vmatpush1.msra.mxu0 0.0
    %3329 = vmatprep.subr.mxu0 0.0
    %3330 = vmatpush1.msra.mxu0 0.0
    %3331 = vmatprep.subr.mxu0 0.0
    %3332 = vmatpush1.msra.mxu0 0.0
    %3333 = vmatprep.subr.mxu0 0.0
    %3334 = vmatpush1.msra.mxu0 0.0
    %3335 = vmatprep.subr.mxu0 0.0
    %3336 = vmatpush1.msra.mxu0 %v2968
    %3337 = vmatprep.subr.mxu0 0.0
    %3338 = vmatpush2.msra.mxu0 0.0
    %3339 = vmatprep.subr.mxu0 0.0
    %3340 = vmatpush2.msra.mxu0 0.0
    %3341 = vmatprep.subr.mxu0 0.0
    %3342 = vmatpush2.msra.mxu0 0.0
    %3343 = vmatprep.subr.mxu0 0.0
    %3344 = vmatpush2.msra.mxu0 0.0
    %3345 = vmatprep.subr.mxu0 0.0
    %3346 = vmatpush2.msra.mxu0 0.0
    %3347 = vmatprep.subr.mxu0 0.0
    %3348 = vmatpush2.msra.mxu0 0.0
    %3349 = vmatprep.subr.mxu0 0.0
    %3350 = vmatpush2.msra.mxu0 0.0
    %3351 = vmatprep.subr.mxu0 0.0
    %3352 = vmatpush2.msra.mxu0 0.0
    %3353 = vmatprep.subr.mxu0 0.0
    %3354 = vmatpush2.msra.mxu0 0.0
    %3355 = vmatprep.subr.mxu0 0.0
    %3356 = vmatpush2.msra.mxu0 0.0
    %3357 = vmatprep.subr.mxu0 0.0
    %3358 = vmatpush2.msra.mxu0 0.0
    %3359 = vmatprep.subr.mxu0 0.0
    %3360 = vmatpush2.msra.mxu0 0.0
    %3361 = vmatprep.subr.mxu0 0.0
    %3362 = vmatpush2.msra.mxu0 0.0
    %3363 = vmatprep.subr.mxu0 0.0
    %3364 = vmatpush2.msra.mxu0 0.0
    %3365 = vmatprep.subr.mxu0 0.0
    %3366 = vmatpush2.msra.mxu0 0.0
    %3367 = vmatprep.subr.mxu0 0.0
    %3368 = vmatpush2.msra.mxu0 0.0
    %3369 = vmatprep.mubr.f32.mxu0 0.0
    %3370 = vmatmul.mubr.f32.gmra.mxu0 %v3300
    %v3371 = vpop.f32.mrf.mxu0
    %v3372 = vadd.f32 0.0, %v3371
    %v3373 = vpop.f32.mrf.mxu0
    %3374 = vmatprep.mubr.f32.mxu0 0.0
    %3375 = vmatmul.mubr.f32.gmra.mxu0 %v3303
    %v3376 = vpop.f32.mrf.mxu0
    %v3377 = vadd.f32 0.0, %v3376
    %v3378 = vpop.f32.mrf.mxu0
    %3379 = vdwg.mxu0
    %v3380 = vadd.f32 %v2960, %v3372
    %v3381 = vadd.f32 %v2965, %v3377
    %v3382 = vld [vmem:[#allocation2 + $0xe0] sm:$0xff]
    %3383 = vrot.lane.b32.xlu0 %v2143, 104
    %v3384 = vpop.permute.xlu0 %3383
    %3385 = vrot.lane.b32.xlu0 %v2134, 72
    %v3386 = vpop.permute.xlu0 %3385
    %v3387 = vsel %vm123, %v3384, 0
    %v3389 = vsel %vm123, %v3386, 0
    %3391 = vmatprep.subr.mxu0 0.0
    %3392 = vmatpush1.xpose.msra.mxu0 0.0
    %3393 = vmatprep.subr.mxu0 0.0
    %3394 = vmatpush1.xpose.msra.mxu0 0.0
    %3395 = vmatprep.subr.mxu0 0.0
    %3396 = vmatpush1.xpose.msra.mxu0 0.0
    %3397 = vmatprep.subr.mxu0 0.0
    %3398 = vmatpush1.xpose.msra.mxu0 0.0
    %3399 = vmatprep.subr.mxu0 0.0
    %3400 = vmatpush1.xpose.msra.mxu0 0.0
    %3401 = vmatprep.subr.mxu0 0.0
    %3402 = vmatpush1.xpose.msra.mxu0 0.0
    %3403 = vmatprep.subr.mxu0 0.0
    %3404 = vmatpush1.xpose.msra.mxu0 0.0
    %3405 = vmatprep.subr.mxu0 0.0
    %3406 = vmatpush1.xpose.msra.mxu0 0.0
    %3407 = vmatprep.subr.mxu0 0.0
    %3408 = vmatpush1.xpose.msra.mxu0 0.0
    %3409 = vmatprep.subr.mxu0 0.0
    %3410 = vmatpush1.xpose.msra.mxu0 0.0
    %3411 = vmatprep.subr.mxu0 0.0
    %3412 = vmatpush1.xpose.msra.mxu0 0.0
    %3413 = vmatprep.subr.mxu0 0.0
    %3414 = vmatpush1.xpose.msra.mxu0 0.0
    %3415 = vmatprep.subr.mxu0 0.0
    %3416 = vmatpush1.xpose.msra.mxu0 0.0
    %3417 = vmatprep.subr.mxu0 0.0
    %3418 = vmatpush1.xpose.msra.mxu0 0.0
    %3419 = vmatprep.subr.mxu0 0.0
    %3420 = vmatpush1.xpose.msra.mxu0 0.0
    %3421 = vmatprep.subr.mxu0 0.0
    %3422 = vmatpush1.xpose.msra.mxu0 %v3389
    %3423 = vmatprep.subr.mxu0 0.0
    %3424 = vmatpush2.xpose.msra.mxu0 0.0
    %3425 = vmatprep.subr.mxu0 0.0
    %3426 = vmatpush2.xpose.msra.mxu0 0.0
    %3427 = vmatprep.subr.mxu0 0.0
    %3428 = vmatpush2.xpose.msra.mxu0 0.0
    %3429 = vmatprep.subr.mxu0 0.0
    %3430 = vmatpush2.xpose.msra.mxu0 0.0
    %3431 = vmatprep.subr.mxu0 0.0
    %3432 = vmatpush2.xpose.msra.mxu0 0.0
    %3433 = vmatprep.subr.mxu0 0.0
    %3434 = vmatpush2.xpose.msra.mxu0 0.0
    %3435 = vmatprep.subr.mxu0 0.0
    %3436 = vmatpush2.xpose.msra.mxu0 0.0
    %3437 = vmatprep.subr.mxu0 0.0
    %3438 = vmatpush2.xpose.msra.mxu0 0.0
    %3439 = vmatprep.subr.mxu0 0.0
    %3440 = vmatpush2.xpose.msra.mxu0 0.0
    %3441 = vmatprep.subr.mxu0 0.0
    %3442 = vmatpush2.xpose.msra.mxu0 0.0
    %3443 = vmatprep.subr.mxu0 0.0
    %3444 = vmatpush2.xpose.msra.mxu0 0.0
    %3445 = vmatprep.subr.mxu0 0.0
    %3446 = vmatpush2.xpose.msra.mxu0 0.0
    %3447 = vmatprep.subr.mxu0 0.0
    %3448 = vmatpush2.xpose.msra.mxu0 0.0
    %3449 = vmatprep.subr.mxu0 0.0
    %3450 = vmatpush2.xpose.msra.mxu0 0.0
    %3451 = vmatprep.subr.mxu0 0.0
    %3452 = vmatpush2.xpose.msra.mxu0 0.0
    %3453 = vmatprep.subr.mxu0 0.0
    %3454 = vmatpush2.xpose.msra.mxu0 0.0
    %3455 = vmatprep.mubr.f32.mxu0 0.0
    %3456 = vmatmul.mubr.f32.gmra.mxu0 %v3387
    %v3457 = vpop.f32.mrf.mxu0
    %v3458 = vadd.f32 0.0, %v3457
    %v3459 = vpop.f32.mrf.mxu0
    %3460 = vdwg.mxu0
    %v3461 = vsel %vm123, %v3458, -inf
    %3462 = vmax.xlane.f32.xlu0 %v3461
    %v3463 = vpop.xlane.xlu0 %3462
    %v3464 = vsub.f32 %v3458, %v3463
    %v3465 = vmul.f32 %v3464, 1.442695
    %v3466 = vpow.pop %v3465
    %v3467 = vsel %vm123, %v3466, 0.0
    %3468 = vadd.xlane.f32.xlu0 %v3467
    %v3469 = vpop.xlane.xlu0 %3468
    %v3470 = vrcp.pop %v3469
    %v3471 = vmul.f32 %v3466, %v3470
    %3472 = vrot.lane.b32.xlu0 %v2134, 40
    %v3473 = vpop.permute.xlu0 %3472
    %v3476 = vsel %vm123, %v3471, 0
    %3478 = vmatprep.subr.mxu0 0.0
    %3479 = vmatpush1.msra.mxu0 0.0
    %3480 = vmatprep.subr.mxu0 0.0
    %3481 = vmatpush1.msra.mxu0 0.0
    %3482 = vmatprep.subr.mxu0 0.0
    %3483 = vmatpush1.msra.mxu0 0.0
    %3484 = vmatprep.subr.mxu0 0.0
    %3485 = vmatpush1.msra.mxu0 0.0
    %3486 = vmatprep.subr.mxu0 0.0
    %3487 = vmatpush1.msra.mxu0 0.0
    %3488 = vmatprep.subr.mxu0 0.0
    %3489 = vmatpush1.msra.mxu0 0.0
    %3490 = vmatprep.subr.mxu0 0.0
    %3491 = vmatpush1.msra.mxu0 0.0
    %3492 = vmatprep.subr.mxu0 0.0
    %3493 = vmatpush1.msra.mxu0 0.0
    %3494 = vmatprep.subr.mxu0 0.0
    %3495 = vmatpush1.msra.mxu0 0.0
    %3496 = vmatprep.subr.mxu0 0.0
    %3497 = vmatpush1.msra.mxu0 0.0
    %3498 = vmatprep.subr.mxu0 0.0
    %3499 = vmatpush1.msra.mxu0 0.0
    %3500 = vmatprep.subr.mxu0 0.0
    %3501 = vmatpush1.msra.mxu0 0.0
    %3502 = vmatprep.subr.mxu0 0.0
    %3503 = vmatpush1.msra.mxu0 0.0
    %3504 = vmatprep.subr.mxu0 0.0
    %3505 = vmatpush1.msra.mxu0 0.0
    %3506 = vmatprep.subr.mxu0 0.0
    %3507 = vmatpush1.msra.mxu0 0.0
    %3508 = vmatprep.subr.mxu0 0.0
    %3509 = vmatpush1.msra.mxu0 %v3473
    %3510 = vmatprep.subr.mxu0 0.0
    %3511 = vmatpush2.msra.mxu0 0.0
    %3512 = vmatprep.subr.mxu0 0.0
    %3513 = vmatpush2.msra.mxu0 0.0
    %3514 = vmatprep.subr.mxu0 0.0
    %3515 = vmatpush2.msra.mxu0 0.0
    %3516 = vmatprep.subr.mxu0 0.0
    %3517 = vmatpush2.msra.mxu0 0.0
    %3518 = vmatprep.subr.mxu0 0.0
    %3519 = vmatpush2.msra.mxu0 0.0
    %3520 = vmatprep.subr.mxu0 0.0
    %3521 = vmatpush2.msra.mxu0 0.0
    %3522 = vmatprep.subr.mxu0 0.0
    %3523 = vmatpush2.msra.mxu0 0.0
    %3524 = vmatprep.subr.mxu0 0.0
    %3525 = vmatpush2.msra.mxu0 0.0
    %3526 = vmatprep.subr.mxu0 0.0
    %3527 = vmatpush2.msra.mxu0 0.0
    %3528 = vmatprep.subr.mxu0 0.0
    %3529 = vmatpush2.msra.mxu0 0.0
    %3530 = vmatprep.subr.mxu0 0.0
    %3531 = vmatpush2.msra.mxu0 0.0
    %3532 = vmatprep.subr.mxu0 0.0
    %3533 = vmatpush2.msra.mxu0 0.0
    %3534 = vmatprep.subr.mxu0 0.0
    %3535 = vmatpush2.msra.mxu0 0.0
    %3536 = vmatprep.subr.mxu0 0.0
    %3537 = vmatpush2.msra.mxu0 0.0
    %3538 = vmatprep.subr.mxu0 0.0
    %3539 = vmatpush2.msra.mxu0 0.0
    %3540 = vmatprep.subr.mxu0 0.0
    %3541 = vmatpush2.msra.mxu0 0.0
    %3542 = vmatprep.mubr.f32.mxu0 0.0
    %3543 = vmatmul.mubr.f32.gmra.mxu0 %v3476
    %v3544 = vpop.f32.mrf.mxu0
    %v3545 = vadd.f32 0.0, %v3544
    %v3546 = vpop.f32.mrf.mxu0
    %3547 = vdwg.mxu0
    %3548 = vrot.lane.b32.xlu0 %v2309, 104
    %v3549 = vpop.permute.xlu0 %3548
    %3550 = vrot.lane.b32.xlu0 %v2139, 72
    %v3551 = vpop.permute.xlu0 %3550
    %v3552 = vsel %vm123, %v3549, 0
    %v3554 = vsel %vm123, %v3551, 0
    %3556 = vmatprep.subr.mxu0 0.0
    %3557 = vmatpush1.xpose.msra.mxu0 0.0
    %3558 = vmatprep.subr.mxu0 0.0
    %3559 = vmatpush1.xpose.msra.mxu0 0.0
    %3560 = vmatprep.subr.mxu0 0.0
    %3561 = vmatpush1.xpose.msra.mxu0 0.0
    %3562 = vmatprep.subr.mxu0 0.0
    %3563 = vmatpush1.xpose.msra.mxu0 0.0
    %3564 = vmatprep.subr.mxu0 0.0
    %3565 = vmatpush1.xpose.msra.mxu0 0.0
    %3566 = vmatprep.subr.mxu0 0.0
    %3567 = vmatpush1.xpose.msra.mxu0 0.0
    %3568 = vmatprep.subr.mxu0 0.0
    %3569 = vmatpush1.xpose.msra.mxu0 0.0
    %3570 = vmatprep.subr.mxu0 0.0
    %3571 = vmatpush1.xpose.msra.mxu0 0.0
    %3572 = vmatprep.subr.mxu0 0.0
    %3573 = vmatpush1.xpose.msra.mxu0 0.0
    %3574 = vmatprep.subr.mxu0 0.0
    %3575 = vmatpush1.xpose.msra.mxu0 0.0
    %3576 = vmatprep.subr.mxu0 0.0
    %3577 = vmatpush1.xpose.msra.mxu0 0.0
    %3578 = vmatprep.subr.mxu0 0.0
    %3579 = vmatpush1.xpose.msra.mxu0 0.0
    %3580 = vmatprep.subr.mxu0 0.0
    %3581 = vmatpush1.xpose.msra.mxu0 0.0
    %3582 = vmatprep.subr.mxu0 0.0
    %3583 = vmatpush1.xpose.msra.mxu0 0.0
    %3584 = vmatprep.subr.mxu0 0.0
    %3585 = vmatpush1.xpose.msra.mxu0 0.0
    %3586 = vmatprep.subr.mxu0 0.0
    %3587 = vmatpush1.xpose.msra.mxu0 %v3554
    %3588 = vmatprep.subr.mxu0 0.0
    %3589 = vmatpush2.xpose.msra.mxu0 0.0
    %3590 = vmatprep.subr.mxu0 0.0
    %3591 = vmatpush2.xpose.msra.mxu0 0.0
    %3592 = vmatprep.subr.mxu0 0.0
    %3593 = vmatpush2.xpose.msra.mxu0 0.0
    %3594 = vmatprep.subr.mxu0 0.0
    %3595 = vmatpush2.xpose.msra.mxu0 0.0
    %3596 = vmatprep.subr.mxu0 0.0
    %3597 = vmatpush2.xpose.msra.mxu0 0.0
    %3598 = vmatprep.subr.mxu0 0.0
    %3599 = vmatpush2.xpose.msra.mxu0 0.0
    %3600 = vmatprep.subr.mxu0 0.0
    %3601 = vmatpush2.xpose.msra.mxu0 0.0
    %3602 = vmatprep.subr.mxu0 0.0
    %3603 = vmatpush2.xpose.msra.mxu0 0.0
    %3604 = vmatprep.subr.mxu0 0.0
    %3605 = vmatpush2.xpose.msra.mxu0 0.0
    %3606 = vmatprep.subr.mxu0 0.0
    %3607 = vmatpush2.xpose.msra.mxu0 0.0
    %3608 = vmatprep.subr.mxu0 0.0
    %3609 = vmatpush2.xpose.msra.mxu0 0.0
    %3610 = vmatprep.subr.mxu0 0.0
    %3611 = vmatpush2.xpose.msra.mxu0 0.0
    %3612 = vmatprep.subr.mxu0 0.0
    %3613 = vmatpush2.xpose.msra.mxu0 0.0
    %3614 = vmatprep.subr.mxu0 0.0
    %3615 = vmatpush2.xpose.msra.mxu0 0.0
    %3616 = vmatprep.subr.mxu0 0.0
    %3617 = vmatpush2.xpose.msra.mxu0 0.0
    %3618 = vmatprep.subr.mxu0 0.0
    %3619 = vmatpush2.xpose.msra.mxu0 0.0
    %3620 = vmatprep.mubr.f32.mxu0 0.0
    %3621 = vmatmul.mubr.f32.gmra.mxu0 %v3552
    %v3622 = vpop.f32.mrf.mxu0
    %v3623 = vadd.f32 0.0, %v3622
    %v3624 = vpop.f32.mrf.mxu0
    %3625 = vdwg.mxu0
    %v3626 = vsel %vm123, %v3623, -inf
    %3627 = vmax.xlane.f32.xlu0 %v3626
    %v3628 = vpop.xlane.xlu0 %3627
    %v3629 = vsub.f32 %v3623, %v3628
    %v3630 = vmul.f32 %v3629, 1.442695
    %v3631 = vpow.pop %v3630
    %v3632 = vsel %vm123, %v3631, 0.0
    %3633 = vadd.xlane.f32.xlu0 %v3632
    %v3634 = vpop.xlane.xlu0 %3633
    %v3635 = vrcp.pop %v3634
    %v3636 = vmul.f32 %v3631, %v3635
    %3637 = vrot.lane.b32.xlu0 %v2139, 40
    %v3638 = vpop.permute.xlu0 %3637
    %v3641 = vsel %vm123, %v3636, 0
    %3643 = vmatprep.subr.mxu0 0.0
    %3644 = vmatpush1.msra.mxu0 0.0
    %3645 = vmatprep.subr.mxu0 0.0
    %3646 = vmatpush1.msra.mxu0 0.0
    %3647 = vmatprep.subr.mxu0 0.0
    %3648 = vmatpush1.msra.mxu0 0.0
    %3649 = vmatprep.subr.mxu0 0.0
    %3650 = vmatpush1.msra.mxu0 0.0
    %3651 = vmatprep.subr.mxu0 0.0
    %3652 = vmatpush1.msra.mxu0 0.0
    %3653 = vmatprep.subr.mxu0 0.0
    %3654 = vmatpush1.msra.mxu0 0.0
    %3655 = vmatprep.subr.mxu0 0.0
    %3656 = vmatpush1.msra.mxu0 0.0
    %3657 = vmatprep.subr.mxu0 0.0
    %3658 = vmatpush1.msra.mxu0 0.0
    %3659 = vmatprep.subr.mxu0 0.0
    %3660 = vmatpush1.msra.mxu0 0.0
    %3661 = vmatprep.subr.mxu0 0.0
    %3662 = vmatpush1.msra.mxu0 0.0
    %3663 = vmatprep.subr.mxu0 0.0
    %3664 = vmatpush1.msra.mxu0 0.0
    %3665 = vmatprep.subr.mxu0 0.0
    %3666 = vmatpush1.msra.mxu0 0.0
    %3667 = vmatprep.subr.mxu0 0.0
    %3668 = vmatpush1.msra.mxu0 0.0
    %3669 = vmatprep.subr.mxu0 0.0
    %3670 = vmatpush1.msra.mxu0 0.0
    %3671 = vmatprep.subr.mxu0 0.0
    %3672 = vmatpush1.msra.mxu0 0.0
    %3673 = vmatprep.subr.mxu0 0.0
    %3674 = vmatpush1.msra.mxu0 %v3638
    %3675 = vmatprep.subr.mxu0 0.0
    %3676 = vmatpush2.msra.mxu0 0.0
    %3677 = vmatprep.subr.mxu0 0.0
    %3678 = vmatpush2.msra.mxu0 0.0
    %3679 = vmatprep.subr.mxu0 0.0
    %3680 = vmatpush2.msra.mxu0 0.0
    %3681 = vmatprep.subr.mxu0 0.0
    %3682 = vmatpush2.msra.mxu0 0.0
    %3683 = vmatprep.subr.mxu0 0.0
    %3684 = vmatpush2.msra.mxu0 0.0
    %3685 = vmatprep.subr.mxu0 0.0
    %3686 = vmatpush2.msra.mxu0 0.0
    %3687 = vmatprep.subr.mxu0 0.0
    %3688 = vmatpush2.msra.mxu0 0.0
    %3689 = vmatprep.subr.mxu0 0.0
    %3690 = vmatpush2.msra.mxu0 0.0
    %3691 = vmatprep.subr.mxu0 0.0
    %3692 = vmatpush2.msra.mxu0 0.0
    %3693 = vmatprep.subr.mxu0 0.0
    %3694 = vmatpush2.msra.mxu0 0.0
    %3695 = vmatprep.subr.mxu0 0.0
    %3696 = vmatpush2.msra.mxu0 0.0
    %3697 = vmatprep.subr.mxu0 0.0
    %3698 = vmatpush2.msra.mxu0 0.0
    %3699 = vmatprep.subr.mxu0 0.0
    %3700 = vmatpush2.msra.mxu0 0.0
    %3701 = vmatprep.subr.mxu0 0.0
    %3702 = vmatpush2.msra.mxu0 0.0
    %3703 = vmatprep.subr.mxu0 0.0
    %3704 = vmatpush2.msra.mxu0 0.0
    %3705 = vmatprep.subr.mxu0 0.0
    %3706 = vmatpush2.msra.mxu0 0.0
    %3707 = vmatprep.mubr.f32.mxu0 0.0
    %3708 = vmatmul.mubr.f32.gmra.mxu0 %v3641
    %v3709 = vpop.f32.mrf.mxu0
    %v3710 = vadd.f32 0.0, %v3709
    %v3711 = vpop.f32.mrf.mxu0
    %3712 = vdwg.mxu0
    %v3714 = vsel %vm123, %v3545, 0
    %v3717 = vsel %vm123, %v3710, 0
    %3719 = vmatprep.subr.mxu0 0.0
    %3720 = vmatpush1.msra.mxu0 0.0
    %3721 = vmatprep.subr.mxu0 0.0
    %3722 = vmatpush1.msra.mxu0 0.0
    %3723 = vmatprep.subr.mxu0 0.0
    %3724 = vmatpush1.msra.mxu0 0.0
    %3725 = vmatprep.subr.mxu0 0.0
    %3726 = vmatpush1.msra.mxu0 0.0
    %3727 = vmatprep.subr.mxu0 0.0
    %3728 = vmatpush1.msra.mxu0 0.0
    %3729 = vmatprep.subr.mxu0 0.0
    %3730 = vmatpush1.msra.mxu0 0.0
    %3731 = vmatprep.subr.mxu0 0.0
    %3732 = vmatpush1.msra.mxu0 0.0
    %3733 = vmatprep.subr.mxu0 0.0
    %3734 = vmatpush1.msra.mxu0 0.0
    %3735 = vmatprep.subr.mxu0 0.0
    %3736 = vmatpush1.msra.mxu0 0.0
    %3737 = vmatprep.subr.mxu0 0.0
    %3738 = vmatpush1.msra.mxu0 0.0
    %3739 = vmatprep.subr.mxu0 0.0
    %3740 = vmatpush1.msra.mxu0 0.0
    %3741 = vmatprep.subr.mxu0 0.0
    %3742 = vmatpush1.msra.mxu0 0.0
    %3743 = vmatprep.subr.mxu0 0.0
    %3744 = vmatpush1.msra.mxu0 0.0
    %3745 = vmatprep.subr.mxu0 0.0
    %3746 = vmatpush1.msra.mxu0 0.0
    %3747 = vmatprep.subr.mxu0 0.0
    %3748 = vmatpush1.msra.mxu0 0.0
    %3749 = vmatprep.subr.mxu0 0.0
    %3750 = vmatpush1.msra.mxu0 %v3382
    %3751 = vmatprep.subr.mxu0 0.0
    %3752 = vmatpush2.msra.mxu0 0.0
    %3753 = vmatprep.subr.mxu0 0.0
    %3754 = vmatpush2.msra.mxu0 0.0
    %3755 = vmatprep.subr.mxu0 0.0
    %3756 = vmatpush2.msra.mxu0 0.0
    %3757 = vmatprep.subr.mxu0 0.0
    %3758 = vmatpush2.msra.mxu0 0.0
    %3759 = vmatprep.subr.mxu0 0.0
    %3760 = vmatpush2.msra.mxu0 0.0
    %3761 = vmatprep.subr.mxu0 0.0
    %3762 = vmatpush2.msra.mxu0 0.0
    %3763 = vmatprep.subr.mxu0 0.0
    %3764 = vmatpush2.msra.mxu0 0.0
    %3765 = vmatprep.subr.mxu0 0.0
    %3766 = vmatpush2.msra.mxu0 0.0
    %3767 = vmatprep.subr.mxu0 0.0
    %3768 = vmatpush2.msra.mxu0 0.0
    %3769 = vmatprep.subr.mxu0 0.0
    %3770 = vmatpush2.msra.mxu0 0.0
    %3771 = vmatprep.subr.mxu0 0.0
    %3772 = vmatpush2.msra.mxu0 0.0
    %3773 = vmatprep.subr.mxu0 0.0
    %3774 = vmatpush2.msra.mxu0 0.0
    %3775 = vmatprep.subr.mxu0 0.0
    %3776 = vmatpush2.msra.mxu0 0.0
    %3777 = vmatprep.subr.mxu0 0.0
    %3778 = vmatpush2.msra.mxu0 0.0
    %3779 = vmatprep.subr.mxu0 0.0
    %3780 = vmatpush2.msra.mxu0 0.0
    %3781 = vmatprep.subr.mxu0 0.0
    %3782 = vmatpush2.msra.mxu0 0.0
    %3783 = vmatprep.mubr.f32.mxu0 0.0
    %3784 = vmatmul.mubr.f32.gmra.mxu0 %v3714
    %v3785 = vpop.f32.mrf.mxu0
    %v3786 = vadd.f32 0.0, %v3785
    %v3787 = vpop.f32.mrf.mxu0
    %3788 = vmatprep.mubr.f32.mxu0 0.0
    %3789 = vmatmul.mubr.f32.gmra.mxu0 %v3717
    %v3790 = vpop.f32.mrf.mxu0
    %v3791 = vadd.f32 0.0, %v3790
    %v3792 = vpop.f32.mrf.mxu0
    %3793 = vdwg.mxu0
    %v3794 = vadd.f32 %v3380, %v3786
    %v3795 = vadd.f32 %v3381, %v3791
    %v3796 = vld [vmem:[#allocation2 + $0x149] sm:$0x1]
    %v3797 = vlaneseq
    %v3798 = vshrl.u32 %v3797, 7
    %v3799 = vsub.s32 0, %v3798
    %v3800 = vrot.slane %v3796, %v3799
    %v3801 = vadd.f32 %v3794, %v3800
    %v3802 = vadd.f32 %v3795, %v3800
    %v3803 = vld [vmem:[#allocation2 + $0x14c] sm:$0x1]
    %v3804 = vld [vmem:[#allocation2 + $0x14d] sm:$0x1]
    %v3805 = vadd.f32 %v2050, %v3801
    %v3806 = vadd.f32 %v2051, %v3802
    %v3807 = vsel %vm36, %v3805, 0.0
    %3808 = vadd.xlane.f32.xlu0 %v3807
    %v3809 = vpop.xlane.xlu0 %3808
    %v3810 = vsel %vm36, %v3806, 0.0
    %3811 = vadd.xlane.f32.xlu0 %v3810
    %v3812 = vpop.xlane.xlu0 %3811
    %v3813 = vmul.f32 %v3809, %v1790
    %v3814 = vmul.f32 %v3812, %v1790
    %v3815 = vsub.f32 %v3805, %v3813
    %v3816 = vsub.f32 %v3806, %v3814
    %v3817 = vmul.f32 %v3815, %v3815
    %v3818 = vmul.f32 %v3816, %v3816
    %v3819 = vsel %vm36, %v3817, 0.0
    %3820 = vadd.xlane.f32.xlu0 %v3819
    %v3821 = vpop.xlane.xlu0 %3820
    %v3822 = vsel %vm36, %v3818, 0.0
    %3823 = vadd.xlane.f32.xlu0 %v3822
    %v3824 = vpop.xlane.xlu0 %3823
    %v3825 = vmul.f32 %v3821, %v1790
    %v3826 = vmul.f32 %v3824, %v1790
    %v3827 = vadd.f32 %v3825, 1e-05
    %v3828 = vadd.f32 %v3826, 1e-05
    %v3829 = vrsqrt.pop %v3827
    %v3830 = vrsqrt.pop %v3828
    %v3831 = vmul.f32 %v3815, %v3829
    %v3832 = vmul.f32 %v3816, %v3830
    %v3833 = vlaneseq
    %v3834 = vshrl.u32 %v3833, 7
    %v3835 = vsub.s32 0, %v3834
    %v3836 = vrot.slane %v3803, %v3835
    %v3837 = vmul.f32 %v3831, %v3836
    %v3838 = vmul.f32 %v3832, %v3836
    %v3839 = vlaneseq
    %v3840 = vshrl.u32 %v3839, 7
    %v3841 = vsub.s32 0, %v3840
    %v3842 = vrot.slane %v3804, %v3841
    %v3843 = vadd.f32 %v3837, %v3842
    %v3844 = vadd.f32 %v3838, %v3842
    %v3845 = vld [vmem:[#allocation2 + $0xe8] sm:$0xff]
    %v3846 = vld [vmem:[#allocation2 + $0xf0] sm:$0xff]
    %v3847 = vld [vmem:[#allocation2 + $0xf8] sm:$0xff]
    %v3848 = vld [vmem:[#allocation2 + $0x100] sm:$0xff]
    %v3849 = vld [vmem:[#allocation2 + $0x14a] sm:$0x1]
    %v3850 = vld [vmem:[#allocation2 + $0x108] sm:$0xff]
    %v3851 = vld [vmem:[#allocation2 + $0x110] sm:$0xff]
    %v3852 = vld [vmem:[#allocation2 + $0x118] sm:$0xff]
    %v3853 = vld [vmem:[#allocation2 + $0x120] sm:$0xff]
    %v3854 = vld [vmem:[#allocation2 + $0x128] sm:$0xff]
    %v3855 = vld [vmem:[#allocation2 + $0x130] sm:$0xff]
    %v3856 = vld [vmem:[#allocation2 + $0x138] sm:$0xff]
    %v3857 = vld [vmem:[#allocation2 + $0x140] sm:$0xff]
    %v3858 = vld [vmem:[#allocation2 + $0x14b] sm:$0x1]
    %v3859 = vlaneseq
    %v3860 = vshrl.u32 %v3859, 7
    %v3861 = vsub.s32 0, %v3860
    %v3862 = vrot.slane %v3849, %v3861
    %v3864 = vsel %vm36, %v3843, 0
    %v3867 = vsel %vm36, %v3844, 0
    %3869 = vmatprep.subr.mxu0 0.0
    %3870 = vmatpush1.msra.mxu0 0.0
    %3871 = vmatprep.subr.mxu0 0.0
    %3872 = vmatpush1.msra.mxu0 0.0
    %3873 = vmatprep.subr.mxu0 0.0
    %3874 = vmatpush1.msra.mxu0 0.0
    %3875 = vmatprep.subr.mxu0 0.0
    %3876 = vmatpush1.msra.mxu0 0.0
    %3877 = vmatprep.subr.mxu0 0.0
    %3878 = vmatpush1.msra.mxu0 0.0
    %3879 = vmatprep.subr.mxu0 0.0
    %3880 = vmatpush1.msra.mxu0 0.0
    %3881 = vmatprep.subr.mxu0 0.0
    %3882 = vmatpush1.msra.mxu0 0.0
    %3883 = vmatprep.subr.mxu0 0.0
    %3884 = vmatpush1.msra.mxu0 0.0
    %3885 = vmatprep.subr.mxu0 0.0
    %3886 = vmatpush1.msra.mxu0 0.0
    %3887 = vmatprep.subr.mxu0 0.0
    %3888 = vmatpush1.msra.mxu0 0.0
    %3889 = vmatprep.subr.mxu0 0.0
    %3890 = vmatpush1.msra.mxu0 0.0
    %3891 = vmatprep.subr.mxu0 0.0
    %3892 = vmatpush1.msra.mxu0 0.0
    %3893 = vmatprep.subr.mxu0 0.0
    %3894 = vmatpush1.msra.mxu0 %v3848
    %3895 = vmatprep.subr.mxu0 0.0
    %3896 = vmatpush1.msra.mxu0 %v3847
    %3897 = vmatprep.subr.mxu0 0.0
    %3898 = vmatpush1.msra.mxu0 %v3846
    %3899 = vmatprep.subr.mxu0 0.0
    %3900 = vmatpush1.msra.mxu0 %v3845
    %3901 = vmatprep.subr.mxu0 0.0
    %3902 = vmatpush2.msra.mxu0 0.0
    %3903 = vmatprep.subr.mxu0 0.0
    %3904 = vmatpush2.msra.mxu0 0.0
    %3905 = vmatprep.subr.mxu0 0.0
    %3906 = vmatpush2.msra.mxu0 0.0
    %3907 = vmatprep.subr.mxu0 0.0
    %3908 = vmatpush2.msra.mxu0 0.0
    %3909 = vmatprep.subr.mxu0 0.0
    %3910 = vmatpush2.msra.mxu0 0.0
    %3911 = vmatprep.subr.mxu0 0.0
    %3912 = vmatpush2.msra.mxu0 0.0
    %3913 = vmatprep.subr.mxu0 0.0
    %3914 = vmatpush2.msra.mxu0 0.0
    %3915 = vmatprep.subr.mxu0 0.0
    %3916 = vmatpush2.msra.mxu0 0.0
    %3917 = vmatprep.subr.mxu0 0.0
    %3918 = vmatpush2.msra.mxu0 0.0
    %3919 = vmatprep.subr.mxu0 0.0
    %3920 = vmatpush2.msra.mxu0 0.0
    %3921 = vmatprep.subr.mxu0 0.0
    %3922 = vmatpush2.msra.mxu0 0.0
    %3923 = vmatprep.subr.mxu0 0.0
    %3924 = vmatpush2.msra.mxu0 0.0
    %3925 = vmatprep.subr.mxu0 0.0
    %3926 = vmatpush2.msra.mxu0 0.0
    %3927 = vmatprep.subr.mxu0 0.0
    %3928 = vmatpush2.msra.mxu0 0.0
    %3929 = vmatprep.subr.mxu0 0.0
    %3930 = vmatpush2.msra.mxu0 0.0
    %3931 = vmatprep.subr.mxu0 0.0
    %3932 = vmatpush2.msra.mxu0 0.0
    %3933 = vmatprep.mubr.f32.mxu0 0.0
    %3934 = vmatmul.mubr.f32.gmra.mxu0 %v3864
    %v3935 = vpop.f32.mrf.mxu0
    %v3936 = vadd.f32 %v3862, %v3935
    %v3937 = vpop.f32.mrf.mxu0
    %3938 = vmatprep.mubr.f32.mxu0 0.0
    %3939 = vmatmul.mubr.f32.gmra.mxu0 %v3867
    %v3940 = vpop.f32.mrf.mxu0
    %v3941 = vadd.f32 %v3862, %v3940
    %v3942 = vpop.f32.mrf.mxu0
    %3943 = vdwg.mxu0
    %v3944 = vmax.f32 %v3936, 0.0
    %v3945 = vmax.f32 %v3941, 0.0
    %v3946 = vlaneseq
    %v3947 = vshrl.u32 %v3946, 7
    %v3948 = vsub.s32 0, %v3947
    %v3949 = vrot.slane %v3858, %v3948
    %v3951 = vsel %vm1928, %v3944, 0
    %v3954 = vsel %vm1928, %v3945, 0
    %3956 = vmatprep.subr.mxu0 0.0
    %3957 = vmatpush1.msra.mxu0 0.0
    %3958 = vmatprep.subr.mxu0 0.0
    %3959 = vmatpush1.msra.mxu0 0.0
    %3960 = vmatprep.subr.mxu0 0.0
    %3961 = vmatpush1.msra.mxu0 0.0
    %3962 = vmatprep.subr.mxu0 0.0
    %3963 = vmatpush1.msra.mxu0 0.0
    %3964 = vmatprep.subr.mxu0 0.0
    %3965 = vmatpush1.msra.mxu0 0.0
    %3966 = vmatprep.subr.mxu0 0.0
    %3967 = vmatpush1.msra.mxu0 0.0
    %3968 = vmatprep.subr.mxu0 0.0
    %3969 = vmatpush1.msra.mxu0 0.0
    %3970 = vmatprep.subr.mxu0 0.0
    %3971 = vmatpush1.msra.mxu0 0.0
    %3972 = vmatprep.subr.mxu0 0.0
    %3973 = vmatpush1.msra.mxu0 %v3857
    %3974 = vmatprep.subr.mxu0 0.0
    %3975 = vmatpush1.msra.mxu0 %v3856
    %3976 = vmatprep.subr.mxu0 0.0
    %3977 = vmatpush1.msra.mxu0 %v3855
    %3978 = vmatprep.subr.mxu0 0.0
    %3979 = vmatpush1.msra.mxu0 %v3854
    %3980 = vmatprep.subr.mxu0 0.0
    %3981 = vmatpush1.msra.mxu0 %v3853
    %3982 = vmatprep.subr.mxu0 0.0
    %3983 = vmatpush1.msra.mxu0 %v3852
    %3984 = vmatprep.subr.mxu0 0.0
    %3985 = vmatpush1.msra.mxu0 %v3851
    %3986 = vmatprep.subr.mxu0 0.0
    %3987 = vmatpush1.msra.mxu0 %v3850
    %3988 = vmatprep.subr.mxu0 0.0
    %3989 = vmatpush2.msra.mxu0 0.0
    %3990 = vmatprep.subr.mxu0 0.0
    %3991 = vmatpush2.msra.mxu0 0.0
    %3992 = vmatprep.subr.mxu0 0.0
    %3993 = vmatpush2.msra.mxu0 0.0
    %3994 = vmatprep.subr.mxu0 0.0
    %3995 = vmatpush2.msra.mxu0 0.0
    %3996 = vmatprep.subr.mxu0 0.0
    %3997 = vmatpush2.msra.mxu0 0.0
    %3998 = vmatprep.subr.mxu0 0.0
    %3999 = vmatpush2.msra.mxu0 0.0
    %4000 = vmatprep.subr.mxu0 0.0
    %4001 = vmatpush2.msra.mxu0 0.0
    %4002 = vmatprep.subr.mxu0 0.0
    %4003 = vmatpush2.msra.mxu0 0.0
    %4004 = vmatprep.subr.mxu0 0.0
    %4005 = vmatpush2.msra.mxu0 0.0
    %4006 = vmatprep.subr.mxu0 0.0
    %4007 = vmatpush2.msra.mxu0 0.0
    %4008 = vmatprep.subr.mxu0 0.0
    %4009 = vmatpush2.msra.mxu0 0.0
    %4010 = vmatprep.subr.mxu0 0.0
    %4011 = vmatpush2.msra.mxu0 0.0
    %4012 = vmatprep.subr.mxu0 0.0
    %4013 = vmatpush2.msra.mxu0 0.0
    %4014 = vmatprep.subr.mxu0 0.0
    %4015 = vmatpush2.msra.mxu0 0.0
    %4016 = vmatprep.subr.mxu0 0.0
    %4017 = vmatpush2.msra.mxu0 0.0
    %4018 = vmatprep.subr.mxu0 0.0
    %4019 = vmatpush2.msra.mxu0 0.0
    %4020 = vmatprep.mubr.f32.mxu0 0.0
    %4021 = vmatmul.mubr.f32.gmra.mxu0 %v3951
    %v4022 = vpop.f32.mrf.mxu0
    %v4023 = vadd.f32 %v3949, %v4022
    %v4024 = vpop.f32.mrf.mxu0
    %4025 = vmatprep.mubr.f32.mxu0 0.0
    %4026 = vmatmul.mubr.f32.gmra.mxu0 %v3954
    %v4027 = vpop.f32.mrf.mxu0
    %v4028 = vadd.f32 %v3949, %v4027
    %v4029 = vpop.f32.mrf.mxu0
    %4030 = vdwg.mxu0
    %v4031 = vld [vmem:[#allocation2 + $0x14e] sm:$0x1]
    %v4032 = vld [vmem:[#allocation2 + $0x14f] sm:$0x1]
    %v4033 = vadd.f32 %v3843, %v4023
    %v4034 = vadd.f32 %v3844, %v4028
    %v4035 = vsel %vm36, %v4033, 0.0
    %4036 = vadd.xlane.f32.xlu0 %v4035
    %v4037 = vpop.xlane.xlu0 %4036
    %v4038 = vsel %vm36, %v4034, 0.0
    %4039 = vadd.xlane.f32.xlu0 %v4038
    %v4040 = vpop.xlane.xlu0 %4039
    %v4041 = vmul.f32 %v4037, %v1790
    %v4042 = vmul.f32 %v4040, %v1790
    %v4043 = vsub.f32 %v4033, %v4041
    %v4044 = vsub.f32 %v4034, %v4042
    %v4045 = vmul.f32 %v4043, %v4043
    %v4046 = vmul.f32 %v4044, %v4044
    %v4047 = vsel %vm36, %v4045, 0.0
    %4048 = vadd.xlane.f32.xlu0 %v4047
    %v4049 = vpop.xlane.xlu0 %4048
    %v4050 = vsel %vm36, %v4046, 0.0
    %4051 = vadd.xlane.f32.xlu0 %v4050
    %v4052 = vpop.xlane.xlu0 %4051
    %v4053 = vmul.f32 %v4049, %v1790
    %v4054 = vmul.f32 %v4052, %v1790
    %v4055 = vadd.f32 %v4053, 1e-05
    %v4056 = vadd.f32 %v4054, 1e-05
    %v4057 = vrsqrt.pop %v4055
    %v4058 = vrsqrt.pop %v4056
    %v4059 = vmul.f32 %v4043, %v4057
    %v4060 = vmul.f32 %v4044, %v4058
    %v4061 = vlaneseq
    %v4062 = vshrl.u32 %v4061, 7
    %v4063 = vsub.s32 0, %v4062
    %v4064 = vrot.slane %v4031, %v4063
    %v4065 = vmul.f32 %v4059, %v4064
    %v4066 = vmul.f32 %v4060, %v4064
    %v4067 = vlaneseq
    %v4068 = vshrl.u32 %v4067, 7
    %v4069 = vsub.s32 0, %v4068
    %v4070 = vrot.slane %v4032, %v4069
    %v4071 = vadd.f32 %v4065, %v4070
    %v4072 = vadd.f32 %v4066, %v4070
    %v4073 = vld [vmem:[#allocation2 + $0x150] sm:$0x1]
    %v4074 = vld [vmem:[#allocation2 + $0x151] sm:$0x1]
    %v4075 = vlaneseq
    %v4076 = vshrl.u32 %v4075, 7
    %v4077 = vsub.s32 0, %v4076
    %v4078 = vrot.slane %v4073, %v4077
    %v4079 = vmul.f32 %v4071, %v4078
    %v4080 = vmul.f32 %v4072, %v4078
    %v4081 = vsel %vm36, %v4079, 0.0
    %4082 = vadd.xlane.f32.xlu0 %v4081
    %v4083 = vpop.xlane.xlu0 %4082
    %v4084 = vsel %vm36, %v4080, 0.0
    %4085 = vadd.xlane.f32.xlu0 %v4084
    %v4086 = vpop.xlane.xlu0 %4085
    %v4087 = vlaneseq
    %v4088 = vshrl.u32 %v4087, 7
    %v4089 = vsub.s32 0, %v4088
    %v4090 = vrot.slane %v4074, %v4089
    %v4091 = vadd.f32 %v4083, %v4090
    %v4092 = vadd.f32 %v4086, %v4090
    %v4093 = vxor.u32 %v4091, 2147483648
    %v4094 = vxor.u32 %v4092, 2147483648
    %v4095 = vmul.f32 %v4093, 1.442695
    %v4096 = vpow.pop %v4095
    %v4097 = vmul.f32 %v4094, 1.442695
    %v4098 = vpow.pop %v4097
    %v4099 = vadd.f32 %v4096, 1.0
    %v4100 = vadd.f32 %v4098, 1.0
    %v4101 = vrcp.pop %v4099
    %v4102 = vmul.f32 1.0, %v4101
    %v4103 = vrcp.pop %v4100
    %v4104 = vmul.f32 1.0, %v4103
    %vm4105 = vcmask 7168
    %4106 = vst.msk [vmem:[%s2] sm:$0xff] %vm4105, %v4102
    %4107 = vst.msk [vmem:[%s2 + $0x8] sm:$0xff] %vm4105, %v4104
    // Predicated region
    $region14: #{dsn_forward.1} parent=1 // pred_check
      _
    $region15: #{dsn_forward.1} parent=1 // pred_check_branch
      %4109 = sbr.rel (0) target = $region17
    $region16: #{dsn_forward.1} parent=1 // pred_region
      _
    $region17: #{dsn_forward.1} parent=1 // pred_fallthru
      _
    // Predicated region
    $region18: #{dsn_forward.1} parent=1 // pred_check
      _
    $region19: #{dsn_forward.1} parent=1 // pred_check_branch
      %4111 = sbr.rel (0) target = $region21
    $region20: #{dsn_forward.1} parent=1 // pred_region
      _
    $region21: #{dsn_forward.1} parent=1 // pred_fallthru
      _
    %4112 = vsyncpa [#allocation3], 1

</llo_original>
